<compile_context>
chip_gen: v7x
topology: tpu7x:2x2x1
jax: 0.10.0
libtpu: 0.0.40
codegen_flags: <defaults>
</compile_context>

<pallas_src>
import itertools
import math

import numpy as np
import jax
import jax.numpy as jnp
from jax.experimental import pallas as pl
from jax.experimental.pallas import tpu as pltpu

# ---------------------------------------------------------------------------
# Cl(3,0,1) (PGA) algebra tables, computed once with numpy.
# Blade ordering (grouped by grade, lexicographic within grade):
#   [1, e0,e1,e2,e3, e01,e02,e03,e12,e13,e23, e012,e013,e023,e123, e0123]
# ---------------------------------------------------------------------------
_METRIC = (0.0, 1.0, 1.0, 1.0)  # e0^2 = 0, e1^2 = e2^2 = e3^2 = 1

_BLADES = [c for g in range(5) for c in itertools.combinations(range(4), g)]
_IDX = {b: i for i, b in enumerate(_BLADES)}
_GRADES = np.array([len(b) for b in _BLADES])
_SUBSPACES = np.array([math.comb(4, i) for i in range(5)])  # [1, 4, 6, 4, 1]

NUM_PIN_LINEAR_BASIS_ELEMENTS = 9


def _blade_gp(a, b):
    """Geometric product of two basis blades -> (sign, sorted blade tuple)."""
    arr = list(a) + list(b)
    sign = 1.0
    for i in range(len(arr)):
        for j in range(len(arr) - 1 - i):
            if arr[j] > arr[j + 1]:
                arr[j], arr[j + 1] = arr[j + 1], arr[j]
                sign = -sign
    out = []
    i = 0
    while i < len(arr):
        if i + 1 < len(arr) and arr[i] == arr[i + 1]:
            sign *= _METRIC[arr[i]]
            i += 2
        else:
            out.append(arr[i])
            i += 1
    return sign, tuple(out)


def _build_gp():
    gp = np.zeros((16, 16, 16), np.float32)
    for j, bj in enumerate(_BLADES):
        for k, bk in enumerate(_BLADES):
            s, res = _blade_gp(bj, bk)
            if s != 0.0:
                gp[_IDX[res], j, k] += s
    return gp


def _build_outer():
    w = np.zeros((16, 16, 16), np.float32)
    for j, bj in enumerate(_BLADES):
        for k, bk in enumerate(_BLADES):
            if set(bj) & set(bk):
                continue
            s, res = _blade_gp(bj, bk)
            w[_IDX[res], j, k] += s
    return w


def _build_join():
    outer = _build_outer()
    # right complement rc(e_I) = s * e_{I^c} with e_I ^ rc(e_I) = e_{0123}
    rc = np.zeros((16, 16), np.float32)
    full = tuple(range(4))
    for i, bi in enumerate(_BLADES):
        comp = tuple(sorted(set(full) - set(bi)))
        s, res = _blade_gp(bi, comp)  # disjoint -> wedge == geometric product
        assert res == full
        rc[_IDX[comp], i] = s
    lc = np.linalg.inv(rc)
    # join(x, y) = lc( rc(x) ^ rc(y) )   (regressive product)
    # TODO(synk): per-blade sign convention of the dual may differ from the
    # reference _compute_efficient_join(); the nonzero path structure is identical.
    return np.einsum("il,lmn,mj,nk->ijk", lc, outer, rc, rc).astype(np.float32)


_GP = _build_gp()
_JOIN = _build_join()


def _grade_path_mask(mt):
    offs = np.concatenate([[0], np.cumsum(_SUBSPACES)])
    mask = np.zeros((5, 5, 5), bool)
    for i in range(5):
        for j in range(5):
            for k in range(5):
                blk = mt[offs[i]:offs[i + 1], offs[j]:offs[j + 1], offs[k]:offs[k + 1]]
                mask[i, j, k] = bool(np.any(blk != 0))
    return mask


_GP_MASK = _grade_path_mask(_GP)    # bilinear_product_paths('gmt')
_JP_MASK = _grade_path_mask(_JOIN)  # bilinear_product_paths('jmt')


def _build_equi_linear_basis():
    """9 Pin(3,0,1)-equivariant linear maps: 5 grade projections + 4 maps x -> e0 <x>_g."""
    basis = np.zeros((NUM_PIN_LINEAR_BASIS_ELEMENTS, 16, 16), np.float32)
    for g in range(5):
        for i in range(16):
            if _GRADES[i] == g:
                basis[g, i, i] = 1.0
    e0 = _IDX[(0,)]
    for g in range(4):
        for j in range(16):
            if _GRADES[j] == g:
                basis[5 + g, :, j] = _GP[:, e0, j]
    return basis


_LIN_BASIS = _build_equi_linear_basis()


# ---------------------------------------------------------------------------
# Parameters (deterministic init mirroring the PyTorch module's __init__).
# ---------------------------------------------------------------------------
def init_params(key, nf):
    k1, k2, k3 = jax.random.split(key, 3)
    # MVLinear(nf, 2*nf, splits=2): weight (2nf, nf, 9) uniform per basis element
    mv_factor = 1.0 * (1.0 / np.sqrt(3.0)) * np.sqrt(3.0)  # = 1.0
    bound = mv_factor / np.sqrt(nf)
    comp = np.sqrt(np.array([1.0, 4.0, 6.0, 2.0, 0.5, 0.5, 1.5, 1.5, 0.5], np.float32))
    u = jax.random.uniform(k1, (2 * nf, nf, 9), jnp.float32, -1.0, 1.0)
    lin_w = u * jnp.asarray(comp * bound)[None, None, :]
    lin_b = jnp.zeros((2 * nf, 1), jnp.float32)  # bias=True, initialized to zeros
    std = 1.0 / math.sqrt(5.0)
    gp_w = std * jax.random.normal(k2, (nf, int(_GP_MASK.sum())), jnp.float32)
    jp_w = std * jax.random.normal(k3, (nf, int(_JP_MASK.sum())), jnp.float32)
    return lin_w, lin_b, gp_w, jp_w


def build_kernel_operands(lin_w, lin_b, gp_w, jp_w, nf):
    """Glue: precompose the equi-linear matrix, bilinear weights and 0/1 expansion tables."""
    basis = jnp.asarray(_LIN_BASIS)
    # M[x*16+j, y*16+i] = sum_a lin_w[y,x,a] * basis[a,i,j]
    M = jnp.einsum("yxa,aij->xjyi", lin_w, basis).reshape(nf * 16, 2 * nf * 16)
    # embed_scalar(bias): only blade 0 nonzero; flattened along (y, blade)
    bias_emb = jnp.zeros((2 * nf, 16), jnp.float32).at[:, 0].set(lin_b[:, 0])
    bias_flat = bias_emb.reshape(1, 2 * nf * 16)

    # W[n,i,j,k] = GP[i,j,k]*gp_rep[n,i,j,k] + JOIN[i,j,k]*jp_rep[n,i,j,k]
    gi, gj, gk = np.nonzero(_GP_MASK)
    ji, jj, jk = np.nonzero(_JP_MASK)
    gp_full = jnp.zeros((nf, 5, 5, 5), jnp.float32).at[:, gi, gj, gk].set(gp_w)
    jp_full = jnp.zeros((nf, 5, 5, 5), jnp.float32).at[:, ji, jj, jk].set(jp_w)
    reps = _SUBSPACES

    def expand(a):
        a = jnp.repeat(a, reps, axis=1, total_repeat_length=16)
        a = jnp.repeat(a, reps, axis=2, total_repeat_length=16)
        a = jnp.repeat(a, reps, axis=3, total_repeat_length=16)
        return a

    W = jnp.asarray(_GP) * expand(gp_full) + jnp.asarray(_JOIN) * expand(jp_full)

    # Block-diagonal bilinear matrix: Wmat[n*256 + j*16 + k, n*16 + i] = W[n,i,j,k]
    Wperm = jnp.transpose(W, (0, 2, 3, 1)).reshape(nf, 256, 16)
    Wmat = jax.scipy.linalg.block_diag(*[Wperm[n] for n in range(nf)])  # (nf*256, nf*16)

    # 0/1 expansion matrices implementing the per-feature outer product via matmul
    Rep = np.zeros((nf * 16, nf * 256), np.float32)
    Tile = np.zeros((nf * 16, nf * 256), np.float32)
    for n in range(nf):
        for j in range(16):
            for k in range(16):
                c = n * 256 + j * 16 + k
                Rep[n * 16 + j, c] = 1.0
                Tile[n * 16 + k, c] = 1.0

    # bf16 storage: Rep/Tile are exact 0/1 in bf16; Wmat quantization ~2^-9 relative.
    # Halves weight VMEM/DMA footprint and enables single-pass MXU matmuls.
    return (M, bias_flat, Wmat.astype(jnp.bfloat16),
            jnp.asarray(Rep, jnp.bfloat16), jnp.asarray(Tile, jnp.bfloat16), W)


# ---------------------------------------------------------------------------
# Pallas kernel
# ---------------------------------------------------------------------------
def _gmbc_kernel(x_ref, m_ref, bias_ref, rep_ref, tile_ref, wmat_ref, o_ref):
    x = x_ref[...]                                                    # (bt, nf*16) f32
    # Equi-linear stage: ~4% of matmul FLOPs; keep it exact f32 so x1/x2 and the
    # +x2 residual are not perturbed.  Everything downstream runs single-pass bf16.
    xl = jnp.dot(x, m_ref[...], precision=jax.lax.Precision.HIGHEST,
                 preferred_element_type=jnp.float32) + bias_ref[...]  # (bt, 2*nf*16)
    n16 = x.shape[1]
    x1 = xl[:, :n16]                                                  # first nf features
    x2 = xl[:, n16:]                                                  # last nf features

    # Per-feature outer product via 0/1 gather matrices: single-pass bf16 MXU,
    # f32 accumulate (selection is exact up to one bf16 cast of x1/x2).
    a = jnp.dot(x1.astype(jnp.bfloat16), rep_ref[...],
                preferred_element_type=jnp.float32)                   # (bt, nf*256)
    b = jnp.dot(x2.astype(jnp.bfloat16), tile_ref[...],
                preferred_element_type=jnp.float32)                   # (bt, nf*256)
    z = (a * b).astype(jnp.bfloat16)                                  # x1[n,j]*x2[n,k]

    # Block-diagonal bilinear contraction + residual.
    out = jnp.dot(z, wmat_ref[...], preferred_element_type=jnp.float32) + x2
    o_ref[...] = out.astype(o_ref.dtype)


def _round_up(x, m):
    return ((x + m - 1) // m) * m


def _vmem_limit_bytes(nf, bt):
    """Working set: double-buffered operands + live in-kernel temporaries + headroom."""
    n16 = nf * 16
    f32, bf16 = 4, 2
    weights = (n16 * 2 * n16 + 2 * n16) * f32 \
        + (2 * n16 * nf * 256 + nf * 256 * n16) * bf16      # M, bias, Rep, Tile, Wmat
    io = 2 * bt * n16 * f32                                  # x block + out block
    interm = (bt * 2 * n16) * f32 \
        + 2 * (bt * nf * 256) * f32 \
        + (bt * nf * 256) * bf16 \
        + (bt * n16) * f32 \
        + (bt * 2 * n16) * bf16
    total = 2 * (weights + io) + interm
    return min(int(1.5 * total) + (4 << 20), 64 << 20)


def gmbc_forward(x, operands, nf, bt=256):
    """x: [B, nf, 16] multivectors -> [B, nf, 16].

    bt: batch tile.  256 fills the MXU M-dim on v6e/v7x; pass bt=128 on v5e.
    Small batches automatically shrink the tile; B is padded up to a multiple of
    the tile and the padding rows are sliced off again.
    """
    M, bias_flat, Wmat, Rep, Tile = operands
    B = x.shape[0]
    n16 = nf * 16
    x_flat = x.reshape(B, n16)

    bt_eff = min(bt, _round_up(B, 8))          # keep (8,128) tiling constraint
    Bp = _round_up(B, bt_eff)
    if Bp != B:
        x_flat = jnp.pad(x_flat, ((0, Bp - B), (0, 0)))

    out_flat = pl.pallas_call(
        _gmbc_kernel,
        out_shape=jax.ShapeDtypeStruct((Bp, n16), jnp.float32),
        grid_spec=pltpu.PrefetchScalarGridSpec(
            num_scalar_prefetch=0,
            grid=(Bp // bt_eff,),
            in_specs=[
                pl.BlockSpec((bt_eff, n16), lambda i: (i, 0)),
                # Weight operands are grid-invariant -> DMA'd once and kept resident.
                pl.BlockSpec((n16, 2 * n16), lambda i: (0, 0)),
                pl.BlockSpec((1, 2 * n16), lambda i: (0, 0)),
                pl.BlockSpec((n16, nf * 256), lambda i: (0, 0)),
                pl.BlockSpec((n16, nf * 256), lambda i: (0, 0)),
                pl.BlockSpec((nf * 256, n16), lambda i: (0, 0)),
            ],
            out_specs=pl.BlockSpec((bt_eff, n16), lambda i: (i, 0)),
        ),
        compiler_params=pltpu.CompilerParams(
            dimension_semantics=("parallel",),            # v7x: shards steps over 2 TCs
            vmem_limit_bytes=_vmem_limit_bytes(nf, bt_eff),
        ),
    )(x_flat, M, bias_flat, Rep, Tile, Wmat)
    return out_flat[:B].reshape(B, nf, 16)


# ---------------------------------------------------------------------------
# Pure-JAX reference (mirrors the PyTorch forward) for validation.
# ---------------------------------------------------------------------------
def reference_forward(x, lin_w, lin_b, W, nf):
    hi = jax.lax.Precision.HIGHEST
    basis = jnp.asarray(_LIN_BASIS)
    xl = jnp.einsum("yxa,aij,bxj->byi", lin_w, basis, x, precision=hi)
    bias_emb = jnp.zeros((2 * nf, 16), jnp.float32).at[:, 0].set(lin_b[:, 0])
    xl = xl + bias_emb
    x1 = xl[:, :nf, :]
    x2 = xl[:, nf:, :]
    return jnp.einsum("nijk,bnj,bnk->bni", W, x1, x2, precision=hi) + x2


if __name__ == "__main__":
    nf = 8   # num_features
    B = 16   # batch of tokens (leading "*" dims flattened)

    key = jax.random.PRNGKey(0)
    kx, kp = jax.random.split(key)
    x = jax.random.normal(kx, (B, nf, 16), jnp.float32)  # [*, num_features, 16] multivectors

    lin_w, lin_b, gp_w, jp_w = init_params(kp, nf)
    M, bias_flat, Wmat, Rep, Tile, W = build_kernel_operands(lin_w, lin_b, gp_w, jp_w, nf)

    out = gmbc_forward(x, (M, bias_flat, Wmat, Rep, Tile), nf)
    out = jax.block_until_ready(out)

    ref = reference_forward(x, lin_w, lin_b, W, nf)
    # Tolerance reflects the deliberate single-pass bf16 MXU path on the three large
    # dots (review recommendation); the reference is full f32 / HIGHEST precision.
    np.testing.assert_allclose(np.asarray(out), np.asarray(ref), rtol=5e-2, atol=5e-2)
    print("KERNEL_OK")
</pallas_src>

<mosaic_0001>
module attributes {stable_mosaic.version = 11 : i64} {
  func.func @_gmbc_kernel(%arg0: i32, %arg1: memref<16x128xf32, #tpu.memory_space<vmem>>, %arg2: memref<128x256xf32, #tpu.memory_space<vmem>>, %arg3: memref<1x256xf32, #tpu.memory_space<vmem>>, %arg4: memref<128x2048xbf16, #tpu.memory_space<vmem>>, %arg5: memref<128x2048xbf16, #tpu.memory_space<vmem>>, %arg6: memref<2048x128xbf16, #tpu.memory_space<vmem>>, %arg7: memref<16x128xf32, #tpu.memory_space<vmem>>) attributes {dimension_semantics = [#tpu.dimension_semantics<parallel>], iteration_bounds = array<i64: 1>, scalar_prefetch = 0 : i64, scratch_operands = 0 : i64, tpu.core_type = #tpu.core_type<tc>, window_params = [{transform_indices = @transform_0, window_bounds = array<i64: 16, 128>}, {pipeline_mode = #tpu.pipeline_mode<synchronous>, transform_indices = @transform_1, window_bounds = array<i64: 128, 256>}, {pipeline_mode = #tpu.pipeline_mode<synchronous>, transform_indices = @transform_2, window_bounds = array<i64: 1, 256>}, {pipeline_mode = #tpu.pipeline_mode<synchronous>, transform_indices = @transform_3, window_bounds = array<i64: 128, 2048>}, {pipeline_mode = #tpu.pipeline_mode<synchronous>, transform_indices = @transform_4, window_bounds = array<i64: 128, 2048>}, {pipeline_mode = #tpu.pipeline_mode<synchronous>, transform_indices = @transform_5, window_bounds = array<i64: 2048, 128>}, {transform_indices = @transform_6, window_bounds = array<i64: 16, 128>}]} {
    %c0 = arith.constant 0 : index
    %c0_0 = arith.constant 0 : index
    %0 = vector.load %arg1[%c0, %c0_0] : memref<16x128xf32, #tpu.memory_space<vmem>>, vector<16x128xf32>
    %c0_1 = arith.constant 0 : index
    %c0_2 = arith.constant 0 : index
    %1 = vector.load %arg2[%c0_1, %c0_2] : memref<128x256xf32, #tpu.memory_space<vmem>>, vector<128x256xf32>
    %cst = arith.constant dense<0.000000e+00> : vector<16x256xf32>
    %2 = tpu.matmul %0, %1, %cst {dimension_numbers = #tpu.dot_dimension_numbers<[1], [0], [0], [1], [0, 0, 1, 1], [], []>, precision = #tpu.contract_precision<fp32>} : vector<16x128xf32>, vector<128x256xf32>, vector<16x256xf32> -> vector<16x256xf32>
    %c0_3 = arith.constant 0 : index
    %c0_4 = arith.constant 0 : index
    %3 = vector.load %arg3[%c0_3, %c0_4] : memref<1x256xf32, #tpu.memory_space<vmem>>, vector<1x256xf32>
    %4 = vector.broadcast %3 : vector<1x256xf32> to vector<16x256xf32>
    %5 = arith.addf %2, %4 : vector<16x256xf32>
    %6 = vector.extract_strided_slice %5 {offsets = [0, 0], sizes = [16, 128], strides = [1, 1]} : vector<16x256xf32> to vector<16x128xf32>
    %7 = vector.extract_strided_slice %5 {offsets = [0, 128], sizes = [16, 128], strides = [1, 1]} : vector<16x256xf32> to vector<16x128xf32>
    %8 = arith.truncf %6 : vector<16x128xf32> to vector<16x128xbf16>
    %c0_5 = arith.constant 0 : index
    %c0_6 = arith.constant 0 : index
    %9 = vector.load %arg4[%c0_5, %c0_6] : memref<128x2048xbf16, #tpu.memory_space<vmem>>, vector<128x2048xbf16>
    %cst_7 = arith.constant dense<0.000000e+00> : vector<16x2048xf32>
    %10 = tpu.matmul %8, %9, %cst_7 {dimension_numbers = #tpu.dot_dimension_numbers<[1], [0], [0], [1], [0, 0, 1, 1], [], []>} : vector<16x128xbf16>, vector<128x2048xbf16>, vector<16x2048xf32> -> vector<16x2048xf32>
    %11 = arith.truncf %7 : vector<16x128xf32> to vector<16x128xbf16>
    %c0_8 = arith.constant 0 : index
    %c0_9 = arith.constant 0 : index
    %12 = vector.load %arg5[%c0_8, %c0_9] : memref<128x2048xbf16, #tpu.memory_space<vmem>>, vector<128x2048xbf16>
    %cst_10 = arith.constant dense<0.000000e+00> : vector<16x2048xf32>
    %13 = tpu.matmul %11, %12, %cst_10 {dimension_numbers = #tpu.dot_dimension_numbers<[1], [0], [0], [1], [0, 0, 1, 1], [], []>} : vector<16x128xbf16>, vector<128x2048xbf16>, vector<16x2048xf32> -> vector<16x2048xf32>
    %14 = arith.mulf %10, %13 : vector<16x2048xf32>
    %15 = arith.truncf %14 : vector<16x2048xf32> to vector<16x2048xbf16>
    %c0_11 = arith.constant 0 : index
    %c0_12 = arith.constant 0 : index
    %16 = vector.load %arg6[%c0_11, %c0_12] : memref<2048x128xbf16, #tpu.memory_space<vmem>>, vector<2048x128xbf16>
    %cst_13 = arith.constant dense<0.000000e+00> : vector<16x128xf32>
    %17 = tpu.matmul %15, %16, %cst_13 {dimension_numbers = #tpu.dot_dimension_numbers<[1], [0], [0], [1], [0, 0, 1, 1], [], []>} : vector<16x2048xbf16>, vector<2048x128xbf16>, vector<16x128xf32> -> vector<16x128xf32>
    %18 = arith.addf %17, %7 : vector<16x128xf32>
    %c0_14 = arith.constant 0 : index
    %c0_15 = arith.constant 0 : index
    %19 = vector.load %arg7[%c0_14, %c0_15] : memref<16x128xf32, #tpu.memory_space<vmem>>, vector<16x128xf32>
    tpu.vector_store %arg7[%c0_14, %c0_15], %18 {strides = array<i32>} : memref<16x128xf32, #tpu.memory_space<vmem>>, vector<16x128xf32>,
    return
  }
  func.func @transform_0(%arg0: i32) -> (i32, i32) {
    %c0_i32 = arith.constant 0 : i32
    %c0_i32_0 = arith.constant 0 : i32
    return %arg0, %c0_i32 : i32, i32
  }
  func.func @transform_1(%arg0: i32) -> (i32, i32) {
    %c0_i32 = arith.constant 0 : i32
    %c0_i32_0 = arith.constant 0 : i32
    %c0_i32_1 = arith.constant 0 : i32
    return %c0_i32, %c0_i32_0 : i32, i32
  }
  func.func @transform_2(%arg0: i32) -> (i32, i32) {
    %c0_i32 = arith.constant 0 : i32
    %c0_i32_0 = arith.constant 0 : i32
    %c0_i32_1 = arith.constant 0 : i32
    return %c0_i32, %c0_i32_0 : i32, i32
  }
  func.func @transform_3(%arg0: i32) -> (i32, i32) {
    %c0_i32 = arith.constant 0 : i32
    %c0_i32_0 = arith.constant 0 : i32
    %c0_i32_1 = arith.constant 0 : i32
    return %c0_i32, %c0_i32_0 : i32, i32
  }
  func.func @transform_4(%arg0: i32) -> (i32, i32) {
    %c0_i32 = arith.constant 0 : i32
    %c0_i32_0 = arith.constant 0 : i32
    %c0_i32_1 = arith.constant 0 : i32
    return %c0_i32, %c0_i32_0 : i32, i32
  }
  func.func @transform_5(%arg0: i32) -> (i32, i32) {
    %c0_i32 = arith.constant 0 : i32
    %c0_i32_0 = arith.constant 0 : i32
    %c0_i32_1 = arith.constant 0 : i32
    return %c0_i32, %c0_i32_0 : i32, i32
  }
  func.func @transform_6(%arg0: i32) -> (i32, i32) {
    %c0_i32 = arith.constant 0 : i32
    %c0_i32_0 = arith.constant 0 : i32
    return %arg0, %c0_i32 : i32, i32
  }
}

</mosaic_0001>

<llo_original>
// kernel: tpu_custom_call.1
$region0: #{tpu_custom_call.1}
  #allocation0 [shape = 'u32[]', space=smem, size = 0x4, offset = 0x4, fixed_abs, tag = 'smem constant byte address 0x4 - core index']
  #allocation1 [shape = 'u32[144,128]{1,0:T(1,128)}', space=vmem, size = 0x12000, scoped, tag = 'internal scratch']
  %s0 = inlined_call_operand.hbm [shape: f32[16,128], index: 0, kind: input, shape index: {}]
  %s1 = inlined_call_operand.hbm [shape: f32[128,256], index: 1, kind: input, shape index: {}]
  %s2 = inlined_call_operand.vmem [shape: f32[1,256], index: 2, kind: input, shape index: {}]
  %s3 = inlined_call_operand.hbm [shape: bf16[128,2048], index: 3, kind: input, shape index: {}]
  %s4 = inlined_call_operand.hbm [shape: bf16[128,2048], index: 4, kind: input, shape index: {}]
  %s5 = inlined_call_operand.hbm [shape: bf16[2048,128], index: 5, kind: input, shape index: {}]
  %s6 = inlined_call_operand.hbm [shape: f32[16,128], index: 6, kind: output, shape index: {}]
  %s7 = sld [smem:[#allocation0]]
  $region54: #{tpu_custom_call.1} parent=0
    _
  %s9 = ssub.s32 1, %s7
  %s10 = scalar_select 0, %s9, %s7
  $region1: #{tpu_custom_call.1} parent=0
    #allocation2 [shape = 'u8[8192]{0}', space=vmem, size = 0x2000, scoped, tag = 'input window, operand 0, single buffered']
    #allocation3 [shape = 's32[1]{0}', space=sflag, size = 0x4, scoped, tag = 'scoped memory for tpu_custom_call.1']
    #allocation4 [shape = 's32[1]{0}', space=sflag, size = 0x4, scoped, tag = 'scoped memory for tpu_custom_call.1']
    #allocation5 [shape = 'u8[131072]{0}', space=vmem, size = 0x20000, scoped, tag = 'input window, operand 1, single buffered']
    #allocation6 [shape = 's32[1]{0}', space=sflag, size = 0x4, scoped, tag = 'scoped memory for tpu_custom_call.1']
    #allocation7 [shape = 'u8[524288]{0}', space=vmem, size = 0x80000, scoped, tag = 'input window, operand 3, single buffered']
    #allocation8 [shape = 'u8[524288]{0}', space=vmem, size = 0x80000, scoped, tag = 'input window, operand 4, single buffered']
    #allocation9 [shape = 's32[1]{0}', space=sflag, size = 0x4, scoped, tag = 'scoped memory for tpu_custom_call.1']
    #allocation10 [shape = 'u8[524288]{0}', space=vmem, size = 0x80000, scoped, tag = 'input window, operand 5, single buffered']
    #allocation11 [shape = 'u8[8192]{0}', space=vmem, size = 0x2000, scoped, tag = 'output window, operand 0, single buffered']
    %11 = vsyncpa [#allocation3], 0
    %12 = vsyncpa [#allocation6], 0
    %13 = vsyncpa [#allocation9], 0
    %14 = vsyncpa [#allocation4], 0
    // Predicated region
    $region2: #{tpu_custom_call.1} parent=1 // pred_check
      _
    $region3: #{tpu_custom_call.1} parent=1 // pred_check_branch
      %16 = sbr.rel (0) target = $region5
    $region4: #{tpu_custom_call.1} parent=1 // pred_region
      %s18 = ssub.s32 256, 256
      %19 = vsyncadd [#allocation3], %s18
      %s20 = sshll.u32 [#allocation2], 4
      %s21 = int_to_ptr.vmem [resolvable:$true] %s20
      %26 = dma.hbm_to_vmem [thread:$0]  %s0, 256, %s21, [#allocation3], 128, 128, 8
    $region5: #{tpu_custom_call.1} parent=1 // pred_fallthru
      _
    // Predicated region
    $region6: #{tpu_custom_call.1} parent=1 // pred_check
      _
    $region7: #{tpu_custom_call.1} parent=1 // pred_check_branch
      %28 = sbr.rel (0) target = $region9
    $region8: #{tpu_custom_call.1} parent=1 // pred_region
      %s30 = ssub.s32 4096, 4096
      %31 = vsyncadd [#allocation6], %s30
      %s32 = sshll.u32 [#allocation5], 4
      %s33 = int_to_ptr.vmem [resolvable:$true] %s32
      %38 = dma.hbm_to_vmem [thread:$0]  %s1, 4096, %s33, [#allocation6], 256, 256, 16
    $region9: #{tpu_custom_call.1} parent=1 // pred_fallthru
      _
    // Predicated region
    $region10: #{tpu_custom_call.1} parent=1 // pred_check
      _
    $region11: #{tpu_custom_call.1} parent=1 // pred_check_branch
      %40 = sbr.rel (0) target = $region13
    $region12: #{tpu_custom_call.1} parent=1 // pred_region
      _
    $region13: #{tpu_custom_call.1} parent=1 // pred_fallthru
      _
    // Predicated region
    $region14: #{tpu_custom_call.1} parent=1 // pred_check
      _
    $region15: #{tpu_custom_call.1} parent=1 // pred_check_branch
      %42 = sbr.rel (0) target = $region17
    $region16: #{tpu_custom_call.1} parent=1 // pred_region
      %s44 = ssub.s32 16384, 16384
      %45 = vsyncadd [#allocation6], %s44
      %s46 = sshll.u32 [#allocation7], 4
      %s47 = int_to_ptr.vmem [resolvable:$true] %s46
      %52 = dma.hbm_to_vmem [thread:$0]  %s3, 16384, %s47, [#allocation6], 1024, 1024, 64
    $region17: #{tpu_custom_call.1} parent=1 // pred_fallthru
      _
    // Predicated region
    $region18: #{tpu_custom_call.1} parent=1 // pred_check
      _
    $region19: #{tpu_custom_call.1} parent=1 // pred_check_branch
      %54 = sbr.rel (0) target = $region21
    $region20: #{tpu_custom_call.1} parent=1 // pred_region
      %s56 = ssub.s32 16384, 16384
      %57 = vsyncadd [#allocation9], %s56
      %s58 = sshll.u32 [#allocation8], 4
      %s59 = int_to_ptr.vmem [resolvable:$true] %s58
      %64 = dma.hbm_to_vmem [thread:$0]  %s4, 16384, %s59, [#allocation9], 1024, 1024, 64
    $region21: #{tpu_custom_call.1} parent=1 // pred_fallthru
      _
    // Predicated region
    $region22: #{tpu_custom_call.1} parent=1 // pred_check
      _
    $region23: #{tpu_custom_call.1} parent=1 // pred_check_branch
      %66 = sbr.rel (0) target = $region25
    $region24: #{tpu_custom_call.1} parent=1 // pred_region
      %s68 = ssub.s32 16384, 16384
      %69 = vsyncadd [#allocation9], %s68
      %s70 = sshll.u32 [#allocation10], 4
      %s71 = int_to_ptr.vmem [resolvable:$true] %s70
      %76 = dma.hbm_to_vmem [thread:$0]  %s5, 16384, %s71, [#allocation9], 64, 64, 4
    $region25: #{tpu_custom_call.1} parent=1 // pred_fallthru
      _
    // Predicated region
    $region26: #{tpu_custom_call.1} parent=1 // pred_check
      _
    $region27: #{tpu_custom_call.1} parent=1 // pred_check_branch
      %78 = sbr.rel (0) target = $region29
    $region28: #{tpu_custom_call.1} parent=1 // pred_region
      %79 = dma.done [#allocation3], 256
    $region29: #{tpu_custom_call.1} parent=1 // pred_fallthru
      _
    // Predicated region
    $region30: #{tpu_custom_call.1} parent=1 // pred_check
      _
    $region31: #{tpu_custom_call.1} parent=1 // pred_check_branch
      %81 = sbr.rel (0) target = $region33
    $region32: #{tpu_custom_call.1} parent=1 // pred_region
      %82 = dma.done [#allocation6], 4096
    $region33: #{tpu_custom_call.1} parent=1 // pred_fallthru
      _
    // Predicated region
    $region34: #{tpu_custom_call.1} parent=1 // pred_check
      _
    $region35: #{tpu_custom_call.1} parent=1 // pred_check_branch
      %84 = sbr.rel (0) target = $region37
    $region36: #{tpu_custom_call.1} parent=1 // pred_region
      %85 = dma.done [#allocation6], 16384
    $region37: #{tpu_custom_call.1} parent=1 // pred_fallthru
      _
    // Predicated region
    $region38: #{tpu_custom_call.1} parent=1 // pred_check
      _
    $region39: #{tpu_custom_call.1} parent=1 // pred_check_branch
      %87 = sbr.rel (0) target = $region41
    $region40: #{tpu_custom_call.1} parent=1 // pred_region
      %88 = dma.done [#allocation9], 16384
    $region41: #{tpu_custom_call.1} parent=1 // pred_fallthru
      _
    // Predicated region
    $region42: #{tpu_custom_call.1} parent=1 // pred_check
      _
    $region43: #{tpu_custom_call.1} parent=1 // pred_check_branch
      %90 = sbr.rel (0) target = $region45
    $region44: #{tpu_custom_call.1} parent=1 // pred_region
      %91 = dma.done [#allocation9], 16384
    $region45: #{tpu_custom_call.1} parent=1 // pred_fallthru
      _
    %v93 = vld [vmem:[#allocation2] sm:$0xff]
    %v94 = vld [vmem:[#allocation2 + $0x8] sm:$0xff]
    %v95 = vld [vmem:[#allocation5] sm:$0xff]
    %v96 = vld [vmem:[#allocation5 + $0x8] sm:$0xff]
    %v97 = vld [vmem:[#allocation5 + $0x10] sm:$0xff]
    %v98 = vld [vmem:[#allocation5 + $0x18] sm:$0xff]
    %v99 = vld [vmem:[#allocation5 + $0x20] sm:$0xff]
    %v100 = vld [vmem:[#allocation5 + $0x28] sm:$0xff]
    %v101 = vld [vmem:[#allocation5 + $0x30] sm:$0xff]
    %v102 = vld [vmem:[#allocation5 + $0x38] sm:$0xff]
    %v103 = vld [vmem:[#allocation5 + $0x40] sm:$0xff]
    %v104 = vld [vmem:[#allocation5 + $0x48] sm:$0xff]
    %v105 = vld [vmem:[#allocation5 + $0x50] sm:$0xff]
    %v106 = vld [vmem:[#allocation5 + $0x58] sm:$0xff]
    %v107 = vld [vmem:[#allocation5 + $0x60] sm:$0xff]
    %v108 = vld [vmem:[#allocation5 + $0x68] sm:$0xff]
    %v109 = vld [vmem:[#allocation5 + $0x70] sm:$0xff]
    %v110 = vld [vmem:[#allocation5 + $0x78] sm:$0xff]
    %v111 = vld [vmem:[#allocation5 + $0x80] sm:$0xff]
    %v112 = vld [vmem:[#allocation5 + $0x88] sm:$0xff]
    %v113 = vld [vmem:[#allocation5 + $0x90] sm:$0xff]
    %v114 = vld [vmem:[#allocation5 + $0x98] sm:$0xff]
    %v115 = vld [vmem:[#allocation5 + $0xa0] sm:$0xff]
    %v116 = vld [vmem:[#allocation5 + $0xa8] sm:$0xff]
    %v117 = vld [vmem:[#allocation5 + $0xb0] sm:$0xff]
    %v118 = vld [vmem:[#allocation5 + $0xb8] sm:$0xff]
    %v119 = vld [vmem:[#allocation5 + $0xc0] sm:$0xff]
    %v120 = vld [vmem:[#allocation5 + $0xc8] sm:$0xff]
    %v121 = vld [vmem:[#allocation5 + $0xd0] sm:$0xff]
    %v122 = vld [vmem:[#allocation5 + $0xd8] sm:$0xff]
    %v123 = vld [vmem:[#allocation5 + $0xe0] sm:$0xff]
    %v124 = vld [vmem:[#allocation5 + $0xe8] sm:$0xff]
    %v125 = vld [vmem:[#allocation5 + $0xf0] sm:$0xff]
    %v126 = vld [vmem:[#allocation5 + $0xf8] sm:$0xff]
    %v127 = vld [vmem:[%s2] sm:$0x3]
    %v129 = vlaneseq
    %v130 = vshrl.u32 %v129, 7
    %v131 = vsub.s32 0, %v130
    %v132 = vrot.slane %v127, %v131
    %v133 = vlaneseq
    %v134 = vshrl.u32 %v133, 7
    %v135 = vsub.s32 1, %v134
    %v136 = vrot.slane %v127, %v135
    %v139 = vand.u32 %v96, 4294901760
    %140 = vmatprep.subr.mxu0 %v139
    %v141 = vand.u32 %v95, 4294901760
    %142 = vmatpush1.msra.mxu0 %v141
    %v143 = vand.u32 %v98, 4294901760
    %144 = vmatprep.subr.mxu0 %v143
    %v145 = vand.u32 %v97, 4294901760
    %146 = vmatpush1.msra.mxu0 %v145
    %v147 = vand.u32 %v100, 4294901760
    %148 = vmatprep.subr.mxu0 %v147
    %v149 = vand.u32 %v99, 4294901760
    %150 = vmatpush1.msra.mxu0 %v149
    %v151 = vand.u32 %v102, 4294901760
    %152 = vmatprep.subr.mxu0 %v151
    %v153 = vand.u32 %v101, 4294901760
    %154 = vmatpush1.msra.mxu0 %v153
    %v155 = vand.u32 %v104, 4294901760
    %156 = vmatprep.subr.mxu0 %v155
    %v157 = vand.u32 %v103, 4294901760
    %158 = vmatpush1.msra.mxu0 %v157
    %v159 = vand.u32 %v106, 4294901760
    %160 = vmatprep.subr.mxu0 %v159
    %v161 = vand.u32 %v105, 4294901760
    %162 = vmatpush1.msra.mxu0 %v161
    %v163 = vand.u32 %v108, 4294901760
    %164 = vmatprep.subr.mxu0 %v163
    %v165 = vand.u32 %v107, 4294901760
    %166 = vmatpush1.msra.mxu0 %v165
    %v167 = vand.u32 %v110, 4294901760
    %168 = vmatprep.subr.mxu0 %v167
    %v169 = vand.u32 %v109, 4294901760
    %170 = vmatpush1.msra.mxu0 %v169
    %v171 = vand.u32 %v112, 4294901760
    %172 = vmatprep.subr.mxu0 %v171
    %v173 = vand.u32 %v111, 4294901760
    %174 = vmatpush1.msra.mxu0 %v173
    %v175 = vand.u32 %v114, 4294901760
    %176 = vmatprep.subr.mxu0 %v175
    %v177 = vand.u32 %v113, 4294901760
    %178 = vmatpush1.msra.mxu0 %v177
    %v179 = vand.u32 %v116, 4294901760
    %180 = vmatprep.subr.mxu0 %v179
    %v181 = vand.u32 %v115, 4294901760
    %182 = vmatpush1.msra.mxu0 %v181
    %v183 = vand.u32 %v118, 4294901760
    %184 = vmatprep.subr.mxu0 %v183
    %v185 = vand.u32 %v117, 4294901760
    %186 = vmatpush1.msra.mxu0 %v185
    %v187 = vand.u32 %v120, 4294901760
    %188 = vmatprep.subr.mxu0 %v187
    %v189 = vand.u32 %v119, 4294901760
    %190 = vmatpush1.msra.mxu0 %v189
    %v191 = vand.u32 %v122, 4294901760
    %192 = vmatprep.subr.mxu0 %v191
    %v193 = vand.u32 %v121, 4294901760
    %194 = vmatpush1.msra.mxu0 %v193
    %v195 = vand.u32 %v124, 4294901760
    %196 = vmatprep.subr.mxu0 %v195
    %v197 = vand.u32 %v123, 4294901760
    %198 = vmatpush1.msra.mxu0 %v197
    %v199 = vand.u32 %v126, 4294901760
    %200 = vmatprep.subr.mxu0 %v199
    %v201 = vand.u32 %v125, 4294901760
    %202 = vmatpush1.msra.mxu0 %v201
    %203 = vmatprep.subr.mxu0 0.0
    %204 = vmatpush1.msra.mxu0 0.0
    %205 = vmatprep.subr.mxu0 0.0
    %206 = vmatpush1.msra.mxu0 0.0
    %207 = vmatprep.subr.mxu0 0.0
    %208 = vmatpush1.msra.mxu0 0.0
    %209 = vmatprep.subr.mxu0 0.0
    %210 = vmatpush1.msra.mxu0 0.0
    %211 = vmatprep.subr.mxu0 0.0
    %212 = vmatpush1.msra.mxu0 0.0
    %213 = vmatprep.subr.mxu0 0.0
    %214 = vmatpush1.msra.mxu0 0.0
    %215 = vmatprep.subr.mxu0 0.0
    %216 = vmatpush1.msra.mxu0 0.0
    %217 = vmatprep.subr.mxu0 0.0
    %218 = vmatpush1.msra.mxu0 0.0
    %219 = vmatprep.subr.mxu0 0.0
    %220 = vmatpush1.msra.mxu0 0.0
    %221 = vmatprep.subr.mxu0 0.0
    %222 = vmatpush1.msra.mxu0 0.0
    %223 = vmatprep.subr.mxu0 0.0
    %224 = vmatpush1.msra.mxu0 0.0
    %225 = vmatprep.subr.mxu0 0.0
    %226 = vmatpush1.msra.mxu0 0.0
    %227 = vmatprep.subr.mxu0 0.0
    %228 = vmatpush1.msra.mxu0 0.0
    %229 = vmatprep.subr.mxu0 0.0
    %230 = vmatpush1.msra.mxu0 0.0
    %231 = vmatprep.subr.mxu0 0.0
    %232 = vmatpush1.msra.mxu0 0.0
    %233 = vmatprep.subr.mxu0 0.0
    %234 = vmatpush1.msra.mxu0 0.0
    %235 = vmatprep.mubr.f32.mxu0 0.0
    %v236 = vand.u32 %v93, 4294901760
    %v237 = vsub.f32 %v93, %v236
    %v238 = vand.u32 %v237, 4294901760
    %v239 = vsub.f32 %v237, %v238
    %v240 = vand.u32 %v239, 4294901760
    %241 = vmatmul.mubr.f32.gmra.mrb[0].mxu0 %v240
    %v242 = vpop.f32.mrb[0].mxu0
    %v243 = vadd.f32 %v132, %v242
    %v244 = vpop.f32.mrb[0].mxu0
    %v245 = vadd.f32 %v136, %v244
    %246 = vmatprep.mubr.f32.mxu0 0.0
    %v247 = vand.u32 %v94, 4294901760
    %v248 = vsub.f32 %v94, %v247
    %v249 = vand.u32 %v248, 4294901760
    %v250 = vsub.f32 %v248, %v249
    %v251 = vand.u32 %v250, 4294901760
    %252 = vmatmul.mubr.f32.gmra.mrb[0].mxu0 %v251
    %v253 = vpop.f32.mrb[0].mxu0
    %v254 = vadd.f32 %v132, %v253
    %v255 = vpop.f32.mrb[0].mxu0
    %v256 = vadd.f32 %v136, %v255
    %257 = vdwg.mxu0
    %v258 = vand.u32 %v96, 4294901760
    %v259 = vsub.f32 %v96, %v258
    %v260 = vand.u32 %v259, 4294901760
    %v261 = vsub.f32 %v259, %v260
    %v262 = vand.u32 %v261, 4294901760
    %263 = vmatprep.subr.mxu0 %v262
    %v264 = vand.u32 %v95, 4294901760
    %v265 = vsub.f32 %v95, %v264
    %v266 = vand.u32 %v265, 4294901760
    %v267 = vsub.f32 %v265, %v266
    %v268 = vand.u32 %v267, 4294901760
    %269 = vmatpush1.msra.mxu0 %v268
    %v270 = vand.u32 %v98, 4294901760
    %v271 = vsub.f32 %v98, %v270
    %v272 = vand.u32 %v271, 4294901760
    %v273 = vsub.f32 %v271, %v272
    %v274 = vand.u32 %v273, 4294901760
    %275 = vmatprep.subr.mxu0 %v274
    %v276 = vand.u32 %v97, 4294901760
    %v277 = vsub.f32 %v97, %v276
    %v278 = vand.u32 %v277, 4294901760
    %v279 = vsub.f32 %v277, %v278
    %v280 = vand.u32 %v279, 4294901760
    %281 = vmatpush1.msra.mxu0 %v280
    %v282 = vand.u32 %v100, 4294901760
    %v283 = vsub.f32 %v100, %v282
    %v284 = vand.u32 %v283, 4294901760
    %v285 = vsub.f32 %v283, %v284
    %v286 = vand.u32 %v285, 4294901760
    %287 = vmatprep.subr.mxu0 %v286
    %v288 = vand.u32 %v99, 4294901760
    %v289 = vsub.f32 %v99, %v288
    %v290 = vand.u32 %v289, 4294901760
    %v291 = vsub.f32 %v289, %v290
    %v292 = vand.u32 %v291, 4294901760
    %293 = vmatpush1.msra.mxu0 %v292
    %v294 = vand.u32 %v102, 4294901760
    %v295 = vsub.f32 %v102, %v294
    %v296 = vand.u32 %v295, 4294901760
    %v297 = vsub.f32 %v295, %v296
    %v298 = vand.u32 %v297, 4294901760
    %299 = vmatprep.subr.mxu0 %v298
    %v300 = vand.u32 %v101, 4294901760
    %v301 = vsub.f32 %v101, %v300
    %v302 = vand.u32 %v301, 4294901760
    %v303 = vsub.f32 %v301, %v302
    %v304 = vand.u32 %v303, 4294901760
    %305 = vmatpush1.msra.mxu0 %v304
    %v306 = vand.u32 %v104, 4294901760
    %v307 = vsub.f32 %v104, %v306
    %v308 = vand.u32 %v307, 4294901760
    %v309 = vsub.f32 %v307, %v308
    %v310 = vand.u32 %v309, 4294901760
    %311 = vmatprep.subr.mxu0 %v310
    %v312 = vand.u32 %v103, 4294901760
    %v313 = vsub.f32 %v103, %v312
    %v314 = vand.u32 %v313, 4294901760
    %v315 = vsub.f32 %v313, %v314
    %v316 = vand.u32 %v315, 4294901760
    %317 = vmatpush1.msra.mxu0 %v316
    %v318 = vand.u32 %v106, 4294901760
    %v319 = vsub.f32 %v106, %v318
    %v320 = vand.u32 %v319, 4294901760
    %v321 = vsub.f32 %v319, %v320
    %v322 = vand.u32 %v321, 4294901760
    %323 = vmatprep.subr.mxu0 %v322
    %v324 = vand.u32 %v105, 4294901760
    %v325 = vsub.f32 %v105, %v324
    %v326 = vand.u32 %v325, 4294901760
    %v327 = vsub.f32 %v325, %v326
    %v328 = vand.u32 %v327, 4294901760
    %329 = vmatpush1.msra.mxu0 %v328
    %v330 = vand.u32 %v108, 4294901760
    %v331 = vsub.f32 %v108, %v330
    %v332 = vand.u32 %v331, 4294901760
    %v333 = vsub.f32 %v331, %v332
    %v334 = vand.u32 %v333, 4294901760
    %335 = vmatprep.subr.mxu0 %v334
    %v336 = vand.u32 %v107, 4294901760
    %v337 = vsub.f32 %v107, %v336
    %v338 = vand.u32 %v337, 4294901760
    %v339 = vsub.f32 %v337, %v338
    %v340 = vand.u32 %v339, 4294901760
    %341 = vmatpush1.msra.mxu0 %v340
    %v342 = vand.u32 %v110, 4294901760
    %v343 = vsub.f32 %v110, %v342
    %v344 = vand.u32 %v343, 4294901760
    %v345 = vsub.f32 %v343, %v344
    %v346 = vand.u32 %v345, 4294901760
    %347 = vmatprep.subr.mxu0 %v346
    %v348 = vand.u32 %v109, 4294901760
    %v349 = vsub.f32 %v109, %v348
    %v350 = vand.u32 %v349, 4294901760
    %v351 = vsub.f32 %v349, %v350
    %v352 = vand.u32 %v351, 4294901760
    %353 = vmatpush1.msra.mxu0 %v352
    %v354 = vand.u32 %v112, 4294901760
    %v355 = vsub.f32 %v112, %v354
    %v356 = vand.u32 %v355, 4294901760
    %v357 = vsub.f32 %v355, %v356
    %v358 = vand.u32 %v357, 4294901760
    %359 = vmatprep.subr.mxu0 %v358
    %v360 = vand.u32 %v111, 4294901760
    %v361 = vsub.f32 %v111, %v360
    %v362 = vand.u32 %v361, 4294901760
    %v363 = vsub.f32 %v361, %v362
    %v364 = vand.u32 %v363, 4294901760
    %365 = vmatpush1.msra.mxu0 %v364
    %v366 = vand.u32 %v114, 4294901760
    %v367 = vsub.f32 %v114, %v366
    %v368 = vand.u32 %v367, 4294901760
    %v369 = vsub.f32 %v367, %v368
    %v370 = vand.u32 %v369, 4294901760
    %371 = vmatprep.subr.mxu0 %v370
    %v372 = vand.u32 %v113, 4294901760
    %v373 = vsub.f32 %v113, %v372
    %v374 = vand.u32 %v373, 4294901760
    %v375 = vsub.f32 %v373, %v374
    %v376 = vand.u32 %v375, 4294901760
    %377 = vmatpush1.msra.mxu0 %v376
    %v378 = vand.u32 %v116, 4294901760
    %v379 = vsub.f32 %v116, %v378
    %v380 = vand.u32 %v379, 4294901760
    %v381 = vsub.f32 %v379, %v380
    %v382 = vand.u32 %v381, 4294901760
    %383 = vmatprep.subr.mxu0 %v382
    %v384 = vand.u32 %v115, 4294901760
    %v385 = vsub.f32 %v115, %v384
    %v386 = vand.u32 %v385, 4294901760
    %v387 = vsub.f32 %v385, %v386
    %v388 = vand.u32 %v387, 4294901760
    %389 = vmatpush1.msra.mxu0 %v388
    %v390 = vand.u32 %v118, 4294901760
    %v391 = vsub.f32 %v118, %v390
    %v392 = vand.u32 %v391, 4294901760
    %v393 = vsub.f32 %v391, %v392
    %v394 = vand.u32 %v393, 4294901760
    %395 = vmatprep.subr.mxu0 %v394
    %v396 = vand.u32 %v117, 4294901760
    %v397 = vsub.f32 %v117, %v396
    %v398 = vand.u32 %v397, 4294901760
    %v399 = vsub.f32 %v397, %v398
    %v400 = vand.u32 %v399, 4294901760
    %401 = vmatpush1.msra.mxu0 %v400
    %v402 = vand.u32 %v120, 4294901760
    %v403 = vsub.f32 %v120, %v402
    %v404 = vand.u32 %v403, 4294901760
    %v405 = vsub.f32 %v403, %v404
    %v406 = vand.u32 %v405, 4294901760
    %407 = vmatprep.subr.mxu0 %v406
    %v408 = vand.u32 %v119, 4294901760
    %v409 = vsub.f32 %v119, %v408
    %v410 = vand.u32 %v409, 4294901760
    %v411 = vsub.f32 %v409, %v410
    %v412 = vand.u32 %v411, 4294901760
    %413 = vmatpush1.msra.mxu0 %v412
    %v414 = vand.u32 %v122, 4294901760
    %v415 = vsub.f32 %v122, %v414
    %v416 = vand.u32 %v415, 4294901760
    %v417 = vsub.f32 %v415, %v416
    %v418 = vand.u32 %v417, 4294901760
    %419 = vmatprep.subr.mxu0 %v418
    %v420 = vand.u32 %v121, 4294901760
    %v421 = vsub.f32 %v121, %v420
    %v422 = vand.u32 %v421, 4294901760
    %v423 = vsub.f32 %v421, %v422
    %v424 = vand.u32 %v423, 4294901760
    %425 = vmatpush1.msra.mxu0 %v424
    %v426 = vand.u32 %v124, 4294901760
    %v427 = vsub.f32 %v124, %v426
    %v428 = vand.u32 %v427, 4294901760
    %v429 = vsub.f32 %v427, %v428
    %v430 = vand.u32 %v429, 4294901760
    %431 = vmatprep.subr.mxu0 %v430
    %v432 = vand.u32 %v123, 4294901760
    %v433 = vsub.f32 %v123, %v432
    %v434 = vand.u32 %v433, 4294901760
    %v435 = vsub.f32 %v433, %v434
    %v436 = vand.u32 %v435, 4294901760
    %437 = vmatpush1.msra.mxu0 %v436
    %v438 = vand.u32 %v126, 4294901760
    %v439 = vsub.f32 %v126, %v438
    %v440 = vand.u32 %v439, 4294901760
    %v441 = vsub.f32 %v439, %v440
    %v442 = vand.u32 %v441, 4294901760
    %443 = vmatprep.subr.mxu0 %v442
    %v444 = vand.u32 %v125, 4294901760
    %v445 = vsub.f32 %v125, %v444
    %v446 = vand.u32 %v445, 4294901760
    %v447 = vsub.f32 %v445, %v446
    %v448 = vand.u32 %v447, 4294901760
    %449 = vmatpush1.msra.mxu0 %v448
    %450 = vmatprep.subr.mxu0 0.0
    %451 = vmatpush1.msra.mxu0 0.0
    %452 = vmatprep.subr.mxu0 0.0
    %453 = vmatpush1.msra.mxu0 0.0
    %454 = vmatprep.subr.mxu0 0.0
    %455 = vmatpush1.msra.mxu0 0.0
    %456 = vmatprep.subr.mxu0 0.0
    %457 = vmatpush1.msra.mxu0 0.0
    %458 = vmatprep.subr.mxu0 0.0
    %459 = vmatpush1.msra.mxu0 0.0
    %460 = vmatprep.subr.mxu0 0.0
    %461 = vmatpush1.msra.mxu0 0.0
    %462 = vmatprep.subr.mxu0 0.0
    %463 = vmatpush1.msra.mxu0 0.0
    %464 = vmatprep.subr.mxu0 0.0
    %465 = vmatpush1.msra.mxu0 0.0
    %466 = vmatprep.subr.mxu0 0.0
    %467 = vmatpush1.msra.mxu0 0.0
    %468 = vmatprep.subr.mxu0 0.0
    %469 = vmatpush1.msra.mxu0 0.0
    %470 = vmatprep.subr.mxu0 0.0
    %471 = vmatpush1.msra.mxu0 0.0
    %472 = vmatprep.subr.mxu0 0.0
    %473 = vmatpush1.msra.mxu0 0.0
    %474 = vmatprep.subr.mxu0 0.0
    %475 = vmatpush1.msra.mxu0 0.0
    %476 = vmatprep.subr.mxu0 0.0
    %477 = vmatpush1.msra.mxu0 0.0
    %478 = vmatprep.subr.mxu0 0.0
    %479 = vmatpush1.msra.mxu0 0.0
    %480 = vmatprep.subr.mxu0 0.0
    %481 = vmatpush1.msra.mxu0 0.0
    %482 = vmatprep.mubr.f32.mxu0 0.0
    %v483 = vand.u32 %v93, 4294901760
    %484 = vmatmul.mubr.f32.gmra.mrb[0].mxu0 %v483
    %v485 = vpop.f32.mrb[0].mxu0
    %v486 = vadd.f32 %v243, %v485
    %v487 = vpop.f32.mrb[0].mxu0
    %v488 = vadd.f32 %v245, %v487
    %489 = vmatprep.mubr.f32.mxu0 0.0
    %v490 = vand.u32 %v94, 4294901760
    %491 = vmatmul.mubr.f32.gmra.mrb[0].mxu0 %v490
    %v492 = vpop.f32.mrb[0].mxu0
    %v493 = vadd.f32 %v254, %v492
    %v494 = vpop.f32.mrb[0].mxu0
    %v495 = vadd.f32 %v256, %v494
    %496 = vdwg.mxu0
    %v497 = vand.u32 %v96, 4294901760
    %v498 = vsub.f32 %v96, %v497
    %499 = vmatprep.subr.mxu0 %v498
    %v500 = vand.u32 %v95, 4294901760
    %v501 = vsub.f32 %v95, %v500
    %502 = vmatpush1.msra.mxu0 %v501
    %v503 = vand.u32 %v98, 4294901760
    %v504 = vsub.f32 %v98, %v503
    %505 = vmatprep.subr.mxu0 %v504
    %v506 = vand.u32 %v97, 4294901760
    %v507 = vsub.f32 %v97, %v506
    %508 = vmatpush1.msra.mxu0 %v507
    %v509 = vand.u32 %v100, 4294901760
    %v510 = vsub.f32 %v100, %v509
    %511 = vmatprep.subr.mxu0 %v510
    %v512 = vand.u32 %v99, 4294901760
    %v513 = vsub.f32 %v99, %v512
    %514 = vmatpush1.msra.mxu0 %v513
    %v515 = vand.u32 %v102, 4294901760
    %v516 = vsub.f32 %v102, %v515
    %517 = vmatprep.subr.mxu0 %v516
    %v518 = vand.u32 %v101, 4294901760
    %v519 = vsub.f32 %v101, %v518
    %520 = vmatpush1.msra.mxu0 %v519
    %v521 = vand.u32 %v104, 4294901760
    %v522 = vsub.f32 %v104, %v521
    %523 = vmatprep.subr.mxu0 %v522
    %v524 = vand.u32 %v103, 4294901760
    %v525 = vsub.f32 %v103, %v524
    %526 = vmatpush1.msra.mxu0 %v525
    %v527 = vand.u32 %v106, 4294901760
    %v528 = vsub.f32 %v106, %v527
    %529 = vmatprep.subr.mxu0 %v528
    %v530 = vand.u32 %v105, 4294901760
    %v531 = vsub.f32 %v105, %v530
    %532 = vmatpush1.msra.mxu0 %v531
    %v533 = vand.u32 %v108, 4294901760
    %v534 = vsub.f32 %v108, %v533
    %535 = vmatprep.subr.mxu0 %v534
    %v536 = vand.u32 %v107, 4294901760
    %v537 = vsub.f32 %v107, %v536
    %538 = vmatpush1.msra.mxu0 %v537
    %v539 = vand.u32 %v110, 4294901760
    %v540 = vsub.f32 %v110, %v539
    %541 = vmatprep.subr.mxu0 %v540
    %v542 = vand.u32 %v109, 4294901760
    %v543 = vsub.f32 %v109, %v542
    %544 = vmatpush1.msra.mxu0 %v543
    %v545 = vand.u32 %v112, 4294901760
    %v546 = vsub.f32 %v112, %v545
    %547 = vmatprep.subr.mxu0 %v546
    %v548 = vand.u32 %v111, 4294901760
    %v549 = vsub.f32 %v111, %v548
    %550 = vmatpush1.msra.mxu0 %v549
    %v551 = vand.u32 %v114, 4294901760
    %v552 = vsub.f32 %v114, %v551
    %553 = vmatprep.subr.mxu0 %v552
    %v554 = vand.u32 %v113, 4294901760
    %v555 = vsub.f32 %v113, %v554
    %556 = vmatpush1.msra.mxu0 %v555
    %v557 = vand.u32 %v116, 4294901760
    %v558 = vsub.f32 %v116, %v557
    %559 = vmatprep.subr.mxu0 %v558
    %v560 = vand.u32 %v115, 4294901760
    %v561 = vsub.f32 %v115, %v560
    %562 = vmatpush1.msra.mxu0 %v561
    %v563 = vand.u32 %v118, 4294901760
    %v564 = vsub.f32 %v118, %v563
    %565 = vmatprep.subr.mxu0 %v564
    %v566 = vand.u32 %v117, 4294901760
    %v567 = vsub.f32 %v117, %v566
    %568 = vmatpush1.msra.mxu0 %v567
    %v569 = vand.u32 %v120, 4294901760
    %v570 = vsub.f32 %v120, %v569
    %571 = vmatprep.subr.mxu0 %v570
    %v572 = vand.u32 %v119, 4294901760
    %v573 = vsub.f32 %v119, %v572
    %574 = vmatpush1.msra.mxu0 %v573
    %v575 = vand.u32 %v122, 4294901760
    %v576 = vsub.f32 %v122, %v575
    %577 = vmatprep.subr.mxu0 %v576
    %v578 = vand.u32 %v121, 4294901760
    %v579 = vsub.f32 %v121, %v578
    %580 = vmatpush1.msra.mxu0 %v579
    %v581 = vand.u32 %v124, 4294901760
    %v582 = vsub.f32 %v124, %v581
    %583 = vmatprep.subr.mxu0 %v582
    %v584 = vand.u32 %v123, 4294901760
    %v585 = vsub.f32 %v123, %v584
    %586 = vmatpush1.msra.mxu0 %v585
    %v587 = vand.u32 %v126, 4294901760
    %v588 = vsub.f32 %v126, %v587
    %589 = vmatprep.subr.mxu0 %v588
    %v590 = vand.u32 %v125, 4294901760
    %v591 = vsub.f32 %v125, %v590
    %592 = vmatpush1.msra.mxu0 %v591
    %593 = vmatprep.subr.mxu0 0.0
    %594 = vmatpush1.msra.mxu0 0.0
    %595 = vmatprep.subr.mxu0 0.0
    %596 = vmatpush1.msra.mxu0 0.0
    %597 = vmatprep.subr.mxu0 0.0
    %598 = vmatpush1.msra.mxu0 0.0
    %599 = vmatprep.subr.mxu0 0.0
    %600 = vmatpush1.msra.mxu0 0.0
    %601 = vmatprep.subr.mxu0 0.0
    %602 = vmatpush1.msra.mxu0 0.0
    %603 = vmatprep.subr.mxu0 0.0
    %604 = vmatpush1.msra.mxu0 0.0
    %605 = vmatprep.subr.mxu0 0.0
    %606 = vmatpush1.msra.mxu0 0.0
    %607 = vmatprep.subr.mxu0 0.0
    %608 = vmatpush1.msra.mxu0 0.0
    %609 = vmatprep.subr.mxu0 0.0
    %610 = vmatpush1.msra.mxu0 0.0
    %611 = vmatprep.subr.mxu0 0.0
    %612 = vmatpush1.msra.mxu0 0.0
    %613 = vmatprep.subr.mxu0 0.0
    %614 = vmatpush1.msra.mxu0 0.0
    %615 = vmatprep.subr.mxu0 0.0
    %616 = vmatpush1.msra.mxu0 0.0
    %617 = vmatprep.subr.mxu0 0.0
    %618 = vmatpush1.msra.mxu0 0.0
    %619 = vmatprep.subr.mxu0 0.0
    %620 = vmatpush1.msra.mxu0 0.0
    %621 = vmatprep.subr.mxu0 0.0
    %622 = vmatpush1.msra.mxu0 0.0
    %623 = vmatprep.subr.mxu0 0.0
    %624 = vmatpush1.msra.mxu0 0.0
    %625 = vmatprep.mubr.f32.mxu0 0.0
    %v626 = vand.u32 %v93, 4294901760
    %v627 = vsub.f32 %v93, %v626
    %628 = vmatmul.mubr.f32.gmra.mrb[0].mxu0 %v627
    %v629 = vpop.f32.mrb[0].mxu0
    %v630 = vadd.f32 %v486, %v629
    %v631 = vpop.f32.mrb[0].mxu0
    %v632 = vadd.f32 %v488, %v631
    %633 = vmatprep.mubr.f32.mxu0 0.0
    %v634 = vand.u32 %v94, 4294901760
    %v635 = vsub.f32 %v94, %v634
    %636 = vmatmul.mubr.f32.gmra.mrb[0].mxu0 %v635
    %v637 = vpop.f32.mrb[0].mxu0
    %v638 = vadd.f32 %v493, %v637
    %v639 = vpop.f32.mrb[0].mxu0
    %v640 = vadd.f32 %v495, %v639
    %641 = vdwg.mxu0
    %v642 = vand.u32 %v96, 4294901760
    %643 = vmatprep.subr.mxu0 %v642
    %v644 = vand.u32 %v95, 4294901760
    %645 = vmatpush1.msra.mxu0 %v644
    %v646 = vand.u32 %v98, 4294901760
    %647 = vmatprep.subr.mxu0 %v646
    %v648 = vand.u32 %v97, 4294901760
    %649 = vmatpush1.msra.mxu0 %v648
    %v650 = vand.u32 %v100, 4294901760
    %651 = vmatprep.subr.mxu0 %v650
    %v652 = vand.u32 %v99, 4294901760
    %653 = vmatpush1.msra.mxu0 %v652
    %v654 = vand.u32 %v102, 4294901760
    %655 = vmatprep.subr.mxu0 %v654
    %v656 = vand.u32 %v101, 4294901760
    %657 = vmatpush1.msra.mxu0 %v656
    %v658 = vand.u32 %v104, 4294901760
    %659 = vmatprep.subr.mxu0 %v658
    %v660 = vand.u32 %v103, 4294901760
    %661 = vmatpush1.msra.mxu0 %v660
    %v662 = vand.u32 %v106, 4294901760
    %663 = vmatprep.subr.mxu0 %v662
    %v664 = vand.u32 %v105, 4294901760
    %665 = vmatpush1.msra.mxu0 %v664
    %v666 = vand.u32 %v108, 4294901760
    %667 = vmatprep.subr.mxu0 %v666
    %v668 = vand.u32 %v107, 4294901760
    %669 = vmatpush1.msra.mxu0 %v668
    %v670 = vand.u32 %v110, 4294901760
    %671 = vmatprep.subr.mxu0 %v670
    %v672 = vand.u32 %v109, 4294901760
    %673 = vmatpush1.msra.mxu0 %v672
    %v674 = vand.u32 %v112, 4294901760
    %675 = vmatprep.subr.mxu0 %v674
    %v676 = vand.u32 %v111, 4294901760
    %677 = vmatpush1.msra.mxu0 %v676
    %v678 = vand.u32 %v114, 4294901760
    %679 = vmatprep.subr.mxu0 %v678
    %v680 = vand.u32 %v113, 4294901760
    %681 = vmatpush1.msra.mxu0 %v680
    %v682 = vand.u32 %v116, 4294901760
    %683 = vmatprep.subr.mxu0 %v682
    %v684 = vand.u32 %v115, 4294901760
    %685 = vmatpush1.msra.mxu0 %v684
    %v686 = vand.u32 %v118, 4294901760
    %687 = vmatprep.subr.mxu0 %v686
    %v688 = vand.u32 %v117, 4294901760
    %689 = vmatpush1.msra.mxu0 %v688
    %v690 = vand.u32 %v120, 4294901760
    %691 = vmatprep.subr.mxu0 %v690
    %v692 = vand.u32 %v119, 4294901760
    %693 = vmatpush1.msra.mxu0 %v692
    %v694 = vand.u32 %v122, 4294901760
    %695 = vmatprep.subr.mxu0 %v694
    %v696 = vand.u32 %v121, 4294901760
    %697 = vmatpush1.msra.mxu0 %v696
    %v698 = vand.u32 %v124, 4294901760
    %699 = vmatprep.subr.mxu0 %v698
    %v700 = vand.u32 %v123, 4294901760
    %701 = vmatpush1.msra.mxu0 %v700
    %v702 = vand.u32 %v126, 4294901760
    %703 = vmatprep.subr.mxu0 %v702
    %v704 = vand.u32 %v125, 4294901760
    %705 = vmatpush1.msra.mxu0 %v704
    %706 = vmatprep.subr.mxu0 0.0
    %707 = vmatpush1.msra.mxu0 0.0
    %708 = vmatprep.subr.mxu0 0.0
    %709 = vmatpush1.msra.mxu0 0.0
    %710 = vmatprep.subr.mxu0 0.0
    %711 = vmatpush1.msra.mxu0 0.0
    %712 = vmatprep.subr.mxu0 0.0
    %713 = vmatpush1.msra.mxu0 0.0
    %714 = vmatprep.subr.mxu0 0.0
    %715 = vmatpush1.msra.mxu0 0.0
    %716 = vmatprep.subr.mxu0 0.0
    %717 = vmatpush1.msra.mxu0 0.0
    %718 = vmatprep.subr.mxu0 0.0
    %719 = vmatpush1.msra.mxu0 0.0
    %720 = vmatprep.subr.mxu0 0.0
    %721 = vmatpush1.msra.mxu0 0.0
    %722 = vmatprep.subr.mxu0 0.0
    %723 = vmatpush1.msra.mxu0 0.0
    %724 = vmatprep.subr.mxu0 0.0
    %725 = vmatpush1.msra.mxu0 0.0
    %726 = vmatprep.subr.mxu0 0.0
    %727 = vmatpush1.msra.mxu0 0.0
    %728 = vmatprep.subr.mxu0 0.0
    %729 = vmatpush1.msra.mxu0 0.0
    %730 = vmatprep.subr.mxu0 0.0
    %731 = vmatpush1.msra.mxu0 0.0
    %732 = vmatprep.subr.mxu0 0.0
    %733 = vmatpush1.msra.mxu0 0.0
    %734 = vmatprep.subr.mxu0 0.0
    %735 = vmatpush1.msra.mxu0 0.0
    %736 = vmatprep.subr.mxu0 0.0
    %737 = vmatpush1.msra.mxu0 0.0
    %738 = vmatprep.mubr.f32.mxu0 0.0
    %v739 = vand.u32 %v93, 4294901760
    %v740 = vsub.f32 %v93, %v739
    %v741 = vand.u32 %v740, 4294901760
    %742 = vmatmul.mubr.f32.gmra.mrb[0].mxu0 %v741
    %v743 = vpop.f32.mrb[0].mxu0
    %v744 = vadd.f32 %v630, %v743
    %v745 = vpop.f32.mrb[0].mxu0
    %v746 = vadd.f32 %v632, %v745
    %747 = vmatprep.mubr.f32.mxu0 0.0
    %v748 = vand.u32 %v94, 4294901760
    %v749 = vsub.f32 %v94, %v748
    %v750 = vand.u32 %v749, 4294901760
    %751 = vmatmul.mubr.f32.gmra.mrb[0].mxu0 %v750
    %v752 = vpop.f32.mrb[0].mxu0
    %v753 = vadd.f32 %v638, %v752
    %v754 = vpop.f32.mrb[0].mxu0
    %v755 = vadd.f32 %v640, %v754
    %756 = vdwg.mxu0
    %v757 = vand.u32 %v96, 4294901760
    %v758 = vsub.f32 %v96, %v757
    %v759 = vand.u32 %v758, 4294901760
    %760 = vmatprep.subr.mxu0 %v759
    %v761 = vand.u32 %v95, 4294901760
    %v762 = vsub.f32 %v95, %v761
    %v763 = vand.u32 %v762, 4294901760
    %764 = vmatpush1.msra.mxu0 %v763
    %v765 = vand.u32 %v98, 4294901760
    %v766 = vsub.f32 %v98, %v765
    %v767 = vand.u32 %v766, 4294901760
    %768 = vmatprep.subr.mxu0 %v767
    %v769 = vand.u32 %v97, 4294901760
    %v770 = vsub.f32 %v97, %v769
    %v771 = vand.u32 %v770, 4294901760
    %772 = vmatpush1.msra.mxu0 %v771
    %v773 = vand.u32 %v100, 4294901760
    %v774 = vsub.f32 %v100, %v773
    %v775 = vand.u32 %v774, 4294901760
    %776 = vmatprep.subr.mxu0 %v775
    %v777 = vand.u32 %v99, 4294901760
    %v778 = vsub.f32 %v99, %v777
    %v779 = vand.u32 %v778, 4294901760
    %780 = vmatpush1.msra.mxu0 %v779
    %v781 = vand.u32 %v102, 4294901760
    %v782 = vsub.f32 %v102, %v781
    %v783 = vand.u32 %v782, 4294901760
    %784 = vmatprep.subr.mxu0 %v783
    %v785 = vand.u32 %v101, 4294901760
    %v786 = vsub.f32 %v101, %v785
    %v787 = vand.u32 %v786, 4294901760
    %788 = vmatpush1.msra.mxu0 %v787
    %v789 = vand.u32 %v104, 4294901760
    %v790 = vsub.f32 %v104, %v789
    %v791 = vand.u32 %v790, 4294901760
    %792 = vmatprep.subr.mxu0 %v791
    %v793 = vand.u32 %v103, 4294901760
    %v794 = vsub.f32 %v103, %v793
    %v795 = vand.u32 %v794, 4294901760
    %796 = vmatpush1.msra.mxu0 %v795
    %v797 = vand.u32 %v106, 4294901760
    %v798 = vsub.f32 %v106, %v797
    %v799 = vand.u32 %v798, 4294901760
    %800 = vmatprep.subr.mxu0 %v799
    %v801 = vand.u32 %v105, 4294901760
    %v802 = vsub.f32 %v105, %v801
    %v803 = vand.u32 %v802, 4294901760
    %804 = vmatpush1.msra.mxu0 %v803
    %v805 = vand.u32 %v108, 4294901760
    %v806 = vsub.f32 %v108, %v805
    %v807 = vand.u32 %v806, 4294901760
    %808 = vmatprep.subr.mxu0 %v807
    %v809 = vand.u32 %v107, 4294901760
    %v810 = vsub.f32 %v107, %v809
    %v811 = vand.u32 %v810, 4294901760
    %812 = vmatpush1.msra.mxu0 %v811
    %v813 = vand.u32 %v110, 4294901760
    %v814 = vsub.f32 %v110, %v813
    %v815 = vand.u32 %v814, 4294901760
    %816 = vmatprep.subr.mxu0 %v815
    %v817 = vand.u32 %v109, 4294901760
    %v818 = vsub.f32 %v109, %v817
    %v819 = vand.u32 %v818, 4294901760
    %820 = vmatpush1.msra.mxu0 %v819
    %v821 = vand.u32 %v112, 4294901760
    %v822 = vsub.f32 %v112, %v821
    %v823 = vand.u32 %v822, 4294901760
    %824 = vmatprep.subr.mxu0 %v823
    %v825 = vand.u32 %v111, 4294901760
    %v826 = vsub.f32 %v111, %v825
    %v827 = vand.u32 %v826, 4294901760
    %828 = vmatpush1.msra.mxu0 %v827
    %v829 = vand.u32 %v114, 4294901760
    %v830 = vsub.f32 %v114, %v829
    %v831 = vand.u32 %v830, 4294901760
    %832 = vmatprep.subr.mxu0 %v831
    %v833 = vand.u32 %v113, 4294901760
    %v834 = vsub.f32 %v113, %v833
    %v835 = vand.u32 %v834, 4294901760
    %836 = vmatpush1.msra.mxu0 %v835
    %v837 = vand.u32 %v116, 4294901760
    %v838 = vsub.f32 %v116, %v837
    %v839 = vand.u32 %v838, 4294901760
    %840 = vmatprep.subr.mxu0 %v839
    %v841 = vand.u32 %v115, 4294901760
    %v842 = vsub.f32 %v115, %v841
    %v843 = vand.u32 %v842, 4294901760
    %844 = vmatpush1.msra.mxu0 %v843
    %v845 = vand.u32 %v118, 4294901760
    %v846 = vsub.f32 %v118, %v845
    %v847 = vand.u32 %v846, 4294901760
    %848 = vmatprep.subr.mxu0 %v847
    %v849 = vand.u32 %v117, 4294901760
    %v850 = vsub.f32 %v117, %v849
    %v851 = vand.u32 %v850, 4294901760
    %852 = vmatpush1.msra.mxu0 %v851
    %v853 = vand.u32 %v120, 4294901760
    %v854 = vsub.f32 %v120, %v853
    %v855 = vand.u32 %v854, 4294901760
    %856 = vmatprep.subr.mxu0 %v855
    %v857 = vand.u32 %v119, 4294901760
    %v858 = vsub.f32 %v119, %v857
    %v859 = vand.u32 %v858, 4294901760
    %860 = vmatpush1.msra.mxu0 %v859
    %v861 = vand.u32 %v122, 4294901760
    %v862 = vsub.f32 %v122, %v861
    %v863 = vand.u32 %v862, 4294901760
    %864 = vmatprep.subr.mxu0 %v863
    %v865 = vand.u32 %v121, 4294901760
    %v866 = vsub.f32 %v121, %v865
    %v867 = vand.u32 %v866, 4294901760
    %868 = vmatpush1.msra.mxu0 %v867
    %v869 = vand.u32 %v124, 4294901760
    %v870 = vsub.f32 %v124, %v869
    %v871 = vand.u32 %v870, 4294901760
    %872 = vmatprep.subr.mxu0 %v871
    %v873 = vand.u32 %v123, 4294901760
    %v874 = vsub.f32 %v123, %v873
    %v875 = vand.u32 %v874, 4294901760
    %876 = vmatpush1.msra.mxu0 %v875
    %v877 = vand.u32 %v126, 4294901760
    %v878 = vsub.f32 %v126, %v877
    %v879 = vand.u32 %v878, 4294901760
    %880 = vmatprep.subr.mxu0 %v879
    %v881 = vand.u32 %v125, 4294901760
    %v882 = vsub.f32 %v125, %v881
    %v883 = vand.u32 %v882, 4294901760
    %884 = vmatpush1.msra.mxu0 %v883
    %885 = vmatprep.subr.mxu0 0.0
    %886 = vmatpush1.msra.mxu0 0.0
    %887 = vmatprep.subr.mxu0 0.0
    %888 = vmatpush1.msra.mxu0 0.0
    %889 = vmatprep.subr.mxu0 0.0
    %890 = vmatpush1.msra.mxu0 0.0
    %891 = vmatprep.subr.mxu0 0.0
    %892 = vmatpush1.msra.mxu0 0.0
    %893 = vmatprep.subr.mxu0 0.0
    %894 = vmatpush1.msra.mxu0 0.0
    %895 = vmatprep.subr.mxu0 0.0
    %896 = vmatpush1.msra.mxu0 0.0
    %897 = vmatprep.subr.mxu0 0.0
    %898 = vmatpush1.msra.mxu0 0.0
    %899 = vmatprep.subr.mxu0 0.0
    %900 = vmatpush1.msra.mxu0 0.0
    %901 = vmatprep.subr.mxu0 0.0
    %902 = vmatpush1.msra.mxu0 0.0
    %903 = vmatprep.subr.mxu0 0.0
    %904 = vmatpush1.msra.mxu0 0.0
    %905 = vmatprep.subr.mxu0 0.0
    %906 = vmatpush1.msra.mxu0 0.0
    %907 = vmatprep.subr.mxu0 0.0
    %908 = vmatpush1.msra.mxu0 0.0
    %909 = vmatprep.subr.mxu0 0.0
    %910 = vmatpush1.msra.mxu0 0.0
    %911 = vmatprep.subr.mxu0 0.0
    %912 = vmatpush1.msra.mxu0 0.0
    %913 = vmatprep.subr.mxu0 0.0
    %914 = vmatpush1.msra.mxu0 0.0
    %915 = vmatprep.subr.mxu0 0.0
    %916 = vmatpush1.msra.mxu0 0.0
    %917 = vmatprep.mubr.f32.mxu0 0.0
    %v918 = vand.u32 %v93, 4294901760
    %919 = vmatmul.mubr.f32.gmra.mrb[0].mxu0 %v918
    %v920 = vpop.f32.mrb[0].mxu0
    %v921 = vadd.f32 %v744, %v920
    %v922 = vpop.f32.mrb[0].mxu0
    %v923 = vadd.f32 %v746, %v922
    %924 = vmatprep.mubr.f32.mxu0 0.0
    %v925 = vand.u32 %v94, 4294901760
    %926 = vmatmul.mubr.f32.gmra.mrb[0].mxu0 %v925
    %v927 = vpop.f32.mrb[0].mxu0
    %v928 = vadd.f32 %v753, %v927
    %v929 = vpop.f32.mrb[0].mxu0
    %v930 = vadd.f32 %v755, %v929
    %931 = vdwg.mxu0
    %v932 = vand.u32 %v96, 4294901760
    %933 = vmatprep.subr.mxu0 %v932
    %v934 = vand.u32 %v95, 4294901760
    %935 = vmatpush1.msra.mxu0 %v934
    %v936 = vand.u32 %v98, 4294901760
    %937 = vmatprep.subr.mxu0 %v936
    %v938 = vand.u32 %v97, 4294901760
    %939 = vmatpush1.msra.mxu0 %v938
    %v940 = vand.u32 %v100, 4294901760
    %941 = vmatprep.subr.mxu0 %v940
    %v942 = vand.u32 %v99, 4294901760
    %943 = vmatpush1.msra.mxu0 %v942
    %v944 = vand.u32 %v102, 4294901760
    %945 = vmatprep.subr.mxu0 %v944
    %v946 = vand.u32 %v101, 4294901760
    %947 = vmatpush1.msra.mxu0 %v946
    %v948 = vand.u32 %v104, 4294901760
    %949 = vmatprep.subr.mxu0 %v948
    %v950 = vand.u32 %v103, 4294901760
    %951 = vmatpush1.msra.mxu0 %v950
    %v952 = vand.u32 %v106, 4294901760
    %953 = vmatprep.subr.mxu0 %v952
    %v954 = vand.u32 %v105, 4294901760
    %955 = vmatpush1.msra.mxu0 %v954
    %v956 = vand.u32 %v108, 4294901760
    %957 = vmatprep.subr.mxu0 %v956
    %v958 = vand.u32 %v107, 4294901760
    %959 = vmatpush1.msra.mxu0 %v958
    %v960 = vand.u32 %v110, 4294901760
    %961 = vmatprep.subr.mxu0 %v960
    %v962 = vand.u32 %v109, 4294901760
    %963 = vmatpush1.msra.mxu0 %v962
    %v964 = vand.u32 %v112, 4294901760
    %965 = vmatprep.subr.mxu0 %v964
    %v966 = vand.u32 %v111, 4294901760
    %967 = vmatpush1.msra.mxu0 %v966
    %v968 = vand.u32 %v114, 4294901760
    %969 = vmatprep.subr.mxu0 %v968
    %v970 = vand.u32 %v113, 4294901760
    %971 = vmatpush1.msra.mxu0 %v970
    %v972 = vand.u32 %v116, 4294901760
    %973 = vmatprep.subr.mxu0 %v972
    %v974 = vand.u32 %v115, 4294901760
    %975 = vmatpush1.msra.mxu0 %v974
    %v976 = vand.u32 %v118, 4294901760
    %977 = vmatprep.subr.mxu0 %v976
    %v978 = vand.u32 %v117, 4294901760
    %979 = vmatpush1.msra.mxu0 %v978
    %v980 = vand.u32 %v120, 4294901760
    %981 = vmatprep.subr.mxu0 %v980
    %v982 = vand.u32 %v119, 4294901760
    %983 = vmatpush1.msra.mxu0 %v982
    %v984 = vand.u32 %v122, 4294901760
    %985 = vmatprep.subr.mxu0 %v984
    %v986 = vand.u32 %v121, 4294901760
    %987 = vmatpush1.msra.mxu0 %v986
    %v988 = vand.u32 %v124, 4294901760
    %989 = vmatprep.subr.mxu0 %v988
    %v990 = vand.u32 %v123, 4294901760
    %991 = vmatpush1.msra.mxu0 %v990
    %v992 = vand.u32 %v126, 4294901760
    %993 = vmatprep.subr.mxu0 %v992
    %v994 = vand.u32 %v125, 4294901760
    %995 = vmatpush1.msra.mxu0 %v994
    %996 = vmatprep.subr.mxu0 0.0
    %997 = vmatpush1.msra.mxu0 0.0
    %998 = vmatprep.subr.mxu0 0.0
    %999 = vmatpush1.msra.mxu0 0.0
    %1000 = vmatprep.subr.mxu0 0.0
    %1001 = vmatpush1.msra.mxu0 0.0
    %1002 = vmatprep.subr.mxu0 0.0
    %1003 = vmatpush1.msra.mxu0 0.0
    %1004 = vmatprep.subr.mxu0 0.0
    %1005 = vmatpush1.msra.mxu0 0.0
    %1006 = vmatprep.subr.mxu0 0.0
    %1007 = vmatpush1.msra.mxu0 0.0
    %1008 = vmatprep.subr.mxu0 0.0
    %1009 = vmatpush1.msra.mxu0 0.0
    %1010 = vmatprep.subr.mxu0 0.0
    %1011 = vmatpush1.msra.mxu0 0.0
    %1012 = vmatprep.subr.mxu0 0.0
    %1013 = vmatpush1.msra.mxu0 0.0
    %1014 = vmatprep.subr.mxu0 0.0
    %1015 = vmatpush1.msra.mxu0 0.0
    %1016 = vmatprep.subr.mxu0 0.0
    %1017 = vmatpush1.msra.mxu0 0.0
    %1018 = vmatprep.subr.mxu0 0.0
    %1019 = vmatpush1.msra.mxu0 0.0
    %1020 = vmatprep.subr.mxu0 0.0
    %1021 = vmatpush1.msra.mxu0 0.0
    %1022 = vmatprep.subr.mxu0 0.0
    %1023 = vmatpush1.msra.mxu0 0.0
    %1024 = vmatprep.subr.mxu0 0.0
    %1025 = vmatpush1.msra.mxu0 0.0
    %1026 = vmatprep.subr.mxu0 0.0
    %1027 = vmatpush1.msra.mxu0 0.0
    %1028 = vmatprep.mubr.f32.mxu0 0.0
    %v1029 = vand.u32 %v93, 4294901760
    %1030 = vmatmul.mubr.f32.gmra.mrb[0].mxu0 %v1029
    %v1031 = vpop.f32.mrb[0].mxu0
    %v1032 = vadd.f32 %v921, %v1031
    %v1033 = vpop.f32.mrb[0].mxu0
    %v1034 = vadd.f32 %v923, %v1033
    %1035 = vmatprep.mubr.f32.mxu0 0.0
    %v1036 = vand.u32 %v94, 4294901760
    %1037 = vmatmul.mubr.f32.gmra.mrb[0].mxu0 %v1036
    %v1038 = vpop.f32.mrb[0].mxu0
    %v1039 = vadd.f32 %v928, %v1038
    %v1040 = vpop.f32.mrb[0].mxu0
    %v1041 = vadd.f32 %v930, %v1040
    %1042 = vdwg.mxu0
    %v1043 = vpack.c.bf16 %v1039, %v1032
    %v1044 = vld [vmem:[#allocation7] sm:$0xff]
    %v1045 = vld [vmem:[#allocation7 + $0x8] sm:$0xff]
    %v1046 = vld [vmem:[#allocation7 + $0x10] sm:$0xff]
    %v1047 = vld [vmem:[#allocation7 + $0x18] sm:$0xff]
    %v1048 = vld [vmem:[#allocation7 + $0x20] sm:$0xff]
    %v1049 = vld [vmem:[#allocation7 + $0x28] sm:$0xff]
    %v1050 = vld [vmem:[#allocation7 + $0x30] sm:$0xff]
    %v1051 = vld [vmem:[#allocation7 + $0x38] sm:$0xff]
    %v1052 = vld [vmem:[#allocation7 + $0x40] sm:$0xff]
    %v1053 = vld [vmem:[#allocation7 + $0x48] sm:$0xff]
    %v1054 = vld [vmem:[#allocation7 + $0x50] sm:$0xff]
    %v1055 = vld [vmem:[#allocation7 + $0x58] sm:$0xff]
    %v1056 = vld [vmem:[#allocation7 + $0x60] sm:$0xff]
    %v1057 = vld [vmem:[#allocation7 + $0x68] sm:$0xff]
    %v1058 = vld [vmem:[#allocation7 + $0x70] sm:$0xff]
    %v1059 = vld [vmem:[#allocation7 + $0x78] sm:$0xff]
    %v1060 = vld [vmem:[#allocation7 + $0x80] sm:$0xff]
    %v1061 = vld [vmem:[#allocation7 + $0x88] sm:$0xff]
    %v1062 = vld [vmem:[#allocation7 + $0x90] sm:$0xff]
    %v1063 = vld [vmem:[#allocation7 + $0x98] sm:$0xff]
    %v1064 = vld [vmem:[#allocation7 + $0xa0] sm:$0xff]
    %v1065 = vld [vmem:[#allocation7 + $0xa8] sm:$0xff]
    %v1066 = vld [vmem:[#allocation7 + $0xb0] sm:$0xff]
    %v1067 = vld [vmem:[#allocation7 + $0xb8] sm:$0xff]
    %v1068 = vld [vmem:[#allocation7 + $0xc0] sm:$0xff]
    %v1069 = vld [vmem:[#allocation7 + $0xc8] sm:$0xff]
    %v1070 = vld [vmem:[#allocation7 + $0xd0] sm:$0xff]
    %v1071 = vld [vmem:[#allocation7 + $0xd8] sm:$0xff]
    %v1072 = vld [vmem:[#allocation7 + $0xe0] sm:$0xff]
    %v1073 = vld [vmem:[#allocation7 + $0xe8] sm:$0xff]
    %v1074 = vld [vmem:[#allocation7 + $0xf0] sm:$0xff]
    %v1075 = vld [vmem:[#allocation7 + $0xf8] sm:$0xff]
    %v1076 = vld [vmem:[#allocation7 + $0x100] sm:$0xff]
    %v1077 = vld [vmem:[#allocation7 + $0x108] sm:$0xff]
    %v1078 = vld [vmem:[#allocation7 + $0x110] sm:$0xff]
    %v1079 = vld [vmem:[#allocation7 + $0x118] sm:$0xff]
    %v1080 = vld [vmem:[#allocation7 + $0x120] sm:$0xff]
    %v1081 = vld [vmem:[#allocation7 + $0x128] sm:$0xff]
    %v1082 = vld [vmem:[#allocation7 + $0x130] sm:$0xff]
    %v1083 = vld [vmem:[#allocation7 + $0x138] sm:$0xff]
    %v1084 = vld [vmem:[#allocation7 + $0x140] sm:$0xff]
    %v1085 = vld [vmem:[#allocation7 + $0x148] sm:$0xff]
    %v1086 = vld [vmem:[#allocation7 + $0x150] sm:$0xff]
    %v1087 = vld [vmem:[#allocation7 + $0x158] sm:$0xff]
    %v1088 = vld [vmem:[#allocation7 + $0x160] sm:$0xff]
    %v1089 = vld [vmem:[#allocation7 + $0x168] sm:$0xff]
    %v1090 = vld [vmem:[#allocation7 + $0x170] sm:$0xff]
    %v1091 = vld [vmem:[#allocation7 + $0x178] sm:$0xff]
    %v1092 = vld [vmem:[#allocation7 + $0x180] sm:$0xff]
    %v1093 = vld [vmem:[#allocation7 + $0x188] sm:$0xff]
    %v1094 = vld [vmem:[#allocation7 + $0x190] sm:$0xff]
    %v1095 = vld [vmem:[#allocation7 + $0x198] sm:$0xff]
    %v1096 = vld [vmem:[#allocation7 + $0x1a0] sm:$0xff]
    %v1097 = vld [vmem:[#allocation7 + $0x1a8] sm:$0xff]
    %v1098 = vld [vmem:[#allocation7 + $0x1b0] sm:$0xff]
    %v1099 = vld [vmem:[#allocation7 + $0x1b8] sm:$0xff]
    %v1100 = vld [vmem:[#allocation7 + $0x1c0] sm:$0xff]
    %v1101 = vld [vmem:[#allocation7 + $0x1c8] sm:$0xff]
    %v1102 = vld [vmem:[#allocation7 + $0x1d0] sm:$0xff]
    %v1103 = vld [vmem:[#allocation7 + $0x1d8] sm:$0xff]
    %v1104 = vld [vmem:[#allocation7 + $0x1e0] sm:$0xff]
    %v1105 = vld [vmem:[#allocation7 + $0x1e8] sm:$0xff]
    %v1106 = vld [vmem:[#allocation7 + $0x1f0] sm:$0xff]
    %v1107 = vld [vmem:[#allocation7 + $0x1f8] sm:$0xff]
    %v1108 = vld [vmem:[#allocation7 + $0x200] sm:$0xff]
    %v1109 = vld [vmem:[#allocation7 + $0x208] sm:$0xff]
    %v1110 = vld [vmem:[#allocation7 + $0x210] sm:$0xff]
    %v1111 = vld [vmem:[#allocation7 + $0x218] sm:$0xff]
    %v1112 = vld [vmem:[#allocation7 + $0x220] sm:$0xff]
    %v1113 = vld [vmem:[#allocation7 + $0x228] sm:$0xff]
    %v1114 = vld [vmem:[#allocation7 + $0x230] sm:$0xff]
    %v1115 = vld [vmem:[#allocation7 + $0x238] sm:$0xff]
    %v1116 = vld [vmem:[#allocation7 + $0x240] sm:$0xff]
    %v1117 = vld [vmem:[#allocation7 + $0x248] sm:$0xff]
    %v1118 = vld [vmem:[#allocation7 + $0x250] sm:$0xff]
    %v1119 = vld [vmem:[#allocation7 + $0x258] sm:$0xff]
    %v1120 = vld [vmem:[#allocation7 + $0x260] sm:$0xff]
    %v1121 = vld [vmem:[#allocation7 + $0x268] sm:$0xff]
    %v1122 = vld [vmem:[#allocation7 + $0x270] sm:$0xff]
    %v1123 = vld [vmem:[#allocation7 + $0x278] sm:$0xff]
    %v1124 = vld [vmem:[#allocation7 + $0x280] sm:$0xff]
    %v1125 = vld [vmem:[#allocation7 + $0x288] sm:$0xff]
    %v1126 = vld [vmem:[#allocation7 + $0x290] sm:$0xff]
    %v1127 = vld [vmem:[#allocation7 + $0x298] sm:$0xff]
    %v1128 = vld [vmem:[#allocation7 + $0x2a0] sm:$0xff]
    %v1129 = vld [vmem:[#allocation7 + $0x2a8] sm:$0xff]
    %v1130 = vld [vmem:[#allocation7 + $0x2b0] sm:$0xff]
    %v1131 = vld [vmem:[#allocation7 + $0x2b8] sm:$0xff]
    %v1132 = vld [vmem:[#allocation7 + $0x2c0] sm:$0xff]
    %v1133 = vld [vmem:[#allocation7 + $0x2c8] sm:$0xff]
    %v1134 = vld [vmem:[#allocation7 + $0x2d0] sm:$0xff]
    %v1135 = vld [vmem:[#allocation7 + $0x2d8] sm:$0xff]
    %v1136 = vld [vmem:[#allocation7 + $0x2e0] sm:$0xff]
    %v1137 = vld [vmem:[#allocation7 + $0x2e8] sm:$0xff]
    %v1138 = vld [vmem:[#allocation7 + $0x2f0] sm:$0xff]
    %v1139 = vld [vmem:[#allocation7 + $0x2f8] sm:$0xff]
    %v1140 = vld [vmem:[#allocation7 + $0x300] sm:$0xff]
    %v1141 = vld [vmem:[#allocation7 + $0x308] sm:$0xff]
    %v1142 = vld [vmem:[#allocation7 + $0x310] sm:$0xff]
    %v1143 = vld [vmem:[#allocation7 + $0x318] sm:$0xff]
    %v1144 = vld [vmem:[#allocation7 + $0x320] sm:$0xff]
    %v1145 = vld [vmem:[#allocation7 + $0x328] sm:$0xff]
    %v1146 = vld [vmem:[#allocation7 + $0x330] sm:$0xff]
    %v1147 = vld [vmem:[#allocation7 + $0x338] sm:$0xff]
    %v1148 = vld [vmem:[#allocation7 + $0x340] sm:$0xff]
    %v1149 = vld [vmem:[#allocation7 + $0x348] sm:$0xff]
    %v1150 = vld [vmem:[#allocation7 + $0x350] sm:$0xff]
    %v1151 = vld [vmem:[#allocation7 + $0x358] sm:$0xff]
    %v1152 = vld [vmem:[#allocation7 + $0x360] sm:$0xff]
    %v1153 = vld [vmem:[#allocation7 + $0x368] sm:$0xff]
    %v1154 = vld [vmem:[#allocation7 + $0x370] sm:$0xff]
    %v1155 = vld [vmem:[#allocation7 + $0x378] sm:$0xff]
    %v1156 = vld [vmem:[#allocation7 + $0x380] sm:$0xff]
    %v1157 = vld [vmem:[#allocation7 + $0x388] sm:$0xff]
    %v1158 = vld [vmem:[#allocation7 + $0x390] sm:$0xff]
    %v1159 = vld [vmem:[#allocation7 + $0x398] sm:$0xff]
    %v1160 = vld [vmem:[#allocation7 + $0x3a0] sm:$0xff]
    %v1161 = vld [vmem:[#allocation7 + $0x3a8] sm:$0xff]
    %v1162 = vld [vmem:[#allocation7 + $0x3b0] sm:$0xff]
    %v1163 = vld [vmem:[#allocation7 + $0x3b8] sm:$0xff]
    %v1164 = vld [vmem:[#allocation7 + $0x3c0] sm:$0xff]
    %v1165 = vld [vmem:[#allocation7 + $0x3c8] sm:$0xff]
    %v1166 = vld [vmem:[#allocation7 + $0x3d0] sm:$0xff]
    %v1167 = vld [vmem:[#allocation7 + $0x3d8] sm:$0xff]
    %v1168 = vld [vmem:[#allocation7 + $0x3e0] sm:$0xff]
    %v1169 = vld [vmem:[#allocation7 + $0x3e8] sm:$0xff]
    %v1170 = vld [vmem:[#allocation7 + $0x3f0] sm:$0xff]
    %v1171 = vld [vmem:[#allocation7 + $0x3f8] sm:$0xff]
    %v1300 = vunpack.c.l.b16 %v1044
    %v1301 = vunpack.c.h.b16 %v1044
    %v1302 = vunpack.c.l.b16 %v1045
    %v1303 = vunpack.c.h.b16 %v1045
    %v1304 = vunpack.c.l.b16 %v1046
    %v1305 = vunpack.c.h.b16 %v1046
    %v1306 = vunpack.c.l.b16 %v1047
    %v1307 = vunpack.c.h.b16 %v1047
    %v1308 = vunpack.c.l.b16 %v1048
    %v1309 = vunpack.c.h.b16 %v1048
    %v1310 = vunpack.c.l.b16 %v1049
    %v1311 = vunpack.c.h.b16 %v1049
    %v1312 = vunpack.c.l.b16 %v1050
    %v1313 = vunpack.c.h.b16 %v1050
    %v1314 = vunpack.c.l.b16 %v1051
    %v1315 = vunpack.c.h.b16 %v1051
    %v1316 = vunpack.c.l.b16 %v1052
    %v1317 = vunpack.c.h.b16 %v1052
    %v1318 = vunpack.c.l.b16 %v1053
    %v1319 = vunpack.c.h.b16 %v1053
    %v1320 = vunpack.c.l.b16 %v1054
    %v1321 = vunpack.c.h.b16 %v1054
    %v1322 = vunpack.c.l.b16 %v1055
    %v1323 = vunpack.c.h.b16 %v1055
    %v1324 = vunpack.c.l.b16 %v1056
    %v1325 = vunpack.c.h.b16 %v1056
    %v1326 = vunpack.c.l.b16 %v1057
    %v1327 = vunpack.c.h.b16 %v1057
    %v1328 = vunpack.c.l.b16 %v1058
    %v1329 = vunpack.c.h.b16 %v1058
    %v1330 = vunpack.c.l.b16 %v1059
    %v1331 = vunpack.c.h.b16 %v1059
    %v1332 = vunpack.c.l.b16 %v1060
    %v1333 = vunpack.c.h.b16 %v1060
    %v1334 = vunpack.c.l.b16 %v1061
    %v1335 = vunpack.c.h.b16 %v1061
    %v1336 = vunpack.c.l.b16 %v1062
    %v1337 = vunpack.c.h.b16 %v1062
    %v1338 = vunpack.c.l.b16 %v1063
    %v1339 = vunpack.c.h.b16 %v1063
    %v1340 = vunpack.c.l.b16 %v1064
    %v1341 = vunpack.c.h.b16 %v1064
    %v1342 = vunpack.c.l.b16 %v1065
    %v1343 = vunpack.c.h.b16 %v1065
    %v1344 = vunpack.c.l.b16 %v1066
    %v1345 = vunpack.c.h.b16 %v1066
    %v1346 = vunpack.c.l.b16 %v1067
    %v1347 = vunpack.c.h.b16 %v1067
    %v1348 = vunpack.c.l.b16 %v1068
    %v1349 = vunpack.c.h.b16 %v1068
    %v1350 = vunpack.c.l.b16 %v1069
    %v1351 = vunpack.c.h.b16 %v1069
    %v1352 = vunpack.c.l.b16 %v1070
    %v1353 = vunpack.c.h.b16 %v1070
    %v1354 = vunpack.c.l.b16 %v1071
    %v1355 = vunpack.c.h.b16 %v1071
    %v1356 = vunpack.c.l.b16 %v1072
    %v1357 = vunpack.c.h.b16 %v1072
    %v1358 = vunpack.c.l.b16 %v1073
    %v1359 = vunpack.c.h.b16 %v1073
    %v1360 = vunpack.c.l.b16 %v1074
    %v1361 = vunpack.c.h.b16 %v1074
    %v1362 = vunpack.c.l.b16 %v1075
    %v1363 = vunpack.c.h.b16 %v1075
    %v1364 = vunpack.c.l.b16 %v1076
    %v1365 = vunpack.c.h.b16 %v1076
    %v1366 = vunpack.c.l.b16 %v1077
    %v1367 = vunpack.c.h.b16 %v1077
    %v1368 = vunpack.c.l.b16 %v1078
    %v1369 = vunpack.c.h.b16 %v1078
    %v1370 = vunpack.c.l.b16 %v1079
    %v1371 = vunpack.c.h.b16 %v1079
    %v1372 = vunpack.c.l.b16 %v1080
    %v1373 = vunpack.c.h.b16 %v1080
    %v1374 = vunpack.c.l.b16 %v1081
    %v1375 = vunpack.c.h.b16 %v1081
    %v1376 = vunpack.c.l.b16 %v1082
    %v1377 = vunpack.c.h.b16 %v1082
    %v1378 = vunpack.c.l.b16 %v1083
    %v1379 = vunpack.c.h.b16 %v1083
    %v1380 = vunpack.c.l.b16 %v1084
    %v1381 = vunpack.c.h.b16 %v1084
    %v1382 = vunpack.c.l.b16 %v1085
    %v1383 = vunpack.c.h.b16 %v1085
    %v1384 = vunpack.c.l.b16 %v1086
    %v1385 = vunpack.c.h.b16 %v1086
    %v1386 = vunpack.c.l.b16 %v1087
    %v1387 = vunpack.c.h.b16 %v1087
    %v1388 = vunpack.c.l.b16 %v1088
    %v1389 = vunpack.c.h.b16 %v1088
    %v1390 = vunpack.c.l.b16 %v1089
    %v1391 = vunpack.c.h.b16 %v1089
    %v1392 = vunpack.c.l.b16 %v1090
    %v1393 = vunpack.c.h.b16 %v1090
    %v1394 = vunpack.c.l.b16 %v1091
    %v1395 = vunpack.c.h.b16 %v1091
    %v1396 = vunpack.c.l.b16 %v1092
    %v1397 = vunpack.c.h.b16 %v1092
    %v1398 = vunpack.c.l.b16 %v1093
    %v1399 = vunpack.c.h.b16 %v1093
    %v1400 = vunpack.c.l.b16 %v1094
    %v1401 = vunpack.c.h.b16 %v1094
    %v1402 = vunpack.c.l.b16 %v1095
    %v1403 = vunpack.c.h.b16 %v1095
    %v1404 = vunpack.c.l.b16 %v1096
    %v1405 = vunpack.c.h.b16 %v1096
    %v1406 = vunpack.c.l.b16 %v1097
    %v1407 = vunpack.c.h.b16 %v1097
    %v1408 = vunpack.c.l.b16 %v1098
    %v1409 = vunpack.c.h.b16 %v1098
    %v1410 = vunpack.c.l.b16 %v1099
    %v1411 = vunpack.c.h.b16 %v1099
    %v1412 = vunpack.c.l.b16 %v1100
    %v1413 = vunpack.c.h.b16 %v1100
    %v1414 = vunpack.c.l.b16 %v1101
    %v1415 = vunpack.c.h.b16 %v1101
    %v1416 = vunpack.c.l.b16 %v1102
    %v1417 = vunpack.c.h.b16 %v1102
    %v1418 = vunpack.c.l.b16 %v1103
    %v1419 = vunpack.c.h.b16 %v1103
    %v1420 = vunpack.c.l.b16 %v1104
    %v1421 = vunpack.c.h.b16 %v1104
    %v1422 = vunpack.c.l.b16 %v1105
    %v1423 = vunpack.c.h.b16 %v1105
    %v1424 = vunpack.c.l.b16 %v1106
    %v1425 = vunpack.c.h.b16 %v1106
    %v1426 = vunpack.c.l.b16 %v1107
    %v1427 = vunpack.c.h.b16 %v1107
    %v1428 = vunpack.c.l.b16 %v1108
    %v1429 = vunpack.c.h.b16 %v1108
    %v1430 = vunpack.c.l.b16 %v1109
    %v1431 = vunpack.c.h.b16 %v1109
    %v1432 = vunpack.c.l.b16 %v1110
    %v1433 = vunpack.c.h.b16 %v1110
    %v1434 = vunpack.c.l.b16 %v1111
    %v1435 = vunpack.c.h.b16 %v1111
    %v1436 = vunpack.c.l.b16 %v1112
    %v1437 = vunpack.c.h.b16 %v1112
    %v1438 = vunpack.c.l.b16 %v1113
    %v1439 = vunpack.c.h.b16 %v1113
    %v1440 = vunpack.c.l.b16 %v1114
    %v1441 = vunpack.c.h.b16 %v1114
    %v1442 = vunpack.c.l.b16 %v1115
    %v1443 = vunpack.c.h.b16 %v1115
    %v1444 = vunpack.c.l.b16 %v1116
    %v1445 = vunpack.c.h.b16 %v1116
    %v1446 = vunpack.c.l.b16 %v1117
    %v1447 = vunpack.c.h.b16 %v1117
    %v1448 = vunpack.c.l.b16 %v1118
    %v1449 = vunpack.c.h.b16 %v1118
    %v1450 = vunpack.c.l.b16 %v1119
    %v1451 = vunpack.c.h.b16 %v1119
    %v1452 = vunpack.c.l.b16 %v1120
    %v1453 = vunpack.c.h.b16 %v1120
    %v1454 = vunpack.c.l.b16 %v1121
    %v1455 = vunpack.c.h.b16 %v1121
    %v1456 = vunpack.c.l.b16 %v1122
    %v1457 = vunpack.c.h.b16 %v1122
    %v1458 = vunpack.c.l.b16 %v1123
    %v1459 = vunpack.c.h.b16 %v1123
    %v1460 = vunpack.c.l.b16 %v1124
    %v1461 = vunpack.c.h.b16 %v1124
    %v1462 = vunpack.c.l.b16 %v1125
    %v1463 = vunpack.c.h.b16 %v1125
    %v1464 = vunpack.c.l.b16 %v1126
    %v1465 = vunpack.c.h.b16 %v1126
    %v1466 = vunpack.c.l.b16 %v1127
    %v1467 = vunpack.c.h.b16 %v1127
    %v1468 = vunpack.c.l.b16 %v1128
    %v1469 = vunpack.c.h.b16 %v1128
    %v1470 = vunpack.c.l.b16 %v1129
    %v1471 = vunpack.c.h.b16 %v1129
    %v1472 = vunpack.c.l.b16 %v1130
    %v1473 = vunpack.c.h.b16 %v1130
    %v1474 = vunpack.c.l.b16 %v1131
    %v1475 = vunpack.c.h.b16 %v1131
    %v1476 = vunpack.c.l.b16 %v1132
    %v1477 = vunpack.c.h.b16 %v1132
    %v1478 = vunpack.c.l.b16 %v1133
    %v1479 = vunpack.c.h.b16 %v1133
    %v1480 = vunpack.c.l.b16 %v1134
    %v1481 = vunpack.c.h.b16 %v1134
    %v1482 = vunpack.c.l.b16 %v1135
    %v1483 = vunpack.c.h.b16 %v1135
    %v1484 = vunpack.c.l.b16 %v1136
    %v1485 = vunpack.c.h.b16 %v1136
    %v1486 = vunpack.c.l.b16 %v1137
    %v1487 = vunpack.c.h.b16 %v1137
    %v1488 = vunpack.c.l.b16 %v1138
    %v1489 = vunpack.c.h.b16 %v1138
    %v1490 = vunpack.c.l.b16 %v1139
    %v1491 = vunpack.c.h.b16 %v1139
    %v1492 = vunpack.c.l.b16 %v1140
    %v1493 = vunpack.c.h.b16 %v1140
    %v1494 = vunpack.c.l.b16 %v1141
    %v1495 = vunpack.c.h.b16 %v1141
    %v1496 = vunpack.c.l.b16 %v1142
    %v1497 = vunpack.c.h.b16 %v1142
    %v1498 = vunpack.c.l.b16 %v1143
    %v1499 = vunpack.c.h.b16 %v1143
    %v1500 = vunpack.c.l.b16 %v1144
    %v1501 = vunpack.c.h.b16 %v1144
    %v1502 = vunpack.c.l.b16 %v1145
    %v1503 = vunpack.c.h.b16 %v1145
    %v1504 = vunpack.c.l.b16 %v1146
    %v1505 = vunpack.c.h.b16 %v1146
    %v1506 = vunpack.c.l.b16 %v1147
    %v1507 = vunpack.c.h.b16 %v1147
    %v1508 = vunpack.c.l.b16 %v1148
    %v1509 = vunpack.c.h.b16 %v1148
    %v1510 = vunpack.c.l.b16 %v1149
    %v1511 = vunpack.c.h.b16 %v1149
    %v1512 = vunpack.c.l.b16 %v1150
    %v1513 = vunpack.c.h.b16 %v1150
    %v1514 = vunpack.c.l.b16 %v1151
    %v1515 = vunpack.c.h.b16 %v1151
    %v1516 = vunpack.c.l.b16 %v1152
    %v1517 = vunpack.c.h.b16 %v1152
    %v1518 = vunpack.c.l.b16 %v1153
    %v1519 = vunpack.c.h.b16 %v1153
    %v1520 = vunpack.c.l.b16 %v1154
    %v1521 = vunpack.c.h.b16 %v1154
    %v1522 = vunpack.c.l.b16 %v1155
    %v1523 = vunpack.c.h.b16 %v1155
    %v1524 = vunpack.c.l.b16 %v1156
    %v1525 = vunpack.c.h.b16 %v1156
    %v1526 = vunpack.c.l.b16 %v1157
    %v1527 = vunpack.c.h.b16 %v1157
    %v1528 = vunpack.c.l.b16 %v1158
    %v1529 = vunpack.c.h.b16 %v1158
    %v1530 = vunpack.c.l.b16 %v1159
    %v1531 = vunpack.c.h.b16 %v1159
    %v1532 = vunpack.c.l.b16 %v1160
    %v1533 = vunpack.c.h.b16 %v1160
    %v1534 = vunpack.c.l.b16 %v1161
    %v1535 = vunpack.c.h.b16 %v1161
    %v1536 = vunpack.c.l.b16 %v1162
    %v1537 = vunpack.c.h.b16 %v1162
    %v1538 = vunpack.c.l.b16 %v1163
    %v1539 = vunpack.c.h.b16 %v1163
    %v1540 = vunpack.c.l.b16 %v1164
    %v1541 = vunpack.c.h.b16 %v1164
    %v1542 = vunpack.c.l.b16 %v1165
    %v1543 = vunpack.c.h.b16 %v1165
    %v1544 = vunpack.c.l.b16 %v1166
    %v1545 = vunpack.c.h.b16 %v1166
    %v1546 = vunpack.c.l.b16 %v1167
    %v1547 = vunpack.c.h.b16 %v1167
    %v1548 = vunpack.c.l.b16 %v1168
    %v1549 = vunpack.c.h.b16 %v1168
    %v1550 = vunpack.c.l.b16 %v1169
    %v1551 = vunpack.c.h.b16 %v1169
    %v1552 = vunpack.c.l.b16 %v1170
    %v1553 = vunpack.c.h.b16 %v1170
    %v1554 = vunpack.c.l.b16 %v1171
    %v1555 = vunpack.c.h.b16 %v1171
    %v1556 = vpack.c.b16 %v1316, %v1300
    %v1557 = vpack.c.b16 %v1317, %v1301
    %v1558 = vpack.c.b16 %v1318, %v1302
    %v1559 = vpack.c.b16 %v1319, %v1303
    %v1560 = vpack.c.b16 %v1320, %v1304
    %v1561 = vpack.c.b16 %v1321, %v1305
    %v1562 = vpack.c.b16 %v1322, %v1306
    %v1563 = vpack.c.b16 %v1323, %v1307
    %v1564 = vpack.c.b16 %v1324, %v1308
    %v1565 = vpack.c.b16 %v1325, %v1309
    %v1566 = vpack.c.b16 %v1326, %v1310
    %v1567 = vpack.c.b16 %v1327, %v1311
    %v1568 = vpack.c.b16 %v1328, %v1312
    %v1569 = vpack.c.b16 %v1329, %v1313
    %v1570 = vpack.c.b16 %v1330, %v1314
    %v1571 = vpack.c.b16 %v1331, %v1315
    %v1572 = vpack.c.b16 %v1348, %v1332
    %v1573 = vpack.c.b16 %v1349, %v1333
    %v1574 = vpack.c.b16 %v1350, %v1334
    %v1575 = vpack.c.b16 %v1351, %v1335
    %v1576 = vpack.c.b16 %v1352, %v1336
    %v1577 = vpack.c.b16 %v1353, %v1337
    %v1578 = vpack.c.b16 %v1354, %v1338
    %v1579 = vpack.c.b16 %v1355, %v1339
    %v1580 = vpack.c.b16 %v1356, %v1340
    %v1581 = vpack.c.b16 %v1357, %v1341
    %v1582 = vpack.c.b16 %v1358, %v1342
    %v1583 = vpack.c.b16 %v1359, %v1343
    %v1584 = vpack.c.b16 %v1360, %v1344
    %v1585 = vpack.c.b16 %v1361, %v1345
    %v1586 = vpack.c.b16 %v1362, %v1346
    %v1587 = vpack.c.b16 %v1363, %v1347
    %v1588 = vpack.c.b16 %v1380, %v1364
    %v1589 = vpack.c.b16 %v1381, %v1365
    %v1590 = vpack.c.b16 %v1382, %v1366
    %v1591 = vpack.c.b16 %v1383, %v1367
    %v1592 = vpack.c.b16 %v1384, %v1368
    %v1593 = vpack.c.b16 %v1385, %v1369
    %v1594 = vpack.c.b16 %v1386, %v1370
    %v1595 = vpack.c.b16 %v1387, %v1371
    %v1596 = vpack.c.b16 %v1388, %v1372
    %v1597 = vpack.c.b16 %v1389, %v1373
    %v1598 = vpack.c.b16 %v1390, %v1374
    %v1599 = vpack.c.b16 %v1391, %v1375
    %v1600 = vpack.c.b16 %v1392, %v1376
    %v1601 = vpack.c.b16 %v1393, %v1377
    %v1602 = vpack.c.b16 %v1394, %v1378
    %v1603 = vpack.c.b16 %v1395, %v1379
    %v1604 = vpack.c.b16 %v1412, %v1396
    %v1605 = vpack.c.b16 %v1413, %v1397
    %v1606 = vpack.c.b16 %v1414, %v1398
    %v1607 = vpack.c.b16 %v1415, %v1399
    %v1608 = vpack.c.b16 %v1416, %v1400
    %v1609 = vpack.c.b16 %v1417, %v1401
    %v1610 = vpack.c.b16 %v1418, %v1402
    %v1611 = vpack.c.b16 %v1419, %v1403
    %v1612 = vpack.c.b16 %v1420, %v1404
    %v1613 = vpack.c.b16 %v1421, %v1405
    %v1614 = vpack.c.b16 %v1422, %v1406
    %v1615 = vpack.c.b16 %v1423, %v1407
    %v1616 = vpack.c.b16 %v1424, %v1408
    %v1617 = vpack.c.b16 %v1425, %v1409
    %v1618 = vpack.c.b16 %v1426, %v1410
    %v1619 = vpack.c.b16 %v1427, %v1411
    %v1620 = vpack.c.b16 %v1444, %v1428
    %v1621 = vpack.c.b16 %v1445, %v1429
    %v1622 = vpack.c.b16 %v1446, %v1430
    %v1623 = vpack.c.b16 %v1447, %v1431
    %v1624 = vpack.c.b16 %v1448, %v1432
    %v1625 = vpack.c.b16 %v1449, %v1433
    %v1626 = vpack.c.b16 %v1450, %v1434
    %v1627 = vpack.c.b16 %v1451, %v1435
    %v1628 = vpack.c.b16 %v1452, %v1436
    %v1629 = vpack.c.b16 %v1453, %v1437
    %v1630 = vpack.c.b16 %v1454, %v1438
    %v1631 = vpack.c.b16 %v1455, %v1439
    %v1632 = vpack.c.b16 %v1456, %v1440
    %v1633 = vpack.c.b16 %v1457, %v1441
    %v1634 = vpack.c.b16 %v1458, %v1442
    %v1635 = vpack.c.b16 %v1459, %v1443
    %v1636 = vpack.c.b16 %v1476, %v1460
    %v1637 = vpack.c.b16 %v1477, %v1461
    %v1638 = vpack.c.b16 %v1478, %v1462
    %v1639 = vpack.c.b16 %v1479, %v1463
    %v1640 = vpack.c.b16 %v1480, %v1464
    %v1641 = vpack.c.b16 %v1481, %v1465
    %v1642 = vpack.c.b16 %v1482, %v1466
    %v1643 = vpack.c.b16 %v1483, %v1467
    %v1644 = vpack.c.b16 %v1484, %v1468
    %v1645 = vpack.c.b16 %v1485, %v1469
    %v1646 = vpack.c.b16 %v1486, %v1470
    %v1647 = vpack.c.b16 %v1487, %v1471
    %v1648 = vpack.c.b16 %v1488, %v1472
    %v1649 = vpack.c.b16 %v1489, %v1473
    %v1650 = vpack.c.b16 %v1490, %v1474
    %v1651 = vpack.c.b16 %v1491, %v1475
    %v1652 = vpack.c.b16 %v1508, %v1492
    %v1653 = vpack.c.b16 %v1509, %v1493
    %v1654 = vpack.c.b16 %v1510, %v1494
    %v1655 = vpack.c.b16 %v1511, %v1495
    %v1656 = vpack.c.b16 %v1512, %v1496
    %v1657 = vpack.c.b16 %v1513, %v1497
    %v1658 = vpack.c.b16 %v1514, %v1498
    %v1659 = vpack.c.b16 %v1515, %v1499
    %v1660 = vpack.c.b16 %v1516, %v1500
    %v1661 = vpack.c.b16 %v1517, %v1501
    %v1662 = vpack.c.b16 %v1518, %v1502
    %v1663 = vpack.c.b16 %v1519, %v1503
    %v1664 = vpack.c.b16 %v1520, %v1504
    %v1665 = vpack.c.b16 %v1521, %v1505
    %v1666 = vpack.c.b16 %v1522, %v1506
    %v1667 = vpack.c.b16 %v1523, %v1507
    %v1668 = vpack.c.b16 %v1540, %v1524
    %v1669 = vpack.c.b16 %v1541, %v1525
    %v1670 = vpack.c.b16 %v1542, %v1526
    %v1671 = vpack.c.b16 %v1543, %v1527
    %v1672 = vpack.c.b16 %v1544, %v1528
    %v1673 = vpack.c.b16 %v1545, %v1529
    %v1674 = vpack.c.b16 %v1546, %v1530
    %v1675 = vpack.c.b16 %v1547, %v1531
    %v1676 = vpack.c.b16 %v1548, %v1532
    %v1677 = vpack.c.b16 %v1549, %v1533
    %v1678 = vpack.c.b16 %v1550, %v1534
    %v1679 = vpack.c.b16 %v1551, %v1535
    %v1680 = vpack.c.b16 %v1552, %v1536
    %v1681 = vpack.c.b16 %v1553, %v1537
    %v1682 = vpack.c.b16 %v1554, %v1538
    %v1683 = vpack.c.b16 %v1555, %v1539
    %1812 = vmatprep.subr.bf16.mxu0 %v1557
    %1813 = vmatpush1.bf16.msra.mxu0 %v1556
    %1814 = vmatprep.subr.bf16.mxu0 %v1573
    %1815 = vmatpush1.bf16.msra.mxu0 %v1572
    %1816 = vmatprep.subr.bf16.mxu0 %v1589
    %1817 = vmatpush1.bf16.msra.mxu0 %v1588
    %1818 = vmatprep.subr.bf16.mxu0 %v1605
    %1819 = vmatpush1.bf16.msra.mxu0 %v1604
    %1820 = vmatprep.subr.bf16.mxu0 %v1621
    %1821 = vmatpush1.bf16.msra.mxu0 %v1620
    %1822 = vmatprep.subr.bf16.mxu0 %v1637
    %1823 = vmatpush1.bf16.msra.mxu0 %v1636
    %1824 = vmatprep.subr.bf16.mxu0 %v1653
    %1825 = vmatpush1.bf16.msra.mxu0 %v1652
    %1826 = vmatprep.subr.bf16.mxu0 %v1669
    %1827 = vmatpush1.bf16.msra.mxu0 %v1668
    %1828 = vmatprep.subr.bf16.mxu0 0
    %1829 = vmatpush1.bf16.msra.mxu0 0
    %1830 = vmatprep.subr.bf16.mxu0 0
    %1831 = vmatpush1.bf16.msra.mxu0 0
    %1832 = vmatprep.subr.bf16.mxu0 0
    %1833 = vmatpush1.bf16.msra.mxu0 0
    %1834 = vmatprep.subr.bf16.mxu0 0
    %1835 = vmatpush1.bf16.msra.mxu0 0
    %1836 = vmatprep.subr.bf16.mxu0 0
    %1837 = vmatpush1.bf16.msra.mxu0 0
    %1838 = vmatprep.subr.bf16.mxu0 0
    %1839 = vmatpush1.bf16.msra.mxu0 0
    %1840 = vmatprep.subr.bf16.mxu0 0
    %1841 = vmatpush1.bf16.msra.mxu0 0
    %1842 = vmatprep.subr.bf16.mxu0 0
    %1843 = vmatpush1.bf16.msra.mxu0 0
    %1844 = vmatprep.mubr.bf16.mxu0 0
    %1845 = vmatmul.mubr.bf16.gmra.mrb[0].mxu0 %v1043
    %v1846 = vpop.f32.mrb[0].mxu0
    %v1847 = vadd.f32 0.0, %v1846
    %v1848 = vpop.f32.mrb[0].mxu0
    %v1849 = vadd.f32 0.0, %v1848
    %v1850 = vpop.f32.mrb[0].mxu0
    %v1851 = vadd.f32 0.0, %v1850
    %v1852 = vpop.f32.mrb[0].mxu0
    %v1853 = vadd.f32 0.0, %v1852
    %1854 = vdwg.mxu0
    %1855 = vmatprep.subr.bf16.mxu0 %v1559
    %1856 = vmatpush1.bf16.msra.mxu0 %v1558
    %1857 = vmatprep.subr.bf16.mxu0 %v1575
    %1858 = vmatpush1.bf16.msra.mxu0 %v1574
    %1859 = vmatprep.subr.bf16.mxu0 %v1591
    %1860 = vmatpush1.bf16.msra.mxu0 %v1590
    %1861 = vmatprep.subr.bf16.mxu0 %v1607
    %1862 = vmatpush1.bf16.msra.mxu0 %v1606
    %1863 = vmatprep.subr.bf16.mxu0 %v1623
    %1864 = vmatpush1.bf16.msra.mxu0 %v1622
    %1865 = vmatprep.subr.bf16.mxu0 %v1639
    %1866 = vmatpush1.bf16.msra.mxu0 %v1638
    %1867 = vmatprep.subr.bf16.mxu0 %v1655
    %1868 = vmatpush1.bf16.msra.mxu0 %v1654
    %1869 = vmatprep.subr.bf16.mxu0 %v1671
    %1870 = vmatpush1.bf16.msra.mxu0 %v1670
    %1871 = vmatprep.subr.bf16.mxu0 0
    %1872 = vmatpush1.bf16.msra.mxu0 0
    %1873 = vmatprep.subr.bf16.mxu0 0
    %1874 = vmatpush1.bf16.msra.mxu0 0
    %1875 = vmatprep.subr.bf16.mxu0 0
    %1876 = vmatpush1.bf16.msra.mxu0 0
    %1877 = vmatprep.subr.bf16.mxu0 0
    %1878 = vmatpush1.bf16.msra.mxu0 0
    %1879 = vmatprep.subr.bf16.mxu0 0
    %1880 = vmatpush1.bf16.msra.mxu0 0
    %1881 = vmatprep.subr.bf16.mxu0 0
    %1882 = vmatpush1.bf16.msra.mxu0 0
    %1883 = vmatprep.subr.bf16.mxu0 0
    %1884 = vmatpush1.bf16.msra.mxu0 0
    %1885 = vmatprep.subr.bf16.mxu0 0
    %1886 = vmatpush1.bf16.msra.mxu0 0
    %1887 = vmatprep.mubr.bf16.mxu0 0
    %1888 = vmatmul.mubr.bf16.gmra.mrb[0].mxu0 %v1043
    %v1889 = vpop.f32.mrb[0].mxu0
    %v1890 = vadd.f32 0.0, %v1889
    %v1891 = vpop.f32.mrb[0].mxu0
    %v1892 = vadd.f32 0.0, %v1891
    %v1893 = vpop.f32.mrb[0].mxu0
    %v1894 = vadd.f32 0.0, %v1893
    %v1895 = vpop.f32.mrb[0].mxu0
    %v1896 = vadd.f32 0.0, %v1895
    %1897 = vdwg.mxu0
    %1898 = vmatprep.subr.bf16.mxu0 %v1561
    %1899 = vmatpush1.bf16.msra.mxu0 %v1560
    %1900 = vmatprep.subr.bf16.mxu0 %v1577
    %1901 = vmatpush1.bf16.msra.mxu0 %v1576
    %1902 = vmatprep.subr.bf16.mxu0 %v1593
    %1903 = vmatpush1.bf16.msra.mxu0 %v1592
    %1904 = vmatprep.subr.bf16.mxu0 %v1609
    %1905 = vmatpush1.bf16.msra.mxu0 %v1608
    %1906 = vmatprep.subr.bf16.mxu0 %v1625
    %1907 = vmatpush1.bf16.msra.mxu0 %v1624
    %1908 = vmatprep.subr.bf16.mxu0 %v1641
    %1909 = vmatpush1.bf16.msra.mxu0 %v1640
    %1910 = vmatprep.subr.bf16.mxu0 %v1657
    %1911 = vmatpush1.bf16.msra.mxu0 %v1656
    %1912 = vmatprep.subr.bf16.mxu0 %v1673
    %1913 = vmatpush1.bf16.msra.mxu0 %v1672
    %1914 = vmatprep.subr.bf16.mxu0 0
    %1915 = vmatpush1.bf16.msra.mxu0 0
    %1916 = vmatprep.subr.bf16.mxu0 0
    %1917 = vmatpush1.bf16.msra.mxu0 0
    %1918 = vmatprep.subr.bf16.mxu0 0
    %1919 = vmatpush1.bf16.msra.mxu0 0
    %1920 = vmatprep.subr.bf16.mxu0 0
    %1921 = vmatpush1.bf16.msra.mxu0 0
    %1922 = vmatprep.subr.bf16.mxu0 0
    %1923 = vmatpush1.bf16.msra.mxu0 0
    %1924 = vmatprep.subr.bf16.mxu0 0
    %1925 = vmatpush1.bf16.msra.mxu0 0
    %1926 = vmatprep.subr.bf16.mxu0 0
    %1927 = vmatpush1.bf16.msra.mxu0 0
    %1928 = vmatprep.subr.bf16.mxu0 0
    %1929 = vmatpush1.bf16.msra.mxu0 0
    %1930 = vmatprep.mubr.bf16.mxu0 0
    %1931 = vmatmul.mubr.bf16.gmra.mrb[0].mxu0 %v1043
    %v1932 = vpop.f32.mrb[0].mxu0
    %v1933 = vadd.f32 0.0, %v1932
    %v1934 = vpop.f32.mrb[0].mxu0
    %v1935 = vadd.f32 0.0, %v1934
    %v1936 = vpop.f32.mrb[0].mxu0
    %v1937 = vadd.f32 0.0, %v1936
    %v1938 = vpop.f32.mrb[0].mxu0
    %v1939 = vadd.f32 0.0, %v1938
    %1940 = vdwg.mxu0
    %1941 = vmatprep.subr.bf16.mxu0 %v1563
    %1942 = vmatpush1.bf16.msra.mxu0 %v1562
    %1943 = vmatprep.subr.bf16.mxu0 %v1579
    %1944 = vmatpush1.bf16.msra.mxu0 %v1578
    %1945 = vmatprep.subr.bf16.mxu0 %v1595
    %1946 = vmatpush1.bf16.msra.mxu0 %v1594
    %1947 = vmatprep.subr.bf16.mxu0 %v1611
    %1948 = vmatpush1.bf16.msra.mxu0 %v1610
    %1949 = vmatprep.subr.bf16.mxu0 %v1627
    %1950 = vmatpush1.bf16.msra.mxu0 %v1626
    %1951 = vmatprep.subr.bf16.mxu0 %v1643
    %1952 = vmatpush1.bf16.msra.mxu0 %v1642
    %1953 = vmatprep.subr.bf16.mxu0 %v1659
    %1954 = vmatpush1.bf16.msra.mxu0 %v1658
    %1955 = vmatprep.subr.bf16.mxu0 %v1675
    %1956 = vmatpush1.bf16.msra.mxu0 %v1674
    %1957 = vmatprep.subr.bf16.mxu0 0
    %1958 = vmatpush1.bf16.msra.mxu0 0
    %1959 = vmatprep.subr.bf16.mxu0 0
    %1960 = vmatpush1.bf16.msra.mxu0 0
    %1961 = vmatprep.subr.bf16.mxu0 0
    %1962 = vmatpush1.bf16.msra.mxu0 0
    %1963 = vmatprep.subr.bf16.mxu0 0
    %1964 = vmatpush1.bf16.msra.mxu0 0
    %1965 = vmatprep.subr.bf16.mxu0 0
    %1966 = vmatpush1.bf16.msra.mxu0 0
    %1967 = vmatprep.subr.bf16.mxu0 0
    %1968 = vmatpush1.bf16.msra.mxu0 0
    %1969 = vmatprep.subr.bf16.mxu0 0
    %1970 = vmatpush1.bf16.msra.mxu0 0
    %1971 = vmatprep.subr.bf16.mxu0 0
    %1972 = vmatpush1.bf16.msra.mxu0 0
    %1973 = vmatprep.mubr.bf16.mxu0 0
    %1974 = vmatmul.mubr.bf16.gmra.mrb[0].mxu0 %v1043
    %v1975 = vpop.f32.mrb[0].mxu0
    %v1976 = vadd.f32 0.0, %v1975
    %v1977 = vpop.f32.mrb[0].mxu0
    %v1978 = vadd.f32 0.0, %v1977
    %v1979 = vpop.f32.mrb[0].mxu0
    %v1980 = vadd.f32 0.0, %v1979
    %v1981 = vpop.f32.mrb[0].mxu0
    %v1982 = vadd.f32 0.0, %v1981
    %1983 = vdwg.mxu0
    %1984 = vmatprep.subr.bf16.mxu0 %v1565
    %1985 = vmatpush1.bf16.msra.mxu0 %v1564
    %1986 = vmatprep.subr.bf16.mxu0 %v1581
    %1987 = vmatpush1.bf16.msra.mxu0 %v1580
    %1988 = vmatprep.subr.bf16.mxu0 %v1597
    %1989 = vmatpush1.bf16.msra.mxu0 %v1596
    %1990 = vmatprep.subr.bf16.mxu0 %v1613
    %1991 = vmatpush1.bf16.msra.mxu0 %v1612
    %1992 = vmatprep.subr.bf16.mxu0 %v1629
    %1993 = vmatpush1.bf16.msra.mxu0 %v1628
    %1994 = vmatprep.subr.bf16.mxu0 %v1645
    %1995 = vmatpush1.bf16.msra.mxu0 %v1644
    %1996 = vmatprep.subr.bf16.mxu0 %v1661
    %1997 = vmatpush1.bf16.msra.mxu0 %v1660
    %1998 = vmatprep.subr.bf16.mxu0 %v1677
    %1999 = vmatpush1.bf16.msra.mxu0 %v1676
    %2000 = vmatprep.subr.bf16.mxu0 0
    %2001 = vmatpush1.bf16.msra.mxu0 0
    %2002 = vmatprep.subr.bf16.mxu0 0
    %2003 = vmatpush1.bf16.msra.mxu0 0
    %2004 = vmatprep.subr.bf16.mxu0 0
    %2005 = vmatpush1.bf16.msra.mxu0 0
    %2006 = vmatprep.subr.bf16.mxu0 0
    %2007 = vmatpush1.bf16.msra.mxu0 0
    %2008 = vmatprep.subr.bf16.mxu0 0
    %2009 = vmatpush1.bf16.msra.mxu0 0
    %2010 = vmatprep.subr.bf16.mxu0 0
    %2011 = vmatpush1.bf16.msra.mxu0 0
    %2012 = vmatprep.subr.bf16.mxu0 0
    %2013 = vmatpush1.bf16.msra.mxu0 0
    %2014 = vmatprep.subr.bf16.mxu0 0
    %2015 = vmatpush1.bf16.msra.mxu0 0
    %2016 = vmatprep.mubr.bf16.mxu0 0
    %2017 = vmatmul.mubr.bf16.gmra.mrb[0].mxu0 %v1043
    %v2018 = vpop.f32.mrb[0].mxu0
    %v2019 = vadd.f32 0.0, %v2018
    %v2020 = vpop.f32.mrb[0].mxu0
    %v2021 = vadd.f32 0.0, %v2020
    %v2022 = vpop.f32.mrb[0].mxu0
    %v2023 = vadd.f32 0.0, %v2022
    %v2024 = vpop.f32.mrb[0].mxu0
    %v2025 = vadd.f32 0.0, %v2024
    %2026 = vdwg.mxu0
    %2027 = vmatprep.subr.bf16.mxu0 %v1567
    %2028 = vmatpush1.bf16.msra.mxu0 %v1566
    %2029 = vmatprep.subr.bf16.mxu0 %v1583
    %2030 = vmatpush1.bf16.msra.mxu0 %v1582
    %2031 = vmatprep.subr.bf16.mxu0 %v1599
    %2032 = vmatpush1.bf16.msra.mxu0 %v1598
    %2033 = vmatprep.subr.bf16.mxu0 %v1615
    %2034 = vmatpush1.bf16.msra.mxu0 %v1614
    %2035 = vmatprep.subr.bf16.mxu0 %v1631
    %2036 = vmatpush1.bf16.msra.mxu0 %v1630
    %2037 = vmatprep.subr.bf16.mxu0 %v1647
    %2038 = vmatpush1.bf16.msra.mxu0 %v1646
    %2039 = vmatprep.subr.bf16.mxu0 %v1663
    %2040 = vmatpush1.bf16.msra.mxu0 %v1662
    %2041 = vmatprep.subr.bf16.mxu0 %v1679
    %2042 = vmatpush1.bf16.msra.mxu0 %v1678
    %2043 = vmatprep.subr.bf16.mxu0 0
    %2044 = vmatpush1.bf16.msra.mxu0 0
    %2045 = vmatprep.subr.bf16.mxu0 0
    %2046 = vmatpush1.bf16.msra.mxu0 0
    %2047 = vmatprep.subr.bf16.mxu0 0
    %2048 = vmatpush1.bf16.msra.mxu0 0
    %2049 = vmatprep.subr.bf16.mxu0 0
    %2050 = vmatpush1.bf16.msra.mxu0 0
    %2051 = vmatprep.subr.bf16.mxu0 0
    %2052 = vmatpush1.bf16.msra.mxu0 0
    %2053 = vmatprep.subr.bf16.mxu0 0
    %2054 = vmatpush1.bf16.msra.mxu0 0
    %2055 = vmatprep.subr.bf16.mxu0 0
    %2056 = vmatpush1.bf16.msra.mxu0 0
    %2057 = vmatprep.subr.bf16.mxu0 0
    %2058 = vmatpush1.bf16.msra.mxu0 0
    %2059 = vmatprep.mubr.bf16.mxu0 0
    %2060 = vmatmul.mubr.bf16.gmra.mrb[0].mxu0 %v1043
    %v2061 = vpop.f32.mrb[0].mxu0
    %v2062 = vadd.f32 0.0, %v2061
    %v2063 = vpop.f32.mrb[0].mxu0
    %v2064 = vadd.f32 0.0, %v2063
    %v2065 = vpop.f32.mrb[0].mxu0
    %v2066 = vadd.f32 0.0, %v2065
    %v2067 = vpop.f32.mrb[0].mxu0
    %v2068 = vadd.f32 0.0, %v2067
    %2069 = vdwg.mxu0
    %2070 = vmatprep.subr.bf16.mxu0 %v1569
    %2071 = vmatpush1.bf16.msra.mxu0 %v1568
    %2072 = vmatprep.subr.bf16.mxu0 %v1585
    %2073 = vmatpush1.bf16.msra.mxu0 %v1584
    %2074 = vmatprep.subr.bf16.mxu0 %v1601
    %2075 = vmatpush1.bf16.msra.mxu0 %v1600
    %2076 = vmatprep.subr.bf16.mxu0 %v1617
    %2077 = vmatpush1.bf16.msra.mxu0 %v1616
    %2078 = vmatprep.subr.bf16.mxu0 %v1633
    %2079 = vmatpush1.bf16.msra.mxu0 %v1632
    %2080 = vmatprep.subr.bf16.mxu0 %v1649
    %2081 = vmatpush1.bf16.msra.mxu0 %v1648
    %2082 = vmatprep.subr.bf16.mxu0 %v1665
    %2083 = vmatpush1.bf16.msra.mxu0 %v1664
    %2084 = vmatprep.subr.bf16.mxu0 %v1681
    %2085 = vmatpush1.bf16.msra.mxu0 %v1680
    %2086 = vmatprep.subr.bf16.mxu0 0
    %2087 = vmatpush1.bf16.msra.mxu0 0
    %2088 = vmatprep.subr.bf16.mxu0 0
    %2089 = vmatpush1.bf16.msra.mxu0 0
    %2090 = vmatprep.subr.bf16.mxu0 0
    %2091 = vmatpush1.bf16.msra.mxu0 0
    %2092 = vmatprep.subr.bf16.mxu0 0
    %2093 = vmatpush1.bf16.msra.mxu0 0
    %2094 = vmatprep.subr.bf16.mxu0 0
    %2095 = vmatpush1.bf16.msra.mxu0 0
    %2096 = vmatprep.subr.bf16.mxu0 0
    %2097 = vmatpush1.bf16.msra.mxu0 0
    %2098 = vmatprep.subr.bf16.mxu0 0
    %2099 = vmatpush1.bf16.msra.mxu0 0
    %2100 = vmatprep.subr.bf16.mxu0 0
    %2101 = vmatpush1.bf16.msra.mxu0 0
    %2102 = vmatprep.mubr.bf16.mxu0 0
    %2103 = vmatmul.mubr.bf16.gmra.mrb[0].mxu0 %v1043
    %v2104 = vpop.f32.mrb[0].mxu0
    %v2105 = vadd.f32 0.0, %v2104
    %v2106 = vpop.f32.mrb[0].mxu0
    %v2107 = vadd.f32 0.0, %v2106
    %v2108 = vpop.f32.mrb[0].mxu0
    %v2109 = vadd.f32 0.0, %v2108
    %v2110 = vpop.f32.mrb[0].mxu0
    %v2111 = vadd.f32 0.0, %v2110
    %2112 = vdwg.mxu0
    %2113 = vmatprep.subr.bf16.mxu0 %v1571
    %2114 = vmatpush1.bf16.msra.mxu0 %v1570
    %2115 = vmatprep.subr.bf16.mxu0 %v1587
    %2116 = vmatpush1.bf16.msra.mxu0 %v1586
    %2117 = vmatprep.subr.bf16.mxu0 %v1603
    %2118 = vmatpush1.bf16.msra.mxu0 %v1602
    %2119 = vmatprep.subr.bf16.mxu0 %v1619
    %2120 = vmatpush1.bf16.msra.mxu0 %v1618
    %2121 = vmatprep.subr.bf16.mxu0 %v1635
    %2122 = vmatpush1.bf16.msra.mxu0 %v1634
    %2123 = vmatprep.subr.bf16.mxu0 %v1651
    %2124 = vmatpush1.bf16.msra.mxu0 %v1650
    %2125 = vmatprep.subr.bf16.mxu0 %v1667
    %2126 = vmatpush1.bf16.msra.mxu0 %v1666
    %2127 = vmatprep.subr.bf16.mxu0 %v1683
    %2128 = vmatpush1.bf16.msra.mxu0 %v1682
    %2129 = vmatprep.subr.bf16.mxu0 0
    %2130 = vmatpush1.bf16.msra.mxu0 0
    %2131 = vmatprep.subr.bf16.mxu0 0
    %2132 = vmatpush1.bf16.msra.mxu0 0
    %2133 = vmatprep.subr.bf16.mxu0 0
    %2134 = vmatpush1.bf16.msra.mxu0 0
    %2135 = vmatprep.subr.bf16.mxu0 0
    %2136 = vmatpush1.bf16.msra.mxu0 0
    %2137 = vmatprep.subr.bf16.mxu0 0
    %2138 = vmatpush1.bf16.msra.mxu0 0
    %2139 = vmatprep.subr.bf16.mxu0 0
    %2140 = vmatpush1.bf16.msra.mxu0 0
    %2141 = vmatprep.subr.bf16.mxu0 0
    %2142 = vmatpush1.bf16.msra.mxu0 0
    %2143 = vmatprep.subr.bf16.mxu0 0
    %2144 = vmatpush1.bf16.msra.mxu0 0
    %2145 = vmatprep.mubr.bf16.mxu0 0
    %2146 = vmatmul.mubr.bf16.gmra.mrb[0].mxu0 %v1043
    %v2147 = vpop.f32.mrb[0].mxu0
    %v2148 = vadd.f32 0.0, %v2147
    %v2149 = vpop.f32.mrb[0].mxu0
    %v2150 = vadd.f32 0.0, %v2149
    %v2151 = vpop.f32.mrb[0].mxu0
    %v2152 = vadd.f32 0.0, %v2151
    %v2153 = vpop.f32.mrb[0].mxu0
    %v2154 = vadd.f32 0.0, %v2153
    %2155 = vdwg.mxu0
    %v2156 = vpack.c.bf16 %v1041, %v1034
    %v2157 = vld [vmem:[#allocation8] sm:$0xff]
    %v2158 = vld [vmem:[#allocation8 + $0x8] sm:$0xff]
    %v2159 = vld [vmem:[#allocation8 + $0x10] sm:$0xff]
    %v2160 = vld [vmem:[#allocation8 + $0x18] sm:$0xff]
    %v2161 = vld [vmem:[#allocation8 + $0x20] sm:$0xff]
    %v2162 = vld [vmem:[#allocation8 + $0x28] sm:$0xff]
    %v2163 = vld [vmem:[#allocation8 + $0x30] sm:$0xff]
    %v2164 = vld [vmem:[#allocation8 + $0x38] sm:$0xff]
    %v2165 = vld [vmem:[#allocation8 + $0x40] sm:$0xff]
    %v2166 = vld [vmem:[#allocation8 + $0x48] sm:$0xff]
    %v2167 = vld [vmem:[#allocation8 + $0x50] sm:$0xff]
    %v2168 = vld [vmem:[#allocation8 + $0x58] sm:$0xff]
    %v2169 = vld [vmem:[#allocation8 + $0x60] sm:$0xff]
    %v2170 = vld [vmem:[#allocation8 + $0x68] sm:$0xff]
    %v2171 = vld [vmem:[#allocation8 + $0x70] sm:$0xff]
    %v2172 = vld [vmem:[#allocation8 + $0x78] sm:$0xff]
    %v2173 = vld [vmem:[#allocation8 + $0x80] sm:$0xff]
    %v2174 = vld [vmem:[#allocation8 + $0x88] sm:$0xff]
    %v2175 = vld [vmem:[#allocation8 + $0x90] sm:$0xff]
    %v2176 = vld [vmem:[#allocation8 + $0x98] sm:$0xff]
    %v2177 = vld [vmem:[#allocation8 + $0xa0] sm:$0xff]
    %v2178 = vld [vmem:[#allocation8 + $0xa8] sm:$0xff]
    %v2179 = vld [vmem:[#allocation8 + $0xb0] sm:$0xff]
    %v2180 = vld [vmem:[#allocation8 + $0xb8] sm:$0xff]
    %v2181 = vld [vmem:[#allocation8 + $0xc0] sm:$0xff]
    %v2182 = vld [vmem:[#allocation8 + $0xc8] sm:$0xff]
    %v2183 = vld [vmem:[#allocation8 + $0xd0] sm:$0xff]
    %v2184 = vld [vmem:[#allocation8 + $0xd8] sm:$0xff]
    %v2185 = vld [vmem:[#allocation8 + $0xe0] sm:$0xff]
    %v2186 = vld [vmem:[#allocation8 + $0xe8] sm:$0xff]
    %v2187 = vld [vmem:[#allocation8 + $0xf0] sm:$0xff]
    %v2188 = vld [vmem:[#allocation8 + $0xf8] sm:$0xff]
    %v2189 = vld [vmem:[#allocation8 + $0x100] sm:$0xff]
    %v2190 = vld [vmem:[#allocation8 + $0x108] sm:$0xff]
    %v2191 = vld [vmem:[#allocation8 + $0x110] sm:$0xff]
    %v2192 = vld [vmem:[#allocation8 + $0x118] sm:$0xff]
    %v2193 = vld [vmem:[#allocation8 + $0x120] sm:$0xff]
    %v2194 = vld [vmem:[#allocation8 + $0x128] sm:$0xff]
    %v2195 = vld [vmem:[#allocation8 + $0x130] sm:$0xff]
    %v2196 = vld [vmem:[#allocation8 + $0x138] sm:$0xff]
    %v2197 = vld [vmem:[#allocation8 + $0x140] sm:$0xff]
    %v2198 = vld [vmem:[#allocation8 + $0x148] sm:$0xff]
    %v2199 = vld [vmem:[#allocation8 + $0x150] sm:$0xff]
    %v2200 = vld [vmem:[#allocation8 + $0x158] sm:$0xff]
    %v2201 = vld [vmem:[#allocation8 + $0x160] sm:$0xff]
    %v2202 = vld [vmem:[#allocation8 + $0x168] sm:$0xff]
    %v2203 = vld [vmem:[#allocation8 + $0x170] sm:$0xff]
    %v2204 = vld [vmem:[#allocation8 + $0x178] sm:$0xff]
    %v2205 = vld [vmem:[#allocation8 + $0x180] sm:$0xff]
    %v2206 = vld [vmem:[#allocation8 + $0x188] sm:$0xff]
    %v2207 = vld [vmem:[#allocation8 + $0x190] sm:$0xff]
    %v2208 = vld [vmem:[#allocation8 + $0x198] sm:$0xff]
    %v2209 = vld [vmem:[#allocation8 + $0x1a0] sm:$0xff]
    %v2210 = vld [vmem:[#allocation8 + $0x1a8] sm:$0xff]
    %v2211 = vld [vmem:[#allocation8 + $0x1b0] sm:$0xff]
    %v2212 = vld [vmem:[#allocation8 + $0x1b8] sm:$0xff]
    %v2213 = vld [vmem:[#allocation8 + $0x1c0] sm:$0xff]
    %v2214 = vld [vmem:[#allocation8 + $0x1c8] sm:$0xff]
    %v2215 = vld [vmem:[#allocation8 + $0x1d0] sm:$0xff]
    %v2216 = vld [vmem:[#allocation8 + $0x1d8] sm:$0xff]
    %v2217 = vld [vmem:[#allocation8 + $0x1e0] sm:$0xff]
    %v2218 = vld [vmem:[#allocation8 + $0x1e8] sm:$0xff]
    %v2219 = vld [vmem:[#allocation8 + $0x1f0] sm:$0xff]
    %v2220 = vld [vmem:[#allocation8 + $0x1f8] sm:$0xff]
    %v2221 = vld [vmem:[#allocation8 + $0x200] sm:$0xff]
    %v2222 = vld [vmem:[#allocation8 + $0x208] sm:$0xff]
    %v2223 = vld [vmem:[#allocation8 + $0x210] sm:$0xff]
    %v2224 = vld [vmem:[#allocation8 + $0x218] sm:$0xff]
    %v2225 = vld [vmem:[#allocation8 + $0x220] sm:$0xff]
    %v2226 = vld [vmem:[#allocation8 + $0x228] sm:$0xff]
    %v2227 = vld [vmem:[#allocation8 + $0x230] sm:$0xff]
    %v2228 = vld [vmem:[#allocation8 + $0x238] sm:$0xff]
    %v2229 = vld [vmem:[#allocation8 + $0x240] sm:$0xff]
    %v2230 = vld [vmem:[#allocation8 + $0x248] sm:$0xff]
    %v2231 = vld [vmem:[#allocation8 + $0x250] sm:$0xff]
    %v2232 = vld [vmem:[#allocation8 + $0x258] sm:$0xff]
    %v2233 = vld [vmem:[#allocation8 + $0x260] sm:$0xff]
    %v2234 = vld [vmem:[#allocation8 + $0x268] sm:$0xff]
    %v2235 = vld [vmem:[#allocation8 + $0x270] sm:$0xff]
    %v2236 = vld [vmem:[#allocation8 + $0x278] sm:$0xff]
    %v2237 = vld [vmem:[#allocation8 + $0x280] sm:$0xff]
    %v2238 = vld [vmem:[#allocation8 + $0x288] sm:$0xff]
    %v2239 = vld [vmem:[#allocation8 + $0x290] sm:$0xff]
    %v2240 = vld [vmem:[#allocation8 + $0x298] sm:$0xff]
    %v2241 = vld [vmem:[#allocation8 + $0x2a0] sm:$0xff]
    %v2242 = vld [vmem:[#allocation8 + $0x2a8] sm:$0xff]
    %v2243 = vld [vmem:[#allocation8 + $0x2b0] sm:$0xff]
    %v2244 = vld [vmem:[#allocation8 + $0x2b8] sm:$0xff]
    %v2245 = vld [vmem:[#allocation8 + $0x2c0] sm:$0xff]
    %v2246 = vld [vmem:[#allocation8 + $0x2c8] sm:$0xff]
    %v2247 = vld [vmem:[#allocation8 + $0x2d0] sm:$0xff]
    %v2248 = vld [vmem:[#allocation8 + $0x2d8] sm:$0xff]
    %v2249 = vld [vmem:[#allocation8 + $0x2e0] sm:$0xff]
    %v2250 = vld [vmem:[#allocation8 + $0x2e8] sm:$0xff]
    %v2251 = vld [vmem:[#allocation8 + $0x2f0] sm:$0xff]
    %v2252 = vld [vmem:[#allocation8 + $0x2f8] sm:$0xff]
    %v2253 = vld [vmem:[#allocation8 + $0x300] sm:$0xff]
    %v2254 = vld [vmem:[#allocation8 + $0x308] sm:$0xff]
    %v2255 = vld [vmem:[#allocation8 + $0x310] sm:$0xff]
    %v2256 = vld [vmem:[#allocation8 + $0x318] sm:$0xff]
    %v2257 = vld [vmem:[#allocation8 + $0x320] sm:$0xff]
    %v2258 = vld [vmem:[#allocation8 + $0x328] sm:$0xff]
    %v2259 = vld [vmem:[#allocation8 + $0x330] sm:$0xff]
    %v2260 = vld [vmem:[#allocation8 + $0x338] sm:$0xff]
    %v2261 = vld [vmem:[#allocation8 + $0x340] sm:$0xff]
    %v2262 = vld [vmem:[#allocation8 + $0x348] sm:$0xff]
    %v2263 = vld [vmem:[#allocation8 + $0x350] sm:$0xff]
    %v2264 = vld [vmem:[#allocation8 + $0x358] sm:$0xff]
    %v2265 = vld [vmem:[#allocation8 + $0x360] sm:$0xff]
    %v2266 = vld [vmem:[#allocation8 + $0x368] sm:$0xff]
    %v2267 = vld [vmem:[#allocation8 + $0x370] sm:$0xff]
    %v2268 = vld [vmem:[#allocation8 + $0x378] sm:$0xff]
    %v2269 = vld [vmem:[#allocation8 + $0x380] sm:$0xff]
    %v2270 = vld [vmem:[#allocation8 + $0x388] sm:$0xff]
    %v2271 = vld [vmem:[#allocation8 + $0x390] sm:$0xff]
    %v2272 = vld [vmem:[#allocation8 + $0x398] sm:$0xff]
    %v2273 = vld [vmem:[#allocation8 + $0x3a0] sm:$0xff]
    %v2274 = vld [vmem:[#allocation8 + $0x3a8] sm:$0xff]
    %v2275 = vld [vmem:[#allocation8 + $0x3b0] sm:$0xff]
    %v2276 = vld [vmem:[#allocation8 + $0x3b8] sm:$0xff]
    %v2277 = vld [vmem:[#allocation8 + $0x3c0] sm:$0xff]
    %v2278 = vld [vmem:[#allocation8 + $0x3c8] sm:$0xff]
    %v2279 = vld [vmem:[#allocation8 + $0x3d0] sm:$0xff]
    %v2280 = vld [vmem:[#allocation8 + $0x3d8] sm:$0xff]
    %v2281 = vld [vmem:[#allocation8 + $0x3e0] sm:$0xff]
    %v2282 = vld [vmem:[#allocation8 + $0x3e8] sm:$0xff]
    %v2283 = vld [vmem:[#allocation8 + $0x3f0] sm:$0xff]
    %v2284 = vld [vmem:[#allocation8 + $0x3f8] sm:$0xff]
    %v2413 = vunpack.c.l.b16 %v2157
    %v2414 = vunpack.c.h.b16 %v2157
    %v2415 = vunpack.c.l.b16 %v2158
    %v2416 = vunpack.c.h.b16 %v2158
    %v2417 = vunpack.c.l.b16 %v2159
    %v2418 = vunpack.c.h.b16 %v2159
    %v2419 = vunpack.c.l.b16 %v2160
    %v2420 = vunpack.c.h.b16 %v2160
    %v2421 = vunpack.c.l.b16 %v2161
    %v2422 = vunpack.c.h.b16 %v2161
    %v2423 = vunpack.c.l.b16 %v2162
    %v2424 = vunpack.c.h.b16 %v2162
    %v2425 = vunpack.c.l.b16 %v2163
    %v2426 = vunpack.c.h.b16 %v2163
    %v2427 = vunpack.c.l.b16 %v2164
    %v2428 = vunpack.c.h.b16 %v2164
    %v2429 = vunpack.c.l.b16 %v2165
    %v2430 = vunpack.c.h.b16 %v2165
    %v2431 = vunpack.c.l.b16 %v2166
    %v2432 = vunpack.c.h.b16 %v2166
    %v2433 = vunpack.c.l.b16 %v2167
    %v2434 = vunpack.c.h.b16 %v2167
    %v2435 = vunpack.c.l.b16 %v2168
    %v2436 = vunpack.c.h.b16 %v2168
    %v2437 = vunpack.c.l.b16 %v2169
    %v2438 = vunpack.c.h.b16 %v2169
    %v2439 = vunpack.c.l.b16 %v2170
    %v2440 = vunpack.c.h.b16 %v2170
    %v2441 = vunpack.c.l.b16 %v2171
    %v2442 = vunpack.c.h.b16 %v2171
    %v2443 = vunpack.c.l.b16 %v2172
    %v2444 = vunpack.c.h.b16 %v2172
    %v2445 = vunpack.c.l.b16 %v2173
    %v2446 = vunpack.c.h.b16 %v2173
    %v2447 = vunpack.c.l.b16 %v2174
    %v2448 = vunpack.c.h.b16 %v2174
    %v2449 = vunpack.c.l.b16 %v2175
    %v2450 = vunpack.c.h.b16 %v2175
    %v2451 = vunpack.c.l.b16 %v2176
    %v2452 = vunpack.c.h.b16 %v2176
    %v2453 = vunpack.c.l.b16 %v2177
    %v2454 = vunpack.c.h.b16 %v2177
    %v2455 = vunpack.c.l.b16 %v2178
    %v2456 = vunpack.c.h.b16 %v2178
    %v2457 = vunpack.c.l.b16 %v2179
    %v2458 = vunpack.c.h.b16 %v2179
    %v2459 = vunpack.c.l.b16 %v2180
    %v2460 = vunpack.c.h.b16 %v2180
    %v2461 = vunpack.c.l.b16 %v2181
    %v2462 = vunpack.c.h.b16 %v2181
    %v2463 = vunpack.c.l.b16 %v2182
    %v2464 = vunpack.c.h.b16 %v2182
    %v2465 = vunpack.c.l.b16 %v2183
    %v2466 = vunpack.c.h.b16 %v2183
    %v2467 = vunpack.c.l.b16 %v2184
    %v2468 = vunpack.c.h.b16 %v2184
    %v2469 = vunpack.c.l.b16 %v2185
    %v2470 = vunpack.c.h.b16 %v2185
    %v2471 = vunpack.c.l.b16 %v2186
    %v2472 = vunpack.c.h.b16 %v2186
    %v2473 = vunpack.c.l.b16 %v2187
    %v2474 = vunpack.c.h.b16 %v2187
    %v2475 = vunpack.c.l.b16 %v2188
    %v2476 = vunpack.c.h.b16 %v2188
    %v2477 = vunpack.c.l.b16 %v2189
    %v2478 = vunpack.c.h.b16 %v2189
    %v2479 = vunpack.c.l.b16 %v2190
    %v2480 = vunpack.c.h.b16 %v2190
    %v2481 = vunpack.c.l.b16 %v2191
    %v2482 = vunpack.c.h.b16 %v2191
    %v2483 = vunpack.c.l.b16 %v2192
    %v2484 = vunpack.c.h.b16 %v2192
    %v2485 = vunpack.c.l.b16 %v2193
    %v2486 = vunpack.c.h.b16 %v2193
    %v2487 = vunpack.c.l.b16 %v2194
    %v2488 = vunpack.c.h.b16 %v2194
    %v2489 = vunpack.c.l.b16 %v2195
    %v2490 = vunpack.c.h.b16 %v2195
    %v2491 = vunpack.c.l.b16 %v2196
    %v2492 = vunpack.c.h.b16 %v2196
    %v2493 = vunpack.c.l.b16 %v2197
    %v2494 = vunpack.c.h.b16 %v2197
    %v2495 = vunpack.c.l.b16 %v2198
    %v2496 = vunpack.c.h.b16 %v2198
    %v2497 = vunpack.c.l.b16 %v2199
    %v2498 = vunpack.c.h.b16 %v2199
    %v2499 = vunpack.c.l.b16 %v2200
    %v2500 = vunpack.c.h.b16 %v2200
    %v2501 = vunpack.c.l.b16 %v2201
    %v2502 = vunpack.c.h.b16 %v2201
    %v2503 = vunpack.c.l.b16 %v2202
    %v2504 = vunpack.c.h.b16 %v2202
    %v2505 = vunpack.c.l.b16 %v2203
    %v2506 = vunpack.c.h.b16 %v2203
    %v2507 = vunpack.c.l.b16 %v2204
    %v2508 = vunpack.c.h.b16 %v2204
    %v2509 = vunpack.c.l.b16 %v2205
    %v2510 = vunpack.c.h.b16 %v2205
    %v2511 = vunpack.c.l.b16 %v2206
    %v2512 = vunpack.c.h.b16 %v2206
    %v2513 = vunpack.c.l.b16 %v2207
    %v2514 = vunpack.c.h.b16 %v2207
    %v2515 = vunpack.c.l.b16 %v2208
    %v2516 = vunpack.c.h.b16 %v2208
    %v2517 = vunpack.c.l.b16 %v2209
    %v2518 = vunpack.c.h.b16 %v2209
    %v2519 = vunpack.c.l.b16 %v2210
    %v2520 = vunpack.c.h.b16 %v2210
    %v2521 = vunpack.c.l.b16 %v2211
    %v2522 = vunpack.c.h.b16 %v2211
    %v2523 = vunpack.c.l.b16 %v2212
    %v2524 = vunpack.c.h.b16 %v2212
    %v2525 = vunpack.c.l.b16 %v2213
    %v2526 = vunpack.c.h.b16 %v2213
    %v2527 = vunpack.c.l.b16 %v2214
    %v2528 = vunpack.c.h.b16 %v2214
    %v2529 = vunpack.c.l.b16 %v2215
    %v2530 = vunpack.c.h.b16 %v2215
    %v2531 = vunpack.c.l.b16 %v2216
    %v2532 = vunpack.c.h.b16 %v2216
    %v2533 = vunpack.c.l.b16 %v2217
    %v2534 = vunpack.c.h.b16 %v2217
    %v2535 = vunpack.c.l.b16 %v2218
    %v2536 = vunpack.c.h.b16 %v2218
    %v2537 = vunpack.c.l.b16 %v2219
    %v2538 = vunpack.c.h.b16 %v2219
    %v2539 = vunpack.c.l.b16 %v2220
    %v2540 = vunpack.c.h.b16 %v2220
    %v2541 = vunpack.c.l.b16 %v2221
    %v2542 = vunpack.c.h.b16 %v2221
    %v2543 = vunpack.c.l.b16 %v2222
    %v2544 = vunpack.c.h.b16 %v2222
    %v2545 = vunpack.c.l.b16 %v2223
    %v2546 = vunpack.c.h.b16 %v2223
    %v2547 = vunpack.c.l.b16 %v2224
    %v2548 = vunpack.c.h.b16 %v2224
    %v2549 = vunpack.c.l.b16 %v2225
    %v2550 = vunpack.c.h.b16 %v2225
    %v2551 = vunpack.c.l.b16 %v2226
    %v2552 = vunpack.c.h.b16 %v2226
    %v2553 = vunpack.c.l.b16 %v2227
    %v2554 = vunpack.c.h.b16 %v2227
    %v2555 = vunpack.c.l.b16 %v2228
    %v2556 = vunpack.c.h.b16 %v2228
    %v2557 = vunpack.c.l.b16 %v2229
    %v2558 = vunpack.c.h.b16 %v2229
    %v2559 = vunpack.c.l.b16 %v2230
    %v2560 = vunpack.c.h.b16 %v2230
    %v2561 = vunpack.c.l.b16 %v2231
    %v2562 = vunpack.c.h.b16 %v2231
    %v2563 = vunpack.c.l.b16 %v2232
    %v2564 = vunpack.c.h.b16 %v2232
    %v2565 = vunpack.c.l.b16 %v2233
    %v2566 = vunpack.c.h.b16 %v2233
    %v2567 = vunpack.c.l.b16 %v2234
    %v2568 = vunpack.c.h.b16 %v2234
    %v2569 = vunpack.c.l.b16 %v2235
    %v2570 = vunpack.c.h.b16 %v2235
    %v2571 = vunpack.c.l.b16 %v2236
    %v2572 = vunpack.c.h.b16 %v2236
    %v2573 = vunpack.c.l.b16 %v2237
    %v2574 = vunpack.c.h.b16 %v2237
    %v2575 = vunpack.c.l.b16 %v2238
    %v2576 = vunpack.c.h.b16 %v2238
    %v2577 = vunpack.c.l.b16 %v2239
    %v2578 = vunpack.c.h.b16 %v2239
    %v2579 = vunpack.c.l.b16 %v2240
    %v2580 = vunpack.c.h.b16 %v2240
    %v2581 = vunpack.c.l.b16 %v2241
    %v2582 = vunpack.c.h.b16 %v2241
    %v2583 = vunpack.c.l.b16 %v2242
    %v2584 = vunpack.c.h.b16 %v2242
    %v2585 = vunpack.c.l.b16 %v2243
    %v2586 = vunpack.c.h.b16 %v2243
    %v2587 = vunpack.c.l.b16 %v2244
    %v2588 = vunpack.c.h.b16 %v2244
    %v2589 = vunpack.c.l.b16 %v2245
    %v2590 = vunpack.c.h.b16 %v2245
    %v2591 = vunpack.c.l.b16 %v2246
    %v2592 = vunpack.c.h.b16 %v2246
    %v2593 = vunpack.c.l.b16 %v2247
    %v2594 = vunpack.c.h.b16 %v2247
    %v2595 = vunpack.c.l.b16 %v2248
    %v2596 = vunpack.c.h.b16 %v2248
    %v2597 = vunpack.c.l.b16 %v2249
    %v2598 = vunpack.c.h.b16 %v2249
    %v2599 = vunpack.c.l.b16 %v2250
    %v2600 = vunpack.c.h.b16 %v2250
    %v2601 = vunpack.c.l.b16 %v2251
    %v2602 = vunpack.c.h.b16 %v2251
    %v2603 = vunpack.c.l.b16 %v2252
    %v2604 = vunpack.c.h.b16 %v2252
    %v2605 = vunpack.c.l.b16 %v2253
    %v2606 = vunpack.c.h.b16 %v2253
    %v2607 = vunpack.c.l.b16 %v2254
    %v2608 = vunpack.c.h.b16 %v2254
    %v2609 = vunpack.c.l.b16 %v2255
    %v2610 = vunpack.c.h.b16 %v2255
    %v2611 = vunpack.c.l.b16 %v2256
    %v2612 = vunpack.c.h.b16 %v2256
    %v2613 = vunpack.c.l.b16 %v2257
    %v2614 = vunpack.c.h.b16 %v2257
    %v2615 = vunpack.c.l.b16 %v2258
    %v2616 = vunpack.c.h.b16 %v2258
    %v2617 = vunpack.c.l.b16 %v2259
    %v2618 = vunpack.c.h.b16 %v2259
    %v2619 = vunpack.c.l.b16 %v2260
    %v2620 = vunpack.c.h.b16 %v2260
    %v2621 = vunpack.c.l.b16 %v2261
    %v2622 = vunpack.c.h.b16 %v2261
    %v2623 = vunpack.c.l.b16 %v2262
    %v2624 = vunpack.c.h.b16 %v2262
    %v2625 = vunpack.c.l.b16 %v2263
    %v2626 = vunpack.c.h.b16 %v2263
    %v2627 = vunpack.c.l.b16 %v2264
    %v2628 = vunpack.c.h.b16 %v2264
    %v2629 = vunpack.c.l.b16 %v2265
    %v2630 = vunpack.c.h.b16 %v2265
    %v2631 = vunpack.c.l.b16 %v2266
    %v2632 = vunpack.c.h.b16 %v2266
    %v2633 = vunpack.c.l.b16 %v2267
    %v2634 = vunpack.c.h.b16 %v2267
    %v2635 = vunpack.c.l.b16 %v2268
    %v2636 = vunpack.c.h.b16 %v2268
    %v2637 = vunpack.c.l.b16 %v2269
    %v2638 = vunpack.c.h.b16 %v2269
    %v2639 = vunpack.c.l.b16 %v2270
    %v2640 = vunpack.c.h.b16 %v2270
    %v2641 = vunpack.c.l.b16 %v2271
    %v2642 = vunpack.c.h.b16 %v2271
    %v2643 = vunpack.c.l.b16 %v2272
    %v2644 = vunpack.c.h.b16 %v2272
    %v2645 = vunpack.c.l.b16 %v2273
    %v2646 = vunpack.c.h.b16 %v2273
    %v2647 = vunpack.c.l.b16 %v2274
    %v2648 = vunpack.c.h.b16 %v2274
    %v2649 = vunpack.c.l.b16 %v2275
    %v2650 = vunpack.c.h.b16 %v2275
    %v2651 = vunpack.c.l.b16 %v2276
    %v2652 = vunpack.c.h.b16 %v2276
    %v2653 = vunpack.c.l.b16 %v2277
    %v2654 = vunpack.c.h.b16 %v2277
    %v2655 = vunpack.c.l.b16 %v2278
    %v2656 = vunpack.c.h.b16 %v2278
    %v2657 = vunpack.c.l.b16 %v2279
    %v2658 = vunpack.c.h.b16 %v2279
    %v2659 = vunpack.c.l.b16 %v2280
    %v2660 = vunpack.c.h.b16 %v2280
    %v2661 = vunpack.c.l.b16 %v2281
    %v2662 = vunpack.c.h.b16 %v2281
    %v2663 = vunpack.c.l.b16 %v2282
    %v2664 = vunpack.c.h.b16 %v2282
    %v2665 = vunpack.c.l.b16 %v2283
    %v2666 = vunpack.c.h.b16 %v2283
    %v2667 = vunpack.c.l.b16 %v2284
    %v2668 = vunpack.c.h.b16 %v2284
    %v2669 = vpack.c.b16 %v2429, %v2413
    %v2670 = vpack.c.b16 %v2430, %v2414
    %v2671 = vpack.c.b16 %v2431, %v2415
    %v2672 = vpack.c.b16 %v2432, %v2416
    %v2673 = vpack.c.b16 %v2433, %v2417
    %v2674 = vpack.c.b16 %v2434, %v2418
    %v2675 = vpack.c.b16 %v2435, %v2419
    %v2676 = vpack.c.b16 %v2436, %v2420
    %v2677 = vpack.c.b16 %v2437, %v2421
    %v2678 = vpack.c.b16 %v2438, %v2422
    %v2679 = vpack.c.b16 %v2439, %v2423
    %v2680 = vpack.c.b16 %v2440, %v2424
    %v2681 = vpack.c.b16 %v2441, %v2425
    %v2682 = vpack.c.b16 %v2442, %v2426
    %v2683 = vpack.c.b16 %v2443, %v2427
    %v2684 = vpack.c.b16 %v2444, %v2428
    %v2685 = vpack.c.b16 %v2461, %v2445
    %v2686 = vpack.c.b16 %v2462, %v2446
    %v2687 = vpack.c.b16 %v2463, %v2447
    %v2688 = vpack.c.b16 %v2464, %v2448
    %v2689 = vpack.c.b16 %v2465, %v2449
    %v2690 = vpack.c.b16 %v2466, %v2450
    %v2691 = vpack.c.b16 %v2467, %v2451
    %v2692 = vpack.c.b16 %v2468, %v2452
    %v2693 = vpack.c.b16 %v2469, %v2453
    %v2694 = vpack.c.b16 %v2470, %v2454
    %v2695 = vpack.c.b16 %v2471, %v2455
    %v2696 = vpack.c.b16 %v2472, %v2456
    %v2697 = vpack.c.b16 %v2473, %v2457
    %v2698 = vpack.c.b16 %v2474, %v2458
    %v2699 = vpack.c.b16 %v2475, %v2459
    %v2700 = vpack.c.b16 %v2476, %v2460
    %v2701 = vpack.c.b16 %v2493, %v2477
    %v2702 = vpack.c.b16 %v2494, %v2478
    %v2703 = vpack.c.b16 %v2495, %v2479
    %v2704 = vpack.c.b16 %v2496, %v2480
    %v2705 = vpack.c.b16 %v2497, %v2481
    %v2706 = vpack.c.b16 %v2498, %v2482
    %v2707 = vpack.c.b16 %v2499, %v2483
    %v2708 = vpack.c.b16 %v2500, %v2484
    %v2709 = vpack.c.b16 %v2501, %v2485
    %v2710 = vpack.c.b16 %v2502, %v2486
    %v2711 = vpack.c.b16 %v2503, %v2487
    %v2712 = vpack.c.b16 %v2504, %v2488
    %v2713 = vpack.c.b16 %v2505, %v2489
    %v2714 = vpack.c.b16 %v2506, %v2490
    %v2715 = vpack.c.b16 %v2507, %v2491
    %v2716 = vpack.c.b16 %v2508, %v2492
    %v2717 = vpack.c.b16 %v2525, %v2509
    %v2718 = vpack.c.b16 %v2526, %v2510
    %v2719 = vpack.c.b16 %v2527, %v2511
    %v2720 = vpack.c.b16 %v2528, %v2512
    %v2721 = vpack.c.b16 %v2529, %v2513
    %v2722 = vpack.c.b16 %v2530, %v2514
    %v2723 = vpack.c.b16 %v2531, %v2515
    %v2724 = vpack.c.b16 %v2532, %v2516
    %v2725 = vpack.c.b16 %v2533, %v2517
    %v2726 = vpack.c.b16 %v2534, %v2518
    %v2727 = vpack.c.b16 %v2535, %v2519
    %v2728 = vpack.c.b16 %v2536, %v2520
    %v2729 = vpack.c.b16 %v2537, %v2521
    %v2730 = vpack.c.b16 %v2538, %v2522
    %v2731 = vpack.c.b16 %v2539, %v2523
    %v2732 = vpack.c.b16 %v2540, %v2524
    %v2733 = vpack.c.b16 %v2557, %v2541
    %v2734 = vpack.c.b16 %v2558, %v2542
    %v2735 = vpack.c.b16 %v2559, %v2543
    %v2736 = vpack.c.b16 %v2560, %v2544
    %v2737 = vpack.c.b16 %v2561, %v2545
    %v2738 = vpack.c.b16 %v2562, %v2546
    %v2739 = vpack.c.b16 %v2563, %v2547
    %v2740 = vpack.c.b16 %v2564, %v2548
    %v2741 = vpack.c.b16 %v2565, %v2549
    %v2742 = vpack.c.b16 %v2566, %v2550
    %v2743 = vpack.c.b16 %v2567, %v2551
    %v2744 = vpack.c.b16 %v2568, %v2552
    %v2745 = vpack.c.b16 %v2569, %v2553
    %v2746 = vpack.c.b16 %v2570, %v2554
    %v2747 = vpack.c.b16 %v2571, %v2555
    %v2748 = vpack.c.b16 %v2572, %v2556
    %v2749 = vpack.c.b16 %v2589, %v2573
    %v2750 = vpack.c.b16 %v2590, %v2574
    %v2751 = vpack.c.b16 %v2591, %v2575
    %v2752 = vpack.c.b16 %v2592, %v2576
    %v2753 = vpack.c.b16 %v2593, %v2577
    %v2754 = vpack.c.b16 %v2594, %v2578
    %v2755 = vpack.c.b16 %v2595, %v2579
    %v2756 = vpack.c.b16 %v2596, %v2580
    %v2757 = vpack.c.b16 %v2597, %v2581
    %v2758 = vpack.c.b16 %v2598, %v2582
    %v2759 = vpack.c.b16 %v2599, %v2583
    %v2760 = vpack.c.b16 %v2600, %v2584
    %v2761 = vpack.c.b16 %v2601, %v2585
    %v2762 = vpack.c.b16 %v2602, %v2586
    %v2763 = vpack.c.b16 %v2603, %v2587
    %v2764 = vpack.c.b16 %v2604, %v2588
    %v2765 = vpack.c.b16 %v2621, %v2605
    %v2766 = vpack.c.b16 %v2622, %v2606
    %v2767 = vpack.c.b16 %v2623, %v2607
    %v2768 = vpack.c.b16 %v2624, %v2608
    %v2769 = vpack.c.b16 %v2625, %v2609
    %v2770 = vpack.c.b16 %v2626, %v2610
    %v2771 = vpack.c.b16 %v2627, %v2611
    %v2772 = vpack.c.b16 %v2628, %v2612
    %v2773 = vpack.c.b16 %v2629, %v2613
    %v2774 = vpack.c.b16 %v2630, %v2614
    %v2775 = vpack.c.b16 %v2631, %v2615
    %v2776 = vpack.c.b16 %v2632, %v2616
    %v2777 = vpack.c.b16 %v2633, %v2617
    %v2778 = vpack.c.b16 %v2634, %v2618
    %v2779 = vpack.c.b16 %v2635, %v2619
    %v2780 = vpack.c.b16 %v2636, %v2620
    %v2781 = vpack.c.b16 %v2653, %v2637
    %v2782 = vpack.c.b16 %v2654, %v2638
    %v2783 = vpack.c.b16 %v2655, %v2639
    %v2784 = vpack.c.b16 %v2656, %v2640
    %v2785 = vpack.c.b16 %v2657, %v2641
    %v2786 = vpack.c.b16 %v2658, %v2642
    %v2787 = vpack.c.b16 %v2659, %v2643
    %v2788 = vpack.c.b16 %v2660, %v2644
    %v2789 = vpack.c.b16 %v2661, %v2645
    %v2790 = vpack.c.b16 %v2662, %v2646
    %v2791 = vpack.c.b16 %v2663, %v2647
    %v2792 = vpack.c.b16 %v2664, %v2648
    %v2793 = vpack.c.b16 %v2665, %v2649
    %v2794 = vpack.c.b16 %v2666, %v2650
    %v2795 = vpack.c.b16 %v2667, %v2651
    %v2796 = vpack.c.b16 %v2668, %v2652
    %2925 = vmatprep.subr.bf16.mxu0 %v2670
    %2926 = vmatpush1.bf16.msra.mxu0 %v2669
    %2927 = vmatprep.subr.bf16.mxu0 %v2686
    %2928 = vmatpush1.bf16.msra.mxu0 %v2685
    %2929 = vmatprep.subr.bf16.mxu0 %v2702
    %2930 = vmatpush1.bf16.msra.mxu0 %v2701
    %2931 = vmatprep.subr.bf16.mxu0 %v2718
    %2932 = vmatpush1.bf16.msra.mxu0 %v2717
    %2933 = vmatprep.subr.bf16.mxu0 %v2734
    %2934 = vmatpush1.bf16.msra.mxu0 %v2733
    %2935 = vmatprep.subr.bf16.mxu0 %v2750
    %2936 = vmatpush1.bf16.msra.mxu0 %v2749
    %2937 = vmatprep.subr.bf16.mxu0 %v2766
    %2938 = vmatpush1.bf16.msra.mxu0 %v2765
    %2939 = vmatprep.subr.bf16.mxu0 %v2782
    %2940 = vmatpush1.bf16.msra.mxu0 %v2781
    %2941 = vmatprep.subr.bf16.mxu0 0
    %2942 = vmatpush1.bf16.msra.mxu0 0
    %2943 = vmatprep.subr.bf16.mxu0 0
    %2944 = vmatpush1.bf16.msra.mxu0 0
    %2945 = vmatprep.subr.bf16.mxu0 0
    %2946 = vmatpush1.bf16.msra.mxu0 0
    %2947 = vmatprep.subr.bf16.mxu0 0
    %2948 = vmatpush1.bf16.msra.mxu0 0
    %2949 = vmatprep.subr.bf16.mxu0 0
    %2950 = vmatpush1.bf16.msra.mxu0 0
    %2951 = vmatprep.subr.bf16.mxu0 0
    %2952 = vmatpush1.bf16.msra.mxu0 0
    %2953 = vmatprep.subr.bf16.mxu0 0
    %2954 = vmatpush1.bf16.msra.mxu0 0
    %2955 = vmatprep.subr.bf16.mxu0 0
    %2956 = vmatpush1.bf16.msra.mxu0 0
    %2957 = vmatprep.mubr.bf16.mxu0 0
    %2958 = vmatmul.mubr.bf16.gmra.mrb[0].mxu0 %v2156
    %v2959 = vpop.f32.mrb[0].mxu0
    %v2960 = vadd.f32 0.0, %v2959
    %v2961 = vpop.f32.mrb[0].mxu0
    %v2962 = vadd.f32 0.0, %v2961
    %v2963 = vpop.f32.mrb[0].mxu0
    %v2964 = vadd.f32 0.0, %v2963
    %v2965 = vpop.f32.mrb[0].mxu0
    %v2966 = vadd.f32 0.0, %v2965
    %2967 = vdwg.mxu0
    %2968 = vmatprep.subr.bf16.mxu0 %v2672
    %2969 = vmatpush1.bf16.msra.mxu0 %v2671
    %2970 = vmatprep.subr.bf16.mxu0 %v2688
    %2971 = vmatpush1.bf16.msra.mxu0 %v2687
    %2972 = vmatprep.subr.bf16.mxu0 %v2704
    %2973 = vmatpush1.bf16.msra.mxu0 %v2703
    %2974 = vmatprep.subr.bf16.mxu0 %v2720
    %2975 = vmatpush1.bf16.msra.mxu0 %v2719
    %2976 = vmatprep.subr.bf16.mxu0 %v2736
    %2977 = vmatpush1.bf16.msra.mxu0 %v2735
    %2978 = vmatprep.subr.bf16.mxu0 %v2752
    %2979 = vmatpush1.bf16.msra.mxu0 %v2751
    %2980 = vmatprep.subr.bf16.mxu0 %v2768
    %2981 = vmatpush1.bf16.msra.mxu0 %v2767
    %2982 = vmatprep.subr.bf16.mxu0 %v2784
    %2983 = vmatpush1.bf16.msra.mxu0 %v2783
    %2984 = vmatprep.subr.bf16.mxu0 0
    %2985 = vmatpush1.bf16.msra.mxu0 0
    %2986 = vmatprep.subr.bf16.mxu0 0
    %2987 = vmatpush1.bf16.msra.mxu0 0
    %2988 = vmatprep.subr.bf16.mxu0 0
    %2989 = vmatpush1.bf16.msra.mxu0 0
    %2990 = vmatprep.subr.bf16.mxu0 0
    %2991 = vmatpush1.bf16.msra.mxu0 0
    %2992 = vmatprep.subr.bf16.mxu0 0
    %2993 = vmatpush1.bf16.msra.mxu0 0
    %2994 = vmatprep.subr.bf16.mxu0 0
    %2995 = vmatpush1.bf16.msra.mxu0 0
    %2996 = vmatprep.subr.bf16.mxu0 0
    %2997 = vmatpush1.bf16.msra.mxu0 0
    %2998 = vmatprep.subr.bf16.mxu0 0
    %2999 = vmatpush1.bf16.msra.mxu0 0
    %3000 = vmatprep.mubr.bf16.mxu0 0
    %3001 = vmatmul.mubr.bf16.gmra.mrb[0].mxu0 %v2156
    %v3002 = vpop.f32.mrb[0].mxu0
    %v3003 = vadd.f32 0.0, %v3002
    %v3004 = vpop.f32.mrb[0].mxu0
    %v3005 = vadd.f32 0.0, %v3004
    %v3006 = vpop.f32.mrb[0].mxu0
    %v3007 = vadd.f32 0.0, %v3006
    %v3008 = vpop.f32.mrb[0].mxu0
    %v3009 = vadd.f32 0.0, %v3008
    %3010 = vdwg.mxu0
    %3011 = vmatprep.subr.bf16.mxu0 %v2674
    %3012 = vmatpush1.bf16.msra.mxu0 %v2673
    %3013 = vmatprep.subr.bf16.mxu0 %v2690
    %3014 = vmatpush1.bf16.msra.mxu0 %v2689
    %3015 = vmatprep.subr.bf16.mxu0 %v2706
    %3016 = vmatpush1.bf16.msra.mxu0 %v2705
    %3017 = vmatprep.subr.bf16.mxu0 %v2722
    %3018 = vmatpush1.bf16.msra.mxu0 %v2721
    %3019 = vmatprep.subr.bf16.mxu0 %v2738
    %3020 = vmatpush1.bf16.msra.mxu0 %v2737
    %3021 = vmatprep.subr.bf16.mxu0 %v2754
    %3022 = vmatpush1.bf16.msra.mxu0 %v2753
    %3023 = vmatprep.subr.bf16.mxu0 %v2770
    %3024 = vmatpush1.bf16.msra.mxu0 %v2769
    %3025 = vmatprep.subr.bf16.mxu0 %v2786
    %3026 = vmatpush1.bf16.msra.mxu0 %v2785
    %3027 = vmatprep.subr.bf16.mxu0 0
    %3028 = vmatpush1.bf16.msra.mxu0 0
    %3029 = vmatprep.subr.bf16.mxu0 0
    %3030 = vmatpush1.bf16.msra.mxu0 0
    %3031 = vmatprep.subr.bf16.mxu0 0
    %3032 = vmatpush1.bf16.msra.mxu0 0
    %3033 = vmatprep.subr.bf16.mxu0 0
    %3034 = vmatpush1.bf16.msra.mxu0 0
    %3035 = vmatprep.subr.bf16.mxu0 0
    %3036 = vmatpush1.bf16.msra.mxu0 0
    %3037 = vmatprep.subr.bf16.mxu0 0
    %3038 = vmatpush1.bf16.msra.mxu0 0
    %3039 = vmatprep.subr.bf16.mxu0 0
    %3040 = vmatpush1.bf16.msra.mxu0 0
    %3041 = vmatprep.subr.bf16.mxu0 0
    %3042 = vmatpush1.bf16.msra.mxu0 0
    %3043 = vmatprep.mubr.bf16.mxu0 0
    %3044 = vmatmul.mubr.bf16.gmra.mrb[0].mxu0 %v2156
    %v3045 = vpop.f32.mrb[0].mxu0
    %v3046 = vadd.f32 0.0, %v3045
    %v3047 = vpop.f32.mrb[0].mxu0
    %v3048 = vadd.f32 0.0, %v3047
    %v3049 = vpop.f32.mrb[0].mxu0
    %v3050 = vadd.f32 0.0, %v3049
    %v3051 = vpop.f32.mrb[0].mxu0
    %v3052 = vadd.f32 0.0, %v3051
    %3053 = vdwg.mxu0
    %3054 = vmatprep.subr.bf16.mxu0 %v2676
    %3055 = vmatpush1.bf16.msra.mxu0 %v2675
    %3056 = vmatprep.subr.bf16.mxu0 %v2692
    %3057 = vmatpush1.bf16.msra.mxu0 %v2691
    %3058 = vmatprep.subr.bf16.mxu0 %v2708
    %3059 = vmatpush1.bf16.msra.mxu0 %v2707
    %3060 = vmatprep.subr.bf16.mxu0 %v2724
    %3061 = vmatpush1.bf16.msra.mxu0 %v2723
    %3062 = vmatprep.subr.bf16.mxu0 %v2740
    %3063 = vmatpush1.bf16.msra.mxu0 %v2739
    %3064 = vmatprep.subr.bf16.mxu0 %v2756
    %3065 = vmatpush1.bf16.msra.mxu0 %v2755
    %3066 = vmatprep.subr.bf16.mxu0 %v2772
    %3067 = vmatpush1.bf16.msra.mxu0 %v2771
    %3068 = vmatprep.subr.bf16.mxu0 %v2788
    %3069 = vmatpush1.bf16.msra.mxu0 %v2787
    %3070 = vmatprep.subr.bf16.mxu0 0
    %3071 = vmatpush1.bf16.msra.mxu0 0
    %3072 = vmatprep.subr.bf16.mxu0 0
    %3073 = vmatpush1.bf16.msra.mxu0 0
    %3074 = vmatprep.subr.bf16.mxu0 0
    %3075 = vmatpush1.bf16.msra.mxu0 0
    %3076 = vmatprep.subr.bf16.mxu0 0
    %3077 = vmatpush1.bf16.msra.mxu0 0
    %3078 = vmatprep.subr.bf16.mxu0 0
    %3079 = vmatpush1.bf16.msra.mxu0 0
    %3080 = vmatprep.subr.bf16.mxu0 0
    %3081 = vmatpush1.bf16.msra.mxu0 0
    %3082 = vmatprep.subr.bf16.mxu0 0
    %3083 = vmatpush1.bf16.msra.mxu0 0
    %3084 = vmatprep.subr.bf16.mxu0 0
    %3085 = vmatpush1.bf16.msra.mxu0 0
    %3086 = vmatprep.mubr.bf16.mxu0 0
    %3087 = vmatmul.mubr.bf16.gmra.mrb[0].mxu0 %v2156
    %v3088 = vpop.f32.mrb[0].mxu0
    %v3089 = vadd.f32 0.0, %v3088
    %v3090 = vpop.f32.mrb[0].mxu0
    %v3091 = vadd.f32 0.0, %v3090
    %v3092 = vpop.f32.mrb[0].mxu0
    %v3093 = vadd.f32 0.0, %v3092
    %v3094 = vpop.f32.mrb[0].mxu0
    %v3095 = vadd.f32 0.0, %v3094
    %3096 = vdwg.mxu0
    %3097 = vmatprep.subr.bf16.mxu0 %v2678
    %3098 = vmatpush1.bf16.msra.mxu0 %v2677
    %3099 = vmatprep.subr.bf16.mxu0 %v2694
    %3100 = vmatpush1.bf16.msra.mxu0 %v2693
    %3101 = vmatprep.subr.bf16.mxu0 %v2710
    %3102 = vmatpush1.bf16.msra.mxu0 %v2709
    %3103 = vmatprep.subr.bf16.mxu0 %v2726
    %3104 = vmatpush1.bf16.msra.mxu0 %v2725
    %3105 = vmatprep.subr.bf16.mxu0 %v2742
    %3106 = vmatpush1.bf16.msra.mxu0 %v2741
    %3107 = vmatprep.subr.bf16.mxu0 %v2758
    %3108 = vmatpush1.bf16.msra.mxu0 %v2757
    %3109 = vmatprep.subr.bf16.mxu0 %v2774
    %3110 = vmatpush1.bf16.msra.mxu0 %v2773
    %3111 = vmatprep.subr.bf16.mxu0 %v2790
    %3112 = vmatpush1.bf16.msra.mxu0 %v2789
    %3113 = vmatprep.subr.bf16.mxu0 0
    %3114 = vmatpush1.bf16.msra.mxu0 0
    %3115 = vmatprep.subr.bf16.mxu0 0
    %3116 = vmatpush1.bf16.msra.mxu0 0
    %3117 = vmatprep.subr.bf16.mxu0 0
    %3118 = vmatpush1.bf16.msra.mxu0 0
    %3119 = vmatprep.subr.bf16.mxu0 0
    %3120 = vmatpush1.bf16.msra.mxu0 0
    %3121 = vmatprep.subr.bf16.mxu0 0
    %3122 = vmatpush1.bf16.msra.mxu0 0
    %3123 = vmatprep.subr.bf16.mxu0 0
    %3124 = vmatpush1.bf16.msra.mxu0 0
    %3125 = vmatprep.subr.bf16.mxu0 0
    %3126 = vmatpush1.bf16.msra.mxu0 0
    %3127 = vmatprep.subr.bf16.mxu0 0
    %3128 = vmatpush1.bf16.msra.mxu0 0
    %3129 = vmatprep.mubr.bf16.mxu0 0
    %3130 = vmatmul.mubr.bf16.gmra.mrb[0].mxu0 %v2156
    %v3131 = vpop.f32.mrb[0].mxu0
    %v3132 = vadd.f32 0.0, %v3131
    %v3133 = vpop.f32.mrb[0].mxu0
    %v3134 = vadd.f32 0.0, %v3133
    %v3135 = vpop.f32.mrb[0].mxu0
    %v3136 = vadd.f32 0.0, %v3135
    %v3137 = vpop.f32.mrb[0].mxu0
    %v3138 = vadd.f32 0.0, %v3137
    %3139 = vdwg.mxu0
    %3140 = vmatprep.subr.bf16.mxu0 %v2680
    %3141 = vmatpush1.bf16.msra.mxu0 %v2679
    %3142 = vmatprep.subr.bf16.mxu0 %v2696
    %3143 = vmatpush1.bf16.msra.mxu0 %v2695
    %3144 = vmatprep.subr.bf16.mxu0 %v2712
    %3145 = vmatpush1.bf16.msra.mxu0 %v2711
    %3146 = vmatprep.subr.bf16.mxu0 %v2728
    %3147 = vmatpush1.bf16.msra.mxu0 %v2727
    %3148 = vmatprep.subr.bf16.mxu0 %v2744
    %3149 = vmatpush1.bf16.msra.mxu0 %v2743
    %3150 = vmatprep.subr.bf16.mxu0 %v2760
    %3151 = vmatpush1.bf16.msra.mxu0 %v2759
    %3152 = vmatprep.subr.bf16.mxu0 %v2776
    %3153 = vmatpush1.bf16.msra.mxu0 %v2775
    %3154 = vmatprep.subr.bf16.mxu0 %v2792
    %3155 = vmatpush1.bf16.msra.mxu0 %v2791
    %3156 = vmatprep.subr.bf16.mxu0 0
    %3157 = vmatpush1.bf16.msra.mxu0 0
    %3158 = vmatprep.subr.bf16.mxu0 0
    %3159 = vmatpush1.bf16.msra.mxu0 0
    %3160 = vmatprep.subr.bf16.mxu0 0
    %3161 = vmatpush1.bf16.msra.mxu0 0
    %3162 = vmatprep.subr.bf16.mxu0 0
    %3163 = vmatpush1.bf16.msra.mxu0 0
    %3164 = vmatprep.subr.bf16.mxu0 0
    %3165 = vmatpush1.bf16.msra.mxu0 0
    %3166 = vmatprep.subr.bf16.mxu0 0
    %3167 = vmatpush1.bf16.msra.mxu0 0
    %3168 = vmatprep.subr.bf16.mxu0 0
    %3169 = vmatpush1.bf16.msra.mxu0 0
    %3170 = vmatprep.subr.bf16.mxu0 0
    %3171 = vmatpush1.bf16.msra.mxu0 0
    %3172 = vmatprep.mubr.bf16.mxu0 0
    %3173 = vmatmul.mubr.bf16.gmra.mrb[0].mxu0 %v2156
    %v3174 = vpop.f32.mrb[0].mxu0
    %v3175 = vadd.f32 0.0, %v3174
    %v3176 = vpop.f32.mrb[0].mxu0
    %v3177 = vadd.f32 0.0, %v3176
    %v3178 = vpop.f32.mrb[0].mxu0
    %v3179 = vadd.f32 0.0, %v3178
    %v3180 = vpop.f32.mrb[0].mxu0
    %v3181 = vadd.f32 0.0, %v3180
    %3182 = vdwg.mxu0
    %3183 = vmatprep.subr.bf16.mxu0 %v2682
    %3184 = vmatpush1.bf16.msra.mxu0 %v2681
    %3185 = vmatprep.subr.bf16.mxu0 %v2698
    %3186 = vmatpush1.bf16.msra.mxu0 %v2697
    %3187 = vmatprep.subr.bf16.mxu0 %v2714
    %3188 = vmatpush1.bf16.msra.mxu0 %v2713
    %3189 = vmatprep.subr.bf16.mxu0 %v2730
    %3190 = vmatpush1.bf16.msra.mxu0 %v2729
    %3191 = vmatprep.subr.bf16.mxu0 %v2746
    %3192 = vmatpush1.bf16.msra.mxu0 %v2745
    %3193 = vmatprep.subr.bf16.mxu0 %v2762
    %3194 = vmatpush1.bf16.msra.mxu0 %v2761
    %3195 = vmatprep.subr.bf16.mxu0 %v2778
    %3196 = vmatpush1.bf16.msra.mxu0 %v2777
    %3197 = vmatprep.subr.bf16.mxu0 %v2794
    %3198 = vmatpush1.bf16.msra.mxu0 %v2793
    %3199 = vmatprep.subr.bf16.mxu0 0
    %3200 = vmatpush1.bf16.msra.mxu0 0
    %3201 = vmatprep.subr.bf16.mxu0 0
    %3202 = vmatpush1.bf16.msra.mxu0 0
    %3203 = vmatprep.subr.bf16.mxu0 0
    %3204 = vmatpush1.bf16.msra.mxu0 0
    %3205 = vmatprep.subr.bf16.mxu0 0
    %3206 = vmatpush1.bf16.msra.mxu0 0
    %3207 = vmatprep.subr.bf16.mxu0 0
    %3208 = vmatpush1.bf16.msra.mxu0 0
    %3209 = vmatprep.subr.bf16.mxu0 0
    %3210 = vmatpush1.bf16.msra.mxu0 0
    %3211 = vmatprep.subr.bf16.mxu0 0
    %3212 = vmatpush1.bf16.msra.mxu0 0
    %3213 = vmatprep.subr.bf16.mxu0 0
    %3214 = vmatpush1.bf16.msra.mxu0 0
    %3215 = vmatprep.mubr.bf16.mxu0 0
    %3216 = vmatmul.mubr.bf16.gmra.mrb[0].mxu0 %v2156
    %v3217 = vpop.f32.mrb[0].mxu0
    %v3218 = vadd.f32 0.0, %v3217
    %v3219 = vpop.f32.mrb[0].mxu0
    %v3220 = vadd.f32 0.0, %v3219
    %v3221 = vpop.f32.mrb[0].mxu0
    %v3222 = vadd.f32 0.0, %v3221
    %v3223 = vpop.f32.mrb[0].mxu0
    %v3224 = vadd.f32 0.0, %v3223
    %3225 = vdwg.mxu0
    %3226 = vmatprep.subr.bf16.mxu0 %v2684
    %3227 = vmatpush1.bf16.msra.mxu0 %v2683
    %3228 = vmatprep.subr.bf16.mxu0 %v2700
    %3229 = vmatpush1.bf16.msra.mxu0 %v2699
    %3230 = vmatprep.subr.bf16.mxu0 %v2716
    %3231 = vmatpush1.bf16.msra.mxu0 %v2715
    %3232 = vmatprep.subr.bf16.mxu0 %v2732
    %3233 = vmatpush1.bf16.msra.mxu0 %v2731
    %3234 = vmatprep.subr.bf16.mxu0 %v2748
    %3235 = vmatpush1.bf16.msra.mxu0 %v2747
    %3236 = vmatprep.subr.bf16.mxu0 %v2764
    %3237 = vmatpush1.bf16.msra.mxu0 %v2763
    %3238 = vmatprep.subr.bf16.mxu0 %v2780
    %3239 = vmatpush1.bf16.msra.mxu0 %v2779
    %3240 = vmatprep.subr.bf16.mxu0 %v2796
    %3241 = vmatpush1.bf16.msra.mxu0 %v2795
    %3242 = vmatprep.subr.bf16.mxu0 0
    %3243 = vmatpush1.bf16.msra.mxu0 0
    %3244 = vmatprep.subr.bf16.mxu0 0
    %3245 = vmatpush1.bf16.msra.mxu0 0
    %3246 = vmatprep.subr.bf16.mxu0 0
    %3247 = vmatpush1.bf16.msra.mxu0 0
    %3248 = vmatprep.subr.bf16.mxu0 0
    %3249 = vmatpush1.bf16.msra.mxu0 0
    %3250 = vmatprep.subr.bf16.mxu0 0
    %3251 = vmatpush1.bf16.msra.mxu0 0
    %3252 = vmatprep.subr.bf16.mxu0 0
    %3253 = vmatpush1.bf16.msra.mxu0 0
    %3254 = vmatprep.subr.bf16.mxu0 0
    %3255 = vmatpush1.bf16.msra.mxu0 0
    %3256 = vmatprep.subr.bf16.mxu0 0
    %3257 = vmatpush1.bf16.msra.mxu0 0
    %3258 = vmatprep.mubr.bf16.mxu0 0
    %3259 = vmatmul.mubr.bf16.gmra.mrb[0].mxu0 %v2156
    %v3260 = vpop.f32.mrb[0].mxu0
    %v3261 = vadd.f32 0.0, %v3260
    %v3262 = vpop.f32.mrb[0].mxu0
    %v3263 = vadd.f32 0.0, %v3262
    %v3264 = vpop.f32.mrb[0].mxu0
    %v3265 = vadd.f32 0.0, %v3264
    %v3266 = vpop.f32.mrb[0].mxu0
    %v3267 = vadd.f32 0.0, %v3266
    %3268 = vdwg.mxu0
    %v3269 = vmul.f32 %v1847, %v2960
    %v3270 = vmul.f32 %v1849, %v2962
    %v3271 = vmul.f32 %v1890, %v3003
    %v3272 = vmul.f32 %v1892, %v3005
    %v3273 = vmul.f32 %v1933, %v3046
    %v3274 = vmul.f32 %v1935, %v3048
    %v3275 = vmul.f32 %v1976, %v3089
    %v3276 = vmul.f32 %v1978, %v3091
    %v3277 = vmul.f32 %v2019, %v3132
    %v3278 = vmul.f32 %v2021, %v3134
    %v3279 = vmul.f32 %v2062, %v3175
    %v3280 = vmul.f32 %v2064, %v3177
    %v3281 = vmul.f32 %v2105, %v3218
    %v3282 = vmul.f32 %v2107, %v3220
    %v3283 = vmul.f32 %v2148, %v3261
    %v3284 = vmul.f32 %v2150, %v3263
    %v3285 = vmul.f32 %v1851, %v2964
    %v3286 = vmul.f32 %v1853, %v2966
    %v3287 = vmul.f32 %v1894, %v3007
    %v3288 = vmul.f32 %v1896, %v3009
    %v3289 = vmul.f32 %v1937, %v3050
    %v3290 = vmul.f32 %v1939, %v3052
    %v3291 = vmul.f32 %v1980, %v3093
    %v3292 = vmul.f32 %v1982, %v3095
    %v3293 = vmul.f32 %v2023, %v3136
    %v3294 = vmul.f32 %v2025, %v3138
    %v3295 = vmul.f32 %v2066, %v3179
    %v3296 = vmul.f32 %v2068, %v3181
    %v3297 = vmul.f32 %v2109, %v3222
    %v3298 = vmul.f32 %v2111, %v3224
    %v3299 = vmul.f32 %v2152, %v3265
    %v3300 = vmul.f32 %v2154, %v3267
    %v3301 = vpack.c.bf16 %v3285, %v3269
    %v3302 = vpack.c.bf16 %v3286, %v3270
    %v3303 = vpack.c.bf16 %v3287, %v3271
    %v3304 = vpack.c.bf16 %v3288, %v3272
    %v3305 = vpack.c.bf16 %v3289, %v3273
    %v3306 = vpack.c.bf16 %v3290, %v3274
    %v3307 = vpack.c.bf16 %v3291, %v3275
    %v3308 = vpack.c.bf16 %v3292, %v3276
    %v3309 = vpack.c.bf16 %v3293, %v3277
    %v3310 = vpack.c.bf16 %v3294, %v3278
    %v3311 = vpack.c.bf16 %v3295, %v3279
    %v3312 = vpack.c.bf16 %v3296, %v3280
    %v3313 = vpack.c.bf16 %v3297, %v3281
    %v3314 = vpack.c.bf16 %v3298, %v3282
    %v3315 = vpack.c.bf16 %v3299, %v3283
    %v3316 = vpack.c.bf16 %v3300, %v3284
    %v3317 = vld [vmem:[#allocation10] sm:$0xf]
    %v3318 = vld [vmem:[#allocation10 + $0x4] sm:$0xf]
    %v3319 = vld [vmem:[#allocation10 + $0x8] sm:$0xf]
    %v3320 = vld [vmem:[#allocation10 + $0xc] sm:$0xf]
    %v3321 = vld [vmem:[#allocation10 + $0x10] sm:$0xf]
    %v3322 = vld [vmem:[#allocation10 + $0x14] sm:$0xf]
    %v3323 = vld [vmem:[#allocation10 + $0x18] sm:$0xf]
    %v3324 = vld [vmem:[#allocation10 + $0x1c] sm:$0xf]
    %v3325 = vld [vmem:[#allocation10 + $0x20] sm:$0xf]
    %v3326 = vld [vmem:[#allocation10 + $0x24] sm:$0xf]
    %v3327 = vld [vmem:[#allocation10 + $0x28] sm:$0xf]
    %v3328 = vld [vmem:[#allocation10 + $0x2c] sm:$0xf]
    %v3329 = vld [vmem:[#allocation10 + $0x30] sm:$0xf]
    %v3330 = vld [vmem:[#allocation10 + $0x34] sm:$0xf]
    %v3331 = vld [vmem:[#allocation10 + $0x38] sm:$0xf]
    %v3332 = vld [vmem:[#allocation10 + $0x3c] sm:$0xf]
    %v3333 = vld [vmem:[#allocation10 + $0x40] sm:$0xf]
    %v3334 = vld [vmem:[#allocation10 + $0x44] sm:$0xf]
    %v3335 = vld [vmem:[#allocation10 + $0x48] sm:$0xf]
    %v3336 = vld [vmem:[#allocation10 + $0x4c] sm:$0xf]
    %v3337 = vld [vmem:[#allocation10 + $0x50] sm:$0xf]
    %v3338 = vld [vmem:[#allocation10 + $0x54] sm:$0xf]
    %v3339 = vld [vmem:[#allocation10 + $0x58] sm:$0xf]
    %v3340 = vld [vmem:[#allocation10 + $0x5c] sm:$0xf]
    %v3341 = vld [vmem:[#allocation10 + $0x60] sm:$0xf]
    %v3342 = vld [vmem:[#allocation10 + $0x64] sm:$0xf]
    %v3343 = vld [vmem:[#allocation10 + $0x68] sm:$0xf]
    %v3344 = vld [vmem:[#allocation10 + $0x6c] sm:$0xf]
    %v3345 = vld [vmem:[#allocation10 + $0x70] sm:$0xf]
    %v3346 = vld [vmem:[#allocation10 + $0x74] sm:$0xf]
    %v3347 = vld [vmem:[#allocation10 + $0x78] sm:$0xf]
    %v3348 = vld [vmem:[#allocation10 + $0x7c] sm:$0xf]
    %v3349 = vld [vmem:[#allocation10 + $0x80] sm:$0xf]
    %v3350 = vld [vmem:[#allocation10 + $0x84] sm:$0xf]
    %v3351 = vld [vmem:[#allocation10 + $0x88] sm:$0xf]
    %v3352 = vld [vmem:[#allocation10 + $0x8c] sm:$0xf]
    %v3353 = vld [vmem:[#allocation10 + $0x90] sm:$0xf]
    %v3354 = vld [vmem:[#allocation10 + $0x94] sm:$0xf]
    %v3355 = vld [vmem:[#allocation10 + $0x98] sm:$0xf]
    %v3356 = vld [vmem:[#allocation10 + $0x9c] sm:$0xf]
    %v3357 = vld [vmem:[#allocation10 + $0xa0] sm:$0xf]
    %v3358 = vld [vmem:[#allocation10 + $0xa4] sm:$0xf]
    %v3359 = vld [vmem:[#allocation10 + $0xa8] sm:$0xf]
    %v3360 = vld [vmem:[#allocation10 + $0xac] sm:$0xf]
    %v3361 = vld [vmem:[#allocation10 + $0xb0] sm:$0xf]
    %v3362 = vld [vmem:[#allocation10 + $0xb4] sm:$0xf]
    %v3363 = vld [vmem:[#allocation10 + $0xb8] sm:$0xf]
    %v3364 = vld [vmem:[#allocation10 + $0xbc] sm:$0xf]
    %v3365 = vld [vmem:[#allocation10 + $0xc0] sm:$0xf]
    %v3366 = vld [vmem:[#allocation10 + $0xc4] sm:$0xf]
    %v3367 = vld [vmem:[#allocation10 + $0xc8] sm:$0xf]
    %v3368 = vld [vmem:[#allocation10 + $0xcc] sm:$0xf]
    %v3369 = vld [vmem:[#allocation10 + $0xd0] sm:$0xf]
    %v3370 = vld [vmem:[#allocation10 + $0xd4] sm:$0xf]
    %v3371 = vld [vmem:[#allocation10 + $0xd8] sm:$0xf]
    %v3372 = vld [vmem:[#allocation10 + $0xdc] sm:$0xf]
    %v3373 = vld [vmem:[#allocation10 + $0xe0] sm:$0xf]
    %v3374 = vld [vmem:[#allocation10 + $0xe4] sm:$0xf]
    %v3375 = vld [vmem:[#allocation10 + $0xe8] sm:$0xf]
    %v3376 = vld [vmem:[#allocation10 + $0xec] sm:$0xf]
    %v3377 = vld [vmem:[#allocation10 + $0xf0] sm:$0xf]
    %v3378 = vld [vmem:[#allocation10 + $0xf4] sm:$0xf]
    %v3379 = vld [vmem:[#allocation10 + $0xf8] sm:$0xf]
    %v3380 = vld [vmem:[#allocation10 + $0xfc] sm:$0xf]
    %v3381 = vld [vmem:[#allocation10 + $0x100] sm:$0xf]
    %v3382 = vld [vmem:[#allocation10 + $0x104] sm:$0xf]
    %v3383 = vld [vmem:[#allocation10 + $0x108] sm:$0xf]
    %v3384 = vld [vmem:[#allocation10 + $0x10c] sm:$0xf]
    %v3385 = vld [vmem:[#allocation10 + $0x110] sm:$0xf]
    %v3386 = vld [vmem:[#allocation10 + $0x114] sm:$0xf]
    %v3387 = vld [vmem:[#allocation10 + $0x118] sm:$0xf]
    %v3388 = vld [vmem:[#allocation10 + $0x11c] sm:$0xf]
    %v3389 = vld [vmem:[#allocation10 + $0x120] sm:$0xf]
    %v3390 = vld [vmem:[#allocation10 + $0x124] sm:$0xf]
    %v3391 = vld [vmem:[#allocation10 + $0x128] sm:$0xf]
    %v3392 = vld [vmem:[#allocation10 + $0x12c] sm:$0xf]
    %v3393 = vld [vmem:[#allocation10 + $0x130] sm:$0xf]
    %v3394 = vld [vmem:[#allocation10 + $0x134] sm:$0xf]
    %v3395 = vld [vmem:[#allocation10 + $0x138] sm:$0xf]
    %v3396 = vld [vmem:[#allocation10 + $0x13c] sm:$0xf]
    %v3397 = vld [vmem:[#allocation10 + $0x140] sm:$0xf]
    %v3398 = vld [vmem:[#allocation10 + $0x144] sm:$0xf]
    %v3399 = vld [vmem:[#allocation10 + $0x148] sm:$0xf]
    %v3400 = vld [vmem:[#allocation10 + $0x14c] sm:$0xf]
    %v3401 = vld [vmem:[#allocation10 + $0x150] sm:$0xf]
    %v3402 = vld [vmem:[#allocation10 + $0x154] sm:$0xf]
    %v3403 = vld [vmem:[#allocation10 + $0x158] sm:$0xf]
    %v3404 = vld [vmem:[#allocation10 + $0x15c] sm:$0xf]
    %v3405 = vld [vmem:[#allocation10 + $0x160] sm:$0xf]
    %v3406 = vld [vmem:[#allocation10 + $0x164] sm:$0xf]
    %v3407 = vld [vmem:[#allocation10 + $0x168] sm:$0xf]
    %v3408 = vld [vmem:[#allocation10 + $0x16c] sm:$0xf]
    %v3409 = vld [vmem:[#allocation10 + $0x170] sm:$0xf]
    %v3410 = vld [vmem:[#allocation10 + $0x174] sm:$0xf]
    %v3411 = vld [vmem:[#allocation10 + $0x178] sm:$0xf]
    %v3412 = vld [vmem:[#allocation10 + $0x17c] sm:$0xf]
    %v3413 = vld [vmem:[#allocation10 + $0x180] sm:$0xf]
    %v3414 = vld [vmem:[#allocation10 + $0x184] sm:$0xf]
    %v3415 = vld [vmem:[#allocation10 + $0x188] sm:$0xf]
    %v3416 = vld [vmem:[#allocation10 + $0x18c] sm:$0xf]
    %v3417 = vld [vmem:[#allocation10 + $0x190] sm:$0xf]
    %v3418 = vld [vmem:[#allocation10 + $0x194] sm:$0xf]
    %v3419 = vld [vmem:[#allocation10 + $0x198] sm:$0xf]
    %v3420 = vld [vmem:[#allocation10 + $0x19c] sm:$0xf]
    %v3421 = vld [vmem:[#allocation10 + $0x1a0] sm:$0xf]
    %v3422 = vld [vmem:[#allocation10 + $0x1a4] sm:$0xf]
    %v3423 = vld [vmem:[#allocation10 + $0x1a8] sm:$0xf]
    %v3424 = vld [vmem:[#allocation10 + $0x1ac] sm:$0xf]
    %v3425 = vld [vmem:[#allocation10 + $0x1b0] sm:$0xf]
    %v3426 = vld [vmem:[#allocation10 + $0x1b4] sm:$0xf]
    %v3427 = vld [vmem:[#allocation10 + $0x1b8] sm:$0xf]
    %v3428 = vld [vmem:[#allocation10 + $0x1bc] sm:$0xf]
    %v3429 = vld [vmem:[#allocation10 + $0x1c0] sm:$0xf]
    %v3430 = vld [vmem:[#allocation10 + $0x1c4] sm:$0xf]
    %v3431 = vld [vmem:[#allocation10 + $0x1c8] sm:$0xf]
    %v3432 = vld [vmem:[#allocation10 + $0x1cc] sm:$0xf]
    %v3433 = vld [vmem:[#allocation10 + $0x1d0] sm:$0xf]
    %v3434 = vld [vmem:[#allocation10 + $0x1d4] sm:$0xf]
    %v3435 = vld [vmem:[#allocation10 + $0x1d8] sm:$0xf]
    %v3436 = vld [vmem:[#allocation10 + $0x1dc] sm:$0xf]
    %v3437 = vld [vmem:[#allocation10 + $0x1e0] sm:$0xf]
    %v3438 = vld [vmem:[#allocation10 + $0x1e4] sm:$0xf]
    %v3439 = vld [vmem:[#allocation10 + $0x1e8] sm:$0xf]
    %v3440 = vld [vmem:[#allocation10 + $0x1ec] sm:$0xf]
    %v3441 = vld [vmem:[#allocation10 + $0x1f0] sm:$0xf]
    %v3442 = vld [vmem:[#allocation10 + $0x1f4] sm:$0xf]
    %v3443 = vld [vmem:[#allocation10 + $0x1f8] sm:$0xf]
    %v3444 = vld [vmem:[#allocation10 + $0x1fc] sm:$0xf]
    %v3445 = vld [vmem:[#allocation10 + $0x200] sm:$0xf]
    %v3446 = vld [vmem:[#allocation10 + $0x204] sm:$0xf]
    %v3447 = vld [vmem:[#allocation10 + $0x208] sm:$0xf]
    %v3448 = vld [vmem:[#allocation10 + $0x20c] sm:$0xf]
    %v3449 = vld [vmem:[#allocation10 + $0x210] sm:$0xf]
    %v3450 = vld [vmem:[#allocation10 + $0x214] sm:$0xf]
    %v3451 = vld [vmem:[#allocation10 + $0x218] sm:$0xf]
    %v3452 = vld [vmem:[#allocation10 + $0x21c] sm:$0xf]
    %v3453 = vld [vmem:[#allocation10 + $0x220] sm:$0xf]
    %v3454 = vld [vmem:[#allocation10 + $0x224] sm:$0xf]
    %v3455 = vld [vmem:[#allocation10 + $0x228] sm:$0xf]
    %v3456 = vld [vmem:[#allocation10 + $0x22c] sm:$0xf]
    %v3457 = vld [vmem:[#allocation10 + $0x230] sm:$0xf]
    %v3458 = vld [vmem:[#allocation10 + $0x234] sm:$0xf]
    %v3459 = vld [vmem:[#allocation10 + $0x238] sm:$0xf]
    %v3460 = vld [vmem:[#allocation10 + $0x23c] sm:$0xf]
    %v3461 = vld [vmem:[#allocation10 + $0x240] sm:$0xf]
    %v3462 = vld [vmem:[#allocation10 + $0x244] sm:$0xf]
    %v3463 = vld [vmem:[#allocation10 + $0x248] sm:$0xf]
    %v3464 = vld [vmem:[#allocation10 + $0x24c] sm:$0xf]
    %v3465 = vld [vmem:[#allocation10 + $0x250] sm:$0xf]
    %v3466 = vld [vmem:[#allocation10 + $0x254] sm:$0xf]
    %v3467 = vld [vmem:[#allocation10 + $0x258] sm:$0xf]
    %v3468 = vld [vmem:[#allocation10 + $0x25c] sm:$0xf]
    %v3469 = vld [vmem:[#allocation10 + $0x260] sm:$0xf]
    %v3470 = vld [vmem:[#allocation10 + $0x264] sm:$0xf]
    %v3471 = vld [vmem:[#allocation10 + $0x268] sm:$0xf]
    %v3472 = vld [vmem:[#allocation10 + $0x26c] sm:$0xf]
    %v3473 = vld [vmem:[#allocation10 + $0x270] sm:$0xf]
    %v3474 = vld [vmem:[#allocation10 + $0x274] sm:$0xf]
    %v3475 = vld [vmem:[#allocation10 + $0x278] sm:$0xf]
    %v3476 = vld [vmem:[#allocation10 + $0x27c] sm:$0xf]
    %v3477 = vld [vmem:[#allocation10 + $0x280] sm:$0xf]
    %v3478 = vld [vmem:[#allocation10 + $0x284] sm:$0xf]
    %v3479 = vld [vmem:[#allocation10 + $0x288] sm:$0xf]
    %v3480 = vld [vmem:[#allocation10 + $0x28c] sm:$0xf]
    %v3481 = vld [vmem:[#allocation10 + $0x290] sm:$0xf]
    %v3482 = vld [vmem:[#allocation10 + $0x294] sm:$0xf]
    %v3483 = vld [vmem:[#allocation10 + $0x298] sm:$0xf]
    %v3484 = vld [vmem:[#allocation10 + $0x29c] sm:$0xf]
    %v3485 = vld [vmem:[#allocation10 + $0x2a0] sm:$0xf]
    %v3486 = vld [vmem:[#allocation10 + $0x2a4] sm:$0xf]
    %v3487 = vld [vmem:[#allocation10 + $0x2a8] sm:$0xf]
    %v3488 = vld [vmem:[#allocation10 + $0x2ac] sm:$0xf]
    %v3489 = vld [vmem:[#allocation10 + $0x2b0] sm:$0xf]
    %v3490 = vld [vmem:[#allocation10 + $0x2b4] sm:$0xf]
    %v3491 = vld [vmem:[#allocation10 + $0x2b8] sm:$0xf]
    %v3492 = vld [vmem:[#allocation10 + $0x2bc] sm:$0xf]
    %v3493 = vld [vmem:[#allocation10 + $0x2c0] sm:$0xf]
    %v3494 = vld [vmem:[#allocation10 + $0x2c4] sm:$0xf]
    %v3495 = vld [vmem:[#allocation10 + $0x2c8] sm:$0xf]
    %v3496 = vld [vmem:[#allocation10 + $0x2cc] sm:$0xf]
    %v3497 = vld [vmem:[#allocation10 + $0x2d0] sm:$0xf]
    %v3498 = vld [vmem:[#allocation10 + $0x2d4] sm:$0xf]
    %v3499 = vld [vmem:[#allocation10 + $0x2d8] sm:$0xf]
    %v3500 = vld [vmem:[#allocation10 + $0x2dc] sm:$0xf]
    %v3501 = vld [vmem:[#allocation10 + $0x2e0] sm:$0xf]
    %v3502 = vld [vmem:[#allocation10 + $0x2e4] sm:$0xf]
    %v3503 = vld [vmem:[#allocation10 + $0x2e8] sm:$0xf]
    %v3504 = vld [vmem:[#allocation10 + $0x2ec] sm:$0xf]
    %v3505 = vld [vmem:[#allocation10 + $0x2f0] sm:$0xf]
    %v3506 = vld [vmem:[#allocation10 + $0x2f4] sm:$0xf]
    %v3507 = vld [vmem:[#allocation10 + $0x2f8] sm:$0xf]
    %v3508 = vld [vmem:[#allocation10 + $0x2fc] sm:$0xf]
    %v3509 = vld [vmem:[#allocation10 + $0x300] sm:$0xf]
    %v3510 = vld [vmem:[#allocation10 + $0x304] sm:$0xf]
    %v3511 = vld [vmem:[#allocation10 + $0x308] sm:$0xf]
    %v3512 = vld [vmem:[#allocation10 + $0x30c] sm:$0xf]
    %v3513 = vld [vmem:[#allocation10 + $0x310] sm:$0xf]
    %v3514 = vld [vmem:[#allocation10 + $0x314] sm:$0xf]
    %v3515 = vld [vmem:[#allocation10 + $0x318] sm:$0xf]
    %v3516 = vld [vmem:[#allocation10 + $0x31c] sm:$0xf]
    %v3517 = vld [vmem:[#allocation10 + $0x320] sm:$0xf]
    %v3518 = vld [vmem:[#allocation10 + $0x324] sm:$0xf]
    %v3519 = vld [vmem:[#allocation10 + $0x328] sm:$0xf]
    %v3520 = vld [vmem:[#allocation10 + $0x32c] sm:$0xf]
    %v3521 = vld [vmem:[#allocation10 + $0x330] sm:$0xf]
    %v3522 = vld [vmem:[#allocation10 + $0x334] sm:$0xf]
    %v3523 = vld [vmem:[#allocation10 + $0x338] sm:$0xf]
    %v3524 = vld [vmem:[#allocation10 + $0x33c] sm:$0xf]
    %v3525 = vld [vmem:[#allocation10 + $0x340] sm:$0xf]
    %v3526 = vld [vmem:[#allocation10 + $0x344] sm:$0xf]
    %v3527 = vld [vmem:[#allocation10 + $0x348] sm:$0xf]
    %v3528 = vld [vmem:[#allocation10 + $0x34c] sm:$0xf]
    %v3529 = vld [vmem:[#allocation10 + $0x350] sm:$0xf]
    %v3530 = vld [vmem:[#allocation10 + $0x354] sm:$0xf]
    %v3531 = vld [vmem:[#allocation10 + $0x358] sm:$0xf]
    %v3532 = vld [vmem:[#allocation10 + $0x35c] sm:$0xf]
    %v3533 = vld [vmem:[#allocation10 + $0x360] sm:$0xf]
    %v3534 = vld [vmem:[#allocation10 + $0x364] sm:$0xf]
    %v3535 = vld [vmem:[#allocation10 + $0x368] sm:$0xf]
    %v3536 = vld [vmem:[#allocation10 + $0x36c] sm:$0xf]
    %v3537 = vld [vmem:[#allocation10 + $0x370] sm:$0xf]
    %v3538 = vld [vmem:[#allocation10 + $0x374] sm:$0xf]
    %v3539 = vld [vmem:[#allocation10 + $0x378] sm:$0xf]
    %v3540 = vld [vmem:[#allocation10 + $0x37c] sm:$0xf]
    %v3541 = vld [vmem:[#allocation10 + $0x380] sm:$0xf]
    %v3542 = vld [vmem:[#allocation10 + $0x384] sm:$0xf]
    %v3543 = vld [vmem:[#allocation10 + $0x388] sm:$0xf]
    %v3544 = vld [vmem:[#allocation10 + $0x38c] sm:$0xf]
    %v3545 = vld [vmem:[#allocation10 + $0x390] sm:$0xf]
    %v3546 = vld [vmem:[#allocation10 + $0x394] sm:$0xf]
    %v3547 = vld [vmem:[#allocation10 + $0x398] sm:$0xf]
    %v3548 = vld [vmem:[#allocation10 + $0x39c] sm:$0xf]
    %v3549 = vld [vmem:[#allocation10 + $0x3a0] sm:$0xf]
    %v3550 = vld [vmem:[#allocation10 + $0x3a4] sm:$0xf]
    %v3551 = vld [vmem:[#allocation10 + $0x3a8] sm:$0xf]
    %v3552 = vld [vmem:[#allocation10 + $0x3ac] sm:$0xf]
    %v3553 = vld [vmem:[#allocation10 + $0x3b0] sm:$0xf]
    %v3554 = vld [vmem:[#allocation10 + $0x3b4] sm:$0xf]
    %v3555 = vld [vmem:[#allocation10 + $0x3b8] sm:$0xf]
    %v3556 = vld [vmem:[#allocation10 + $0x3bc] sm:$0xf]
    %v3557 = vld [vmem:[#allocation10 + $0x3c0] sm:$0xf]
    %v3558 = vld [vmem:[#allocation10 + $0x3c4] sm:$0xf]
    %v3559 = vld [vmem:[#allocation10 + $0x3c8] sm:$0xf]
    %v3560 = vld [vmem:[#allocation10 + $0x3cc] sm:$0xf]
    %v3561 = vld [vmem:[#allocation10 + $0x3d0] sm:$0xf]
    %v3562 = vld [vmem:[#allocation10 + $0x3d4] sm:$0xf]
    %v3563 = vld [vmem:[#allocation10 + $0x3d8] sm:$0xf]
    %v3564 = vld [vmem:[#allocation10 + $0x3dc] sm:$0xf]
    %v3565 = vld [vmem:[#allocation10 + $0x3e0] sm:$0xf]
    %v3566 = vld [vmem:[#allocation10 + $0x3e4] sm:$0xf]
    %v3567 = vld [vmem:[#allocation10 + $0x3e8] sm:$0xf]
    %v3568 = vld [vmem:[#allocation10 + $0x3ec] sm:$0xf]
    %v3569 = vld [vmem:[#allocation10 + $0x3f0] sm:$0xf]
    %v3570 = vld [vmem:[#allocation10 + $0x3f4] sm:$0xf]
    %v3571 = vld [vmem:[#allocation10 + $0x3f8] sm:$0xf]
    %v3572 = vld [vmem:[#allocation10 + $0x3fc] sm:$0xf]
    %v3829 = vunpack.c.l.b16 %v3317
    %v3830 = vunpack.c.l.b16 %v3318
    %v3831 = vunpack.c.l.b16 %v3319
    %v3832 = vunpack.c.l.b16 %v3320
    %v3833 = vunpack.c.l.b16 %v3321
    %v3834 = vunpack.c.l.b16 %v3322
    %v3835 = vunpack.c.l.b16 %v3323
    %v3836 = vunpack.c.l.b16 %v3324
    %v3837 = vunpack.c.l.b16 %v3325
    %v3838 = vunpack.c.l.b16 %v3326
    %v3839 = vunpack.c.l.b16 %v3327
    %v3840 = vunpack.c.l.b16 %v3328
    %v3841 = vunpack.c.l.b16 %v3329
    %v3842 = vunpack.c.l.b16 %v3330
    %v3843 = vunpack.c.l.b16 %v3331
    %v3844 = vunpack.c.l.b16 %v3332
    %v3845 = vunpack.c.l.b16 %v3333
    %v3846 = vunpack.c.l.b16 %v3334
    %v3847 = vunpack.c.l.b16 %v3335
    %v3848 = vunpack.c.l.b16 %v3336
    %v3849 = vunpack.c.l.b16 %v3337
    %v3850 = vunpack.c.l.b16 %v3338
    %v3851 = vunpack.c.l.b16 %v3339
    %v3852 = vunpack.c.l.b16 %v3340
    %v3853 = vunpack.c.l.b16 %v3341
    %v3854 = vunpack.c.l.b16 %v3342
    %v3855 = vunpack.c.l.b16 %v3343
    %v3856 = vunpack.c.l.b16 %v3344
    %v3857 = vunpack.c.l.b16 %v3345
    %v3858 = vunpack.c.l.b16 %v3346
    %v3859 = vunpack.c.l.b16 %v3347
    %v3860 = vunpack.c.l.b16 %v3348
    %v3861 = vunpack.c.l.b16 %v3349
    %v3862 = vunpack.c.l.b16 %v3350
    %v3863 = vunpack.c.l.b16 %v3351
    %v3864 = vunpack.c.l.b16 %v3352
    %v3865 = vunpack.c.l.b16 %v3353
    %v3866 = vunpack.c.l.b16 %v3354
    %v3867 = vunpack.c.l.b16 %v3355
    %v3868 = vunpack.c.l.b16 %v3356
    %v3869 = vunpack.c.l.b16 %v3357
    %v3870 = vunpack.c.l.b16 %v3358
    %v3871 = vunpack.c.l.b16 %v3359
    %v3872 = vunpack.c.l.b16 %v3360
    %v3873 = vunpack.c.l.b16 %v3361
    %v3874 = vunpack.c.l.b16 %v3362
    %v3875 = vunpack.c.l.b16 %v3363
    %v3876 = vunpack.c.l.b16 %v3364
    %v3877 = vunpack.c.l.b16 %v3365
    %v3878 = vunpack.c.l.b16 %v3366
    %v3879 = vunpack.c.l.b16 %v3367
    %v3880 = vunpack.c.l.b16 %v3368
    %v3881 = vunpack.c.l.b16 %v3369
    %v3882 = vunpack.c.l.b16 %v3370
    %v3883 = vunpack.c.l.b16 %v3371
    %v3884 = vunpack.c.l.b16 %v3372
    %v3885 = vunpack.c.l.b16 %v3373
    %v3886 = vunpack.c.l.b16 %v3374
    %v3887 = vunpack.c.l.b16 %v3375
    %v3888 = vunpack.c.l.b16 %v3376
    %v3889 = vunpack.c.l.b16 %v3377
    %v3890 = vunpack.c.l.b16 %v3378
    %v3891 = vunpack.c.l.b16 %v3379
    %v3892 = vunpack.c.l.b16 %v3380
    %v3893 = vunpack.c.l.b16 %v3381
    %v3894 = vunpack.c.l.b16 %v3382
    %v3895 = vunpack.c.l.b16 %v3383
    %v3896 = vunpack.c.l.b16 %v3384
    %v3897 = vunpack.c.l.b16 %v3385
    %v3898 = vunpack.c.l.b16 %v3386
    %v3899 = vunpack.c.l.b16 %v3387
    %v3900 = vunpack.c.l.b16 %v3388
    %v3901 = vunpack.c.l.b16 %v3389
    %v3902 = vunpack.c.l.b16 %v3390
    %v3903 = vunpack.c.l.b16 %v3391
    %v3904 = vunpack.c.l.b16 %v3392
    %v3905 = vunpack.c.l.b16 %v3393
    %v3906 = vunpack.c.l.b16 %v3394
    %v3907 = vunpack.c.l.b16 %v3395
    %v3908 = vunpack.c.l.b16 %v3396
    %v3909 = vunpack.c.l.b16 %v3397
    %v3910 = vunpack.c.l.b16 %v3398
    %v3911 = vunpack.c.l.b16 %v3399
    %v3912 = vunpack.c.l.b16 %v3400
    %v3913 = vunpack.c.l.b16 %v3401
    %v3914 = vunpack.c.l.b16 %v3402
    %v3915 = vunpack.c.l.b16 %v3403
    %v3916 = vunpack.c.l.b16 %v3404
    %v3917 = vunpack.c.l.b16 %v3405
    %v3918 = vunpack.c.l.b16 %v3406
    %v3919 = vunpack.c.l.b16 %v3407
    %v3920 = vunpack.c.l.b16 %v3408
    %v3921 = vunpack.c.l.b16 %v3409
    %v3922 = vunpack.c.l.b16 %v3410
    %v3923 = vunpack.c.l.b16 %v3411
    %v3924 = vunpack.c.l.b16 %v3412
    %v3925 = vunpack.c.l.b16 %v3413
    %v3926 = vunpack.c.l.b16 %v3414
    %v3927 = vunpack.c.l.b16 %v3415
    %v3928 = vunpack.c.l.b16 %v3416
    %v3929 = vunpack.c.l.b16 %v3417
    %v3930 = vunpack.c.l.b16 %v3418
    %v3931 = vunpack.c.l.b16 %v3419
    %v3932 = vunpack.c.l.b16 %v3420
    %v3933 = vunpack.c.l.b16 %v3421
    %v3934 = vunpack.c.l.b16 %v3422
    %v3935 = vunpack.c.l.b16 %v3423
    %v3936 = vunpack.c.l.b16 %v3424
    %v3937 = vunpack.c.l.b16 %v3425
    %v3938 = vunpack.c.l.b16 %v3426
    %v3939 = vunpack.c.l.b16 %v3427
    %v3940 = vunpack.c.l.b16 %v3428
    %v3941 = vunpack.c.l.b16 %v3429
    %v3942 = vunpack.c.l.b16 %v3430
    %v3943 = vunpack.c.l.b16 %v3431
    %v3944 = vunpack.c.l.b16 %v3432
    %v3945 = vunpack.c.l.b16 %v3433
    %v3946 = vunpack.c.l.b16 %v3434
    %v3947 = vunpack.c.l.b16 %v3435
    %v3948 = vunpack.c.l.b16 %v3436
    %v3949 = vunpack.c.l.b16 %v3437
    %v3950 = vunpack.c.l.b16 %v3438
    %v3951 = vunpack.c.l.b16 %v3439
    %v3952 = vunpack.c.l.b16 %v3440
    %v3953 = vunpack.c.l.b16 %v3441
    %v3954 = vunpack.c.l.b16 %v3442
    %v3955 = vunpack.c.l.b16 %v3443
    %v3956 = vunpack.c.l.b16 %v3444
    %v3957 = vunpack.c.l.b16 %v3445
    %v3958 = vunpack.c.l.b16 %v3446
    %v3959 = vunpack.c.l.b16 %v3447
    %v3960 = vunpack.c.l.b16 %v3448
    %v3961 = vunpack.c.l.b16 %v3449
    %v3962 = vunpack.c.l.b16 %v3450
    %v3963 = vunpack.c.l.b16 %v3451
    %v3964 = vunpack.c.l.b16 %v3452
    %v3965 = vunpack.c.l.b16 %v3453
    %v3966 = vunpack.c.l.b16 %v3454
    %v3967 = vunpack.c.l.b16 %v3455
    %v3968 = vunpack.c.l.b16 %v3456
    %v3969 = vunpack.c.l.b16 %v3457
    %v3970 = vunpack.c.l.b16 %v3458
    %v3971 = vunpack.c.l.b16 %v3459
    %v3972 = vunpack.c.l.b16 %v3460
    %v3973 = vunpack.c.l.b16 %v3461
    %v3974 = vunpack.c.l.b16 %v3462
    %v3975 = vunpack.c.l.b16 %v3463
    %v3976 = vunpack.c.l.b16 %v3464
    %v3977 = vunpack.c.l.b16 %v3465
    %v3978 = vunpack.c.l.b16 %v3466
    %v3979 = vunpack.c.l.b16 %v3467
    %v3980 = vunpack.c.l.b16 %v3468
    %v3981 = vunpack.c.l.b16 %v3469
    %v3982 = vunpack.c.l.b16 %v3470
    %v3983 = vunpack.c.l.b16 %v3471
    %v3984 = vunpack.c.l.b16 %v3472
    %v3985 = vunpack.c.l.b16 %v3473
    %v3986 = vunpack.c.l.b16 %v3474
    %v3987 = vunpack.c.l.b16 %v3475
    %v3988 = vunpack.c.l.b16 %v3476
    %v3989 = vunpack.c.l.b16 %v3477
    %v3990 = vunpack.c.l.b16 %v3478
    %v3991 = vunpack.c.l.b16 %v3479
    %v3992 = vunpack.c.l.b16 %v3480
    %v3993 = vunpack.c.l.b16 %v3481
    %v3994 = vunpack.c.l.b16 %v3482
    %v3995 = vunpack.c.l.b16 %v3483
    %v3996 = vunpack.c.l.b16 %v3484
    %v3997 = vunpack.c.l.b16 %v3485
    %v3998 = vunpack.c.l.b16 %v3486
    %v3999 = vunpack.c.l.b16 %v3487
    %v4000 = vunpack.c.l.b16 %v3488
    %v4001 = vunpack.c.l.b16 %v3489
    %v4002 = vunpack.c.l.b16 %v3490
    %v4003 = vunpack.c.l.b16 %v3491
    %v4004 = vunpack.c.l.b16 %v3492
    %v4005 = vunpack.c.l.b16 %v3493
    %v4006 = vunpack.c.l.b16 %v3494
    %v4007 = vunpack.c.l.b16 %v3495
    %v4008 = vunpack.c.l.b16 %v3496
    %v4009 = vunpack.c.l.b16 %v3497
    %v4010 = vunpack.c.l.b16 %v3498
    %v4011 = vunpack.c.l.b16 %v3499
    %v4012 = vunpack.c.l.b16 %v3500
    %v4013 = vunpack.c.l.b16 %v3501
    %v4014 = vunpack.c.l.b16 %v3502
    %v4015 = vunpack.c.l.b16 %v3503
    %v4016 = vunpack.c.l.b16 %v3504
    %v4017 = vunpack.c.l.b16 %v3505
    %v4018 = vunpack.c.l.b16 %v3506
    %v4019 = vunpack.c.l.b16 %v3507
    %v4020 = vunpack.c.l.b16 %v3508
    %v4021 = vunpack.c.l.b16 %v3509
    %v4022 = vunpack.c.l.b16 %v3510
    %v4023 = vunpack.c.l.b16 %v3511
    %v4024 = vunpack.c.l.b16 %v3512
    %v4025 = vunpack.c.l.b16 %v3513
    %v4026 = vunpack.c.l.b16 %v3514
    %v4027 = vunpack.c.l.b16 %v3515
    %v4028 = vunpack.c.l.b16 %v3516
    %v4029 = vunpack.c.l.b16 %v3517
    %v4030 = vunpack.c.l.b16 %v3518
    %v4031 = vunpack.c.l.b16 %v3519
    %v4032 = vunpack.c.l.b16 %v3520
    %v4033 = vunpack.c.l.b16 %v3521
    %v4034 = vunpack.c.l.b16 %v3522
    %v4035 = vunpack.c.l.b16 %v3523
    %v4036 = vunpack.c.l.b16 %v3524
    %v4037 = vunpack.c.l.b16 %v3525
    %v4038 = vunpack.c.l.b16 %v3526
    %v4039 = vunpack.c.l.b16 %v3527
    %v4040 = vunpack.c.l.b16 %v3528
    %v4041 = vunpack.c.l.b16 %v3529
    %v4042 = vunpack.c.l.b16 %v3530
    %v4043 = vunpack.c.l.b16 %v3531
    %v4044 = vunpack.c.l.b16 %v3532
    %v4045 = vunpack.c.l.b16 %v3533
    %v4046 = vunpack.c.l.b16 %v3534
    %v4047 = vunpack.c.l.b16 %v3535
    %v4048 = vunpack.c.l.b16 %v3536
    %v4049 = vunpack.c.l.b16 %v3537
    %v4050 = vunpack.c.l.b16 %v3538
    %v4051 = vunpack.c.l.b16 %v3539
    %v4052 = vunpack.c.l.b16 %v3540
    %v4053 = vunpack.c.l.b16 %v3541
    %v4054 = vunpack.c.l.b16 %v3542
    %v4055 = vunpack.c.l.b16 %v3543
    %v4056 = vunpack.c.l.b16 %v3544
    %v4057 = vunpack.c.l.b16 %v3545
    %v4058 = vunpack.c.l.b16 %v3546
    %v4059 = vunpack.c.l.b16 %v3547
    %v4060 = vunpack.c.l.b16 %v3548
    %v4061 = vunpack.c.l.b16 %v3549
    %v4062 = vunpack.c.l.b16 %v3550
    %v4063 = vunpack.c.l.b16 %v3551
    %v4064 = vunpack.c.l.b16 %v3552
    %v4065 = vunpack.c.l.b16 %v3553
    %v4066 = vunpack.c.l.b16 %v3554
    %v4067 = vunpack.c.l.b16 %v3555
    %v4068 = vunpack.c.l.b16 %v3556
    %v4069 = vunpack.c.l.b16 %v3557
    %v4070 = vunpack.c.l.b16 %v3558
    %v4071 = vunpack.c.l.b16 %v3559
    %v4072 = vunpack.c.l.b16 %v3560
    %v4073 = vunpack.c.l.b16 %v3561
    %v4074 = vunpack.c.l.b16 %v3562
    %v4075 = vunpack.c.l.b16 %v3563
    %v4076 = vunpack.c.l.b16 %v3564
    %v4077 = vunpack.c.l.b16 %v3565
    %v4078 = vunpack.c.l.b16 %v3566
    %v4079 = vunpack.c.l.b16 %v3567
    %v4080 = vunpack.c.l.b16 %v3568
    %v4081 = vunpack.c.l.b16 %v3569
    %v4082 = vunpack.c.l.b16 %v3570
    %v4083 = vunpack.c.l.b16 %v3571
    %v4084 = vunpack.c.l.b16 %v3572
    %v4085 = vpack.c.b16 %v3830, %v3829
    %v4086 = vpack.c.b16 %v3832, %v3831
    %v4087 = vpack.c.b16 %v3834, %v3833
    %v4088 = vpack.c.b16 %v3836, %v3835
    %v4089 = vpack.c.b16 %v3838, %v3837
    %v4090 = vpack.c.b16 %v3840, %v3839
    %v4091 = vpack.c.b16 %v3842, %v3841
    %v4092 = vpack.c.b16 %v3844, %v3843
    %v4093 = vpack.c.b16 %v3846, %v3845
    %v4094 = vpack.c.b16 %v3848, %v3847
    %v4095 = vpack.c.b16 %v3850, %v3849
    %v4096 = vpack.c.b16 %v3852, %v3851
    %v4097 = vpack.c.b16 %v3854, %v3853
    %v4098 = vpack.c.b16 %v3856, %v3855
    %v4099 = vpack.c.b16 %v3858, %v3857
    %v4100 = vpack.c.b16 %v3860, %v3859
    %v4101 = vpack.c.b16 %v3862, %v3861
    %v4102 = vpack.c.b16 %v3864, %v3863
    %v4103 = vpack.c.b16 %v3866, %v3865
    %v4104 = vpack.c.b16 %v3868, %v3867
    %v4105 = vpack.c.b16 %v3870, %v3869
    %v4106 = vpack.c.b16 %v3872, %v3871
    %v4107 = vpack.c.b16 %v3874, %v3873
    %v4108 = vpack.c.b16 %v3876, %v3875
    %v4109 = vpack.c.b16 %v3878, %v3877
    %v4110 = vpack.c.b16 %v3880, %v3879
    %v4111 = vpack.c.b16 %v3882, %v3881
    %v4112 = vpack.c.b16 %v3884, %v3883
    %v4113 = vpack.c.b16 %v3886, %v3885
    %v4114 = vpack.c.b16 %v3888, %v3887
    %v4115 = vpack.c.b16 %v3890, %v3889
    %v4116 = vpack.c.b16 %v3892, %v3891
    %v4117 = vpack.c.b16 %v3894, %v3893
    %v4118 = vpack.c.b16 %v3896, %v3895
    %v4119 = vpack.c.b16 %v3898, %v3897
    %v4120 = vpack.c.b16 %v3900, %v3899
    %v4121 = vpack.c.b16 %v3902, %v3901
    %v4122 = vpack.c.b16 %v3904, %v3903
    %v4123 = vpack.c.b16 %v3906, %v3905
    %v4124 = vpack.c.b16 %v3908, %v3907
    %v4125 = vpack.c.b16 %v3910, %v3909
    %v4126 = vpack.c.b16 %v3912, %v3911
    %v4127 = vpack.c.b16 %v3914, %v3913
    %v4128 = vpack.c.b16 %v3916, %v3915
    %v4129 = vpack.c.b16 %v3918, %v3917
    %v4130 = vpack.c.b16 %v3920, %v3919
    %v4131 = vpack.c.b16 %v3922, %v3921
    %v4132 = vpack.c.b16 %v3924, %v3923
    %v4133 = vpack.c.b16 %v3926, %v3925
    %v4134 = vpack.c.b16 %v3928, %v3927
    %v4135 = vpack.c.b16 %v3930, %v3929
    %v4136 = vpack.c.b16 %v3932, %v3931
    %v4137 = vpack.c.b16 %v3934, %v3933
    %v4138 = vpack.c.b16 %v3936, %v3935
    %v4139 = vpack.c.b16 %v3938, %v3937
    %v4140 = vpack.c.b16 %v3940, %v3939
    %v4141 = vpack.c.b16 %v3942, %v3941
    %v4142 = vpack.c.b16 %v3944, %v3943
    %v4143 = vpack.c.b16 %v3946, %v3945
    %v4144 = vpack.c.b16 %v3948, %v3947
    %v4145 = vpack.c.b16 %v3950, %v3949
    %v4146 = vpack.c.b16 %v3952, %v3951
    %v4147 = vpack.c.b16 %v3954, %v3953
    %v4148 = vpack.c.b16 %v3956, %v3955
    %v4149 = vpack.c.b16 %v3958, %v3957
    %v4150 = vpack.c.b16 %v3960, %v3959
    %v4151 = vpack.c.b16 %v3962, %v3961
    %v4152 = vpack.c.b16 %v3964, %v3963
    %v4153 = vpack.c.b16 %v3966, %v3965
    %v4154 = vpack.c.b16 %v3968, %v3967
    %v4155 = vpack.c.b16 %v3970, %v3969
    %v4156 = vpack.c.b16 %v3972, %v3971
    %v4157 = vpack.c.b16 %v3974, %v3973
    %v4158 = vpack.c.b16 %v3976, %v3975
    %v4159 = vpack.c.b16 %v3978, %v3977
    %v4160 = vpack.c.b16 %v3980, %v3979
    %v4161 = vpack.c.b16 %v3982, %v3981
    %v4162 = vpack.c.b16 %v3984, %v3983
    %v4163 = vpack.c.b16 %v3986, %v3985
    %v4164 = vpack.c.b16 %v3988, %v3987
    %v4165 = vpack.c.b16 %v3990, %v3989
    %v4166 = vpack.c.b16 %v3992, %v3991
    %v4167 = vpack.c.b16 %v3994, %v3993
    %v4168 = vpack.c.b16 %v3996, %v3995
    %v4169 = vpack.c.b16 %v3998, %v3997
    %v4170 = vpack.c.b16 %v4000, %v3999
    %v4171 = vpack.c.b16 %v4002, %v4001
    %v4172 = vpack.c.b16 %v4004, %v4003
    %v4173 = vpack.c.b16 %v4006, %v4005
    %v4174 = vpack.c.b16 %v4008, %v4007
    %v4175 = vpack.c.b16 %v4010, %v4009
    %v4176 = vpack.c.b16 %v4012, %v4011
    %v4177 = vpack.c.b16 %v4014, %v4013
    %v4178 = vpack.c.b16 %v4016, %v4015
    %v4179 = vpack.c.b16 %v4018, %v4017
    %v4180 = vpack.c.b16 %v4020, %v4019
    %v4181 = vpack.c.b16 %v4022, %v4021
    %v4182 = vpack.c.b16 %v4024, %v4023
    %v4183 = vpack.c.b16 %v4026, %v4025
    %v4184 = vpack.c.b16 %v4028, %v4027
    %v4185 = vpack.c.b16 %v4030, %v4029
    %v4186 = vpack.c.b16 %v4032, %v4031
    %v4187 = vpack.c.b16 %v4034, %v4033
    %v4188 = vpack.c.b16 %v4036, %v4035
    %v4189 = vpack.c.b16 %v4038, %v4037
    %v4190 = vpack.c.b16 %v4040, %v4039
    %v4191 = vpack.c.b16 %v4042, %v4041
    %v4192 = vpack.c.b16 %v4044, %v4043
    %v4193 = vpack.c.b16 %v4046, %v4045
    %v4194 = vpack.c.b16 %v4048, %v4047
    %v4195 = vpack.c.b16 %v4050, %v4049
    %v4196 = vpack.c.b16 %v4052, %v4051
    %v4197 = vpack.c.b16 %v4054, %v4053
    %v4198 = vpack.c.b16 %v4056, %v4055
    %v4199 = vpack.c.b16 %v4058, %v4057
    %v4200 = vpack.c.b16 %v4060, %v4059
    %v4201 = vpack.c.b16 %v4062, %v4061
    %v4202 = vpack.c.b16 %v4064, %v4063
    %v4203 = vpack.c.b16 %v4066, %v4065
    %v4204 = vpack.c.b16 %v4068, %v4067
    %v4205 = vpack.c.b16 %v4070, %v4069
    %v4206 = vpack.c.b16 %v4072, %v4071
    %v4207 = vpack.c.b16 %v4074, %v4073
    %v4208 = vpack.c.b16 %v4076, %v4075
    %v4209 = vpack.c.b16 %v4078, %v4077
    %v4210 = vpack.c.b16 %v4080, %v4079
    %v4211 = vpack.c.b16 %v4082, %v4081
    %v4212 = vpack.c.b16 %v4084, %v4083
    %4341 = vmatprep.subr.bf16.mxu0 0
    %4342 = vmatpush1.bf16.msra.mxu0 %v4085
    %4343 = vmatprep.subr.bf16.mxu0 0
    %4344 = vmatpush1.bf16.msra.mxu0 %v4086
    %4345 = vmatprep.subr.bf16.mxu0 0
    %4346 = vmatpush1.bf16.msra.mxu0 %v4087
    %4347 = vmatprep.subr.bf16.mxu0 0
    %4348 = vmatpush1.bf16.msra.mxu0 %v4088
    %4349 = vmatprep.subr.bf16.mxu0 0
    %4350 = vmatpush1.bf16.msra.mxu0 %v4089
    %4351 = vmatprep.subr.bf16.mxu0 0
    %4352 = vmatpush1.bf16.msra.mxu0 %v4090
    %4353 = vmatprep.subr.bf16.mxu0 0
    %4354 = vmatpush1.bf16.msra.mxu0 %v4091
    %4355 = vmatprep.subr.bf16.mxu0 0
    %4356 = vmatpush1.bf16.msra.mxu0 %v4092
    %4357 = vmatprep.subr.bf16.mxu0 0
    %4358 = vmatpush1.bf16.msra.mxu0 %v4093
    %4359 = vmatprep.subr.bf16.mxu0 0
    %4360 = vmatpush1.bf16.msra.mxu0 %v4094
    %4361 = vmatprep.subr.bf16.mxu0 0
    %4362 = vmatpush1.bf16.msra.mxu0 %v4095
    %4363 = vmatprep.subr.bf16.mxu0 0
    %4364 = vmatpush1.bf16.msra.mxu0 %v4096
    %4365 = vmatprep.subr.bf16.mxu0 0
    %4366 = vmatpush1.bf16.msra.mxu0 %v4097
    %4367 = vmatprep.subr.bf16.mxu0 0
    %4368 = vmatpush1.bf16.msra.mxu0 %v4098
    %4369 = vmatprep.subr.bf16.mxu0 0
    %4370 = vmatpush1.bf16.msra.mxu0 %v4099
    %4371 = vmatprep.subr.bf16.mxu0 0
    %4372 = vmatpush1.bf16.msra.mxu0 %v4100
    %4373 = vmatprep.mubr.bf16.mxu0 %v3302
    %4374 = vmatmul.mubr.bf16.gmra.mrb[0].mxu0 %v3301
    %v4375 = vpop.f32.mrb[0].mxu0
    %v4376 = vadd.f32 %v1034, %v4375
    %v4377 = vpop.f32.mrb[0].mxu0
    %v4378 = vpop.f32.mrb[0].mxu0
    %v4379 = vadd.f32 %v1041, %v4378
    %v4380 = vpop.f32.mrb[0].mxu0
    %4381 = vdwg.mxu0
    %4382 = vmatprep.subr.bf16.mxu0 0
    %4383 = vmatpush1.bf16.msra.mxu0 %v4101
    %4384 = vmatprep.subr.bf16.mxu0 0
    %4385 = vmatpush1.bf16.msra.mxu0 %v4102
    %4386 = vmatprep.subr.bf16.mxu0 0
    %4387 = vmatpush1.bf16.msra.mxu0 %v4103
    %4388 = vmatprep.subr.bf16.mxu0 0
    %4389 = vmatpush1.bf16.msra.mxu0 %v4104
    %4390 = vmatprep.subr.bf16.mxu0 0
    %4391 = vmatpush1.bf16.msra.mxu0 %v4105
    %4392 = vmatprep.subr.bf16.mxu0 0
    %4393 = vmatpush1.bf16.msra.mxu0 %v4106
    %4394 = vmatprep.subr.bf16.mxu0 0
    %4395 = vmatpush1.bf16.msra.mxu0 %v4107
    %4396 = vmatprep.subr.bf16.mxu0 0
    %4397 = vmatpush1.bf16.msra.mxu0 %v4108
    %4398 = vmatprep.subr.bf16.mxu0 0
    %4399 = vmatpush1.bf16.msra.mxu0 %v4109
    %4400 = vmatprep.subr.bf16.mxu0 0
    %4401 = vmatpush1.bf16.msra.mxu0 %v4110
    %4402 = vmatprep.subr.bf16.mxu0 0
    %4403 = vmatpush1.bf16.msra.mxu0 %v4111
    %4404 = vmatprep.subr.bf16.mxu0 0
    %4405 = vmatpush1.bf16.msra.mxu0 %v4112
    %4406 = vmatprep.subr.bf16.mxu0 0
    %4407 = vmatpush1.bf16.msra.mxu0 %v4113
    %4408 = vmatprep.subr.bf16.mxu0 0
    %4409 = vmatpush1.bf16.msra.mxu0 %v4114
    %4410 = vmatprep.subr.bf16.mxu0 0
    %4411 = vmatpush1.bf16.msra.mxu0 %v4115
    %4412 = vmatprep.subr.bf16.mxu0 0
    %4413 = vmatpush1.bf16.msra.mxu0 %v4116
    %4414 = vmatprep.mubr.bf16.mxu0 %v3304
    %4415 = vmatmul.mubr.bf16.gmra.mrb[0].mxu0 %v3303
    %v4416 = vpop.f32.mrb[0].mxu0
    %v4417 = vadd.f32 %v4376, %v4416
    %v4418 = vpop.f32.mrb[0].mxu0
    %v4419 = vpop.f32.mrb[0].mxu0
    %v4420 = vadd.f32 %v4379, %v4419
    %v4421 = vpop.f32.mrb[0].mxu0
    %4422 = vdwg.mxu0
    %4423 = vmatprep.subr.bf16.mxu0 0
    %4424 = vmatpush1.bf16.msra.mxu0 %v4117
    %4425 = vmatprep.subr.bf16.mxu0 0
    %4426 = vmatpush1.bf16.msra.mxu0 %v4118
    %4427 = vmatprep.subr.bf16.mxu0 0
    %4428 = vmatpush1.bf16.msra.mxu0 %v4119
    %4429 = vmatprep.subr.bf16.mxu0 0
    %4430 = vmatpush1.bf16.msra.mxu0 %v4120
    %4431 = vmatprep.subr.bf16.mxu0 0
    %4432 = vmatpush1.bf16.msra.mxu0 %v4121
    %4433 = vmatprep.subr.bf16.mxu0 0
    %4434 = vmatpush1.bf16.msra.mxu0 %v4122
    %4435 = vmatprep.subr.bf16.mxu0 0
    %4436 = vmatpush1.bf16.msra.mxu0 %v4123
    %4437 = vmatprep.subr.bf16.mxu0 0
    %4438 = vmatpush1.bf16.msra.mxu0 %v4124
    %4439 = vmatprep.subr.bf16.mxu0 0
    %4440 = vmatpush1.bf16.msra.mxu0 %v4125
    %4441 = vmatprep.subr.bf16.mxu0 0
    %4442 = vmatpush1.bf16.msra.mxu0 %v4126
    %4443 = vmatprep.subr.bf16.mxu0 0
    %4444 = vmatpush1.bf16.msra.mxu0 %v4127
    %4445 = vmatprep.subr.bf16.mxu0 0
    %4446 = vmatpush1.bf16.msra.mxu0 %v4128
    %4447 = vmatprep.subr.bf16.mxu0 0
    %4448 = vmatpush1.bf16.msra.mxu0 %v4129
    %4449 = vmatprep.subr.bf16.mxu0 0
    %4450 = vmatpush1.bf16.msra.mxu0 %v4130
    %4451 = vmatprep.subr.bf16.mxu0 0
    %4452 = vmatpush1.bf16.msra.mxu0 %v4131
    %4453 = vmatprep.subr.bf16.mxu0 0
    %4454 = vmatpush1.bf16.msra.mxu0 %v4132
    %4455 = vmatprep.mubr.bf16.mxu0 %v3306
    %4456 = vmatmul.mubr.bf16.gmra.mrb[0].mxu0 %v3305
    %v4457 = vpop.f32.mrb[0].mxu0
    %v4458 = vadd.f32 %v4417, %v4457
    %v4459 = vpop.f32.mrb[0].mxu0
    %v4460 = vpop.f32.mrb[0].mxu0
    %v4461 = vadd.f32 %v4420, %v4460
    %v4462 = vpop.f32.mrb[0].mxu0
    %4463 = vdwg.mxu0
    %4464 = vmatprep.subr.bf16.mxu0 0
    %4465 = vmatpush1.bf16.msra.mxu0 %v4133
    %4466 = vmatprep.subr.bf16.mxu0 0
    %4467 = vmatpush1.bf16.msra.mxu0 %v4134
    %4468 = vmatprep.subr.bf16.mxu0 0
    %4469 = vmatpush1.bf16.msra.mxu0 %v4135
    %4470 = vmatprep.subr.bf16.mxu0 0
    %4471 = vmatpush1.bf16.msra.mxu0 %v4136
    %4472 = vmatprep.subr.bf16.mxu0 0
    %4473 = vmatpush1.bf16.msra.mxu0 %v4137
    %4474 = vmatprep.subr.bf16.mxu0 0
    %4475 = vmatpush1.bf16.msra.mxu0 %v4138
    %4476 = vmatprep.subr.bf16.mxu0 0
    %4477 = vmatpush1.bf16.msra.mxu0 %v4139
    %4478 = vmatprep.subr.bf16.mxu0 0
    %4479 = vmatpush1.bf16.msra.mxu0 %v4140
    %4480 = vmatprep.subr.bf16.mxu0 0
    %4481 = vmatpush1.bf16.msra.mxu0 %v4141
    %4482 = vmatprep.subr.bf16.mxu0 0
    %4483 = vmatpush1.bf16.msra.mxu0 %v4142
    %4484 = vmatprep.subr.bf16.mxu0 0
    %4485 = vmatpush1.bf16.msra.mxu0 %v4143
    %4486 = vmatprep.subr.bf16.mxu0 0
    %4487 = vmatpush1.bf16.msra.mxu0 %v4144
    %4488 = vmatprep.subr.bf16.mxu0 0
    %4489 = vmatpush1.bf16.msra.mxu0 %v4145
    %4490 = vmatprep.subr.bf16.mxu0 0
    %4491 = vmatpush1.bf16.msra.mxu0 %v4146
    %4492 = vmatprep.subr.bf16.mxu0 0
    %4493 = vmatpush1.bf16.msra.mxu0 %v4147
    %4494 = vmatprep.subr.bf16.mxu0 0
    %4495 = vmatpush1.bf16.msra.mxu0 %v4148
    %4496 = vmatprep.mubr.bf16.mxu0 %v3308
    %4497 = vmatmul.mubr.bf16.gmra.mrb[0].mxu0 %v3307
    %v4498 = vpop.f32.mrb[0].mxu0
    %v4499 = vadd.f32 %v4458, %v4498
    %v4500 = vpop.f32.mrb[0].mxu0
    %v4501 = vpop.f32.mrb[0].mxu0
    %v4502 = vadd.f32 %v4461, %v4501
    %v4503 = vpop.f32.mrb[0].mxu0
    %4504 = vdwg.mxu0
    %4505 = vmatprep.subr.bf16.mxu0 0
    %4506 = vmatpush1.bf16.msra.mxu0 %v4149
    %4507 = vmatprep.subr.bf16.mxu0 0
    %4508 = vmatpush1.bf16.msra.mxu0 %v4150
    %4509 = vmatprep.subr.bf16.mxu0 0
    %4510 = vmatpush1.bf16.msra.mxu0 %v4151
    %4511 = vmatprep.subr.bf16.mxu0 0
    %4512 = vmatpush1.bf16.msra.mxu0 %v4152
    %4513 = vmatprep.subr.bf16.mxu0 0
    %4514 = vmatpush1.bf16.msra.mxu0 %v4153
    %4515 = vmatprep.subr.bf16.mxu0 0
    %4516 = vmatpush1.bf16.msra.mxu0 %v4154
    %4517 = vmatprep.subr.bf16.mxu0 0
    %4518 = vmatpush1.bf16.msra.mxu0 %v4155
    %4519 = vmatprep.subr.bf16.mxu0 0
    %4520 = vmatpush1.bf16.msra.mxu0 %v4156
    %4521 = vmatprep.subr.bf16.mxu0 0
    %4522 = vmatpush1.bf16.msra.mxu0 %v4157
    %4523 = vmatprep.subr.bf16.mxu0 0
    %4524 = vmatpush1.bf16.msra.mxu0 %v4158
    %4525 = vmatprep.subr.bf16.mxu0 0
    %4526 = vmatpush1.bf16.msra.mxu0 %v4159
    %4527 = vmatprep.subr.bf16.mxu0 0
    %4528 = vmatpush1.bf16.msra.mxu0 %v4160
    %4529 = vmatprep.subr.bf16.mxu0 0
    %4530 = vmatpush1.bf16.msra.mxu0 %v4161
    %4531 = vmatprep.subr.bf16.mxu0 0
    %4532 = vmatpush1.bf16.msra.mxu0 %v4162
    %4533 = vmatprep.subr.bf16.mxu0 0
    %4534 = vmatpush1.bf16.msra.mxu0 %v4163
    %4535 = vmatprep.subr.bf16.mxu0 0
    %4536 = vmatpush1.bf16.msra.mxu0 %v4164
    %4537 = vmatprep.mubr.bf16.mxu0 %v3310
    %4538 = vmatmul.mubr.bf16.gmra.mrb[0].mxu0 %v3309
    %v4539 = vpop.f32.mrb[0].mxu0
    %v4540 = vadd.f32 %v4499, %v4539
    %v4541 = vpop.f32.mrb[0].mxu0
    %v4542 = vpop.f32.mrb[0].mxu0
    %v4543 = vadd.f32 %v4502, %v4542
    %v4544 = vpop.f32.mrb[0].mxu0
    %4545 = vdwg.mxu0
    %4546 = vmatprep.subr.bf16.mxu0 0
    %4547 = vmatpush1.bf16.msra.mxu0 %v4165
    %4548 = vmatprep.subr.bf16.mxu0 0
    %4549 = vmatpush1.bf16.msra.mxu0 %v4166
    %4550 = vmatprep.subr.bf16.mxu0 0
    %4551 = vmatpush1.bf16.msra.mxu0 %v4167
    %4552 = vmatprep.subr.bf16.mxu0 0
    %4553 = vmatpush1.bf16.msra.mxu0 %v4168
    %4554 = vmatprep.subr.bf16.mxu0 0
    %4555 = vmatpush1.bf16.msra.mxu0 %v4169
    %4556 = vmatprep.subr.bf16.mxu0 0
    %4557 = vmatpush1.bf16.msra.mxu0 %v4170
    %4558 = vmatprep.subr.bf16.mxu0 0
    %4559 = vmatpush1.bf16.msra.mxu0 %v4171
    %4560 = vmatprep.subr.bf16.mxu0 0
    %4561 = vmatpush1.bf16.msra.mxu0 %v4172
    %4562 = vmatprep.subr.bf16.mxu0 0
    %4563 = vmatpush1.bf16.msra.mxu0 %v4173
    %4564 = vmatprep.subr.bf16.mxu0 0
    %4565 = vmatpush1.bf16.msra.mxu0 %v4174
    %4566 = vmatprep.subr.bf16.mxu0 0
    %4567 = vmatpush1.bf16.msra.mxu0 %v4175
    %4568 = vmatprep.subr.bf16.mxu0 0
    %4569 = vmatpush1.bf16.msra.mxu0 %v4176
    %4570 = vmatprep.subr.bf16.mxu0 0
    %4571 = vmatpush1.bf16.msra.mxu0 %v4177
    %4572 = vmatprep.subr.bf16.mxu0 0
    %4573 = vmatpush1.bf16.msra.mxu0 %v4178
    %4574 = vmatprep.subr.bf16.mxu0 0
    %4575 = vmatpush1.bf16.msra.mxu0 %v4179
    %4576 = vmatprep.subr.bf16.mxu0 0
    %4577 = vmatpush1.bf16.msra.mxu0 %v4180
    %4578 = vmatprep.mubr.bf16.mxu0 %v3312
    %4579 = vmatmul.mubr.bf16.gmra.mrb[0].mxu0 %v3311
    %v4580 = vpop.f32.mrb[0].mxu0
    %v4581 = vadd.f32 %v4540, %v4580
    %v4582 = vpop.f32.mrb[0].mxu0
    %v4583 = vpop.f32.mrb[0].mxu0
    %v4584 = vadd.f32 %v4543, %v4583
    %v4585 = vpop.f32.mrb[0].mxu0
    %4586 = vdwg.mxu0
    %4587 = vmatprep.subr.bf16.mxu0 0
    %4588 = vmatpush1.bf16.msra.mxu0 %v4181
    %4589 = vmatprep.subr.bf16.mxu0 0
    %4590 = vmatpush1.bf16.msra.mxu0 %v4182
    %4591 = vmatprep.subr.bf16.mxu0 0
    %4592 = vmatpush1.bf16.msra.mxu0 %v4183
    %4593 = vmatprep.subr.bf16.mxu0 0
    %4594 = vmatpush1.bf16.msra.mxu0 %v4184
    %4595 = vmatprep.subr.bf16.mxu0 0
    %4596 = vmatpush1.bf16.msra.mxu0 %v4185
    %4597 = vmatprep.subr.bf16.mxu0 0
    %4598 = vmatpush1.bf16.msra.mxu0 %v4186
    %4599 = vmatprep.subr.bf16.mxu0 0
    %4600 = vmatpush1.bf16.msra.mxu0 %v4187
    %4601 = vmatprep.subr.bf16.mxu0 0
    %4602 = vmatpush1.bf16.msra.mxu0 %v4188
    %4603 = vmatprep.subr.bf16.mxu0 0
    %4604 = vmatpush1.bf16.msra.mxu0 %v4189
    %4605 = vmatprep.subr.bf16.mxu0 0
    %4606 = vmatpush1.bf16.msra.mxu0 %v4190
    %4607 = vmatprep.subr.bf16.mxu0 0
    %4608 = vmatpush1.bf16.msra.mxu0 %v4191
    %4609 = vmatprep.subr.bf16.mxu0 0
    %4610 = vmatpush1.bf16.msra.mxu0 %v4192
    %4611 = vmatprep.subr.bf16.mxu0 0
    %4612 = vmatpush1.bf16.msra.mxu0 %v4193
    %4613 = vmatprep.subr.bf16.mxu0 0
    %4614 = vmatpush1.bf16.msra.mxu0 %v4194
    %4615 = vmatprep.subr.bf16.mxu0 0
    %4616 = vmatpush1.bf16.msra.mxu0 %v4195
    %4617 = vmatprep.subr.bf16.mxu0 0
    %4618 = vmatpush1.bf16.msra.mxu0 %v4196
    %4619 = vmatprep.mubr.bf16.mxu0 %v3314
    %4620 = vmatmul.mubr.bf16.gmra.mrb[0].mxu0 %v3313
    %v4621 = vpop.f32.mrb[0].mxu0
    %v4622 = vadd.f32 %v4581, %v4621
    %v4623 = vpop.f32.mrb[0].mxu0
    %v4624 = vpop.f32.mrb[0].mxu0
    %v4625 = vadd.f32 %v4584, %v4624
    %v4626 = vpop.f32.mrb[0].mxu0
    %4627 = vdwg.mxu0
    %4628 = vmatprep.subr.bf16.mxu0 0
    %4629 = vmatpush1.bf16.msra.mxu0 %v4197
    %4630 = vmatprep.subr.bf16.mxu0 0
    %4631 = vmatpush1.bf16.msra.mxu0 %v4198
    %4632 = vmatprep.subr.bf16.mxu0 0
    %4633 = vmatpush1.bf16.msra.mxu0 %v4199
    %4634 = vmatprep.subr.bf16.mxu0 0
    %4635 = vmatpush1.bf16.msra.mxu0 %v4200
    %4636 = vmatprep.subr.bf16.mxu0 0
    %4637 = vmatpush1.bf16.msra.mxu0 %v4201
    %4638 = vmatprep.subr.bf16.mxu0 0
    %4639 = vmatpush1.bf16.msra.mxu0 %v4202
    %4640 = vmatprep.subr.bf16.mxu0 0
    %4641 = vmatpush1.bf16.msra.mxu0 %v4203
    %4642 = vmatprep.subr.bf16.mxu0 0
    %4643 = vmatpush1.bf16.msra.mxu0 %v4204
    %4644 = vmatprep.subr.bf16.mxu0 0
    %4645 = vmatpush1.bf16.msra.mxu0 %v4205
    %4646 = vmatprep.subr.bf16.mxu0 0
    %4647 = vmatpush1.bf16.msra.mxu0 %v4206
    %4648 = vmatprep.subr.bf16.mxu0 0
    %4649 = vmatpush1.bf16.msra.mxu0 %v4207
    %4650 = vmatprep.subr.bf16.mxu0 0
    %4651 = vmatpush1.bf16.msra.mxu0 %v4208
    %4652 = vmatprep.subr.bf16.mxu0 0
    %4653 = vmatpush1.bf16.msra.mxu0 %v4209
    %4654 = vmatprep.subr.bf16.mxu0 0
    %4655 = vmatpush1.bf16.msra.mxu0 %v4210
    %4656 = vmatprep.subr.bf16.mxu0 0
    %4657 = vmatpush1.bf16.msra.mxu0 %v4211
    %4658 = vmatprep.subr.bf16.mxu0 0
    %4659 = vmatpush1.bf16.msra.mxu0 %v4212
    %4660 = vmatprep.mubr.bf16.mxu0 %v3316
    %4661 = vmatmul.mubr.bf16.gmra.mrb[0].mxu0 %v3315
    %v4662 = vpop.f32.mrb[0].mxu0
    %v4663 = vadd.f32 %v4622, %v4662
    %v4664 = vpop.f32.mrb[0].mxu0
    %v4665 = vpop.f32.mrb[0].mxu0
    %v4666 = vadd.f32 %v4625, %v4665
    %v4667 = vpop.f32.mrb[0].mxu0
    %4668 = vdwg.mxu0
    %4669 = vst [vmem:[#allocation11] sm:$0xff] %v4663
    %4670 = vst [vmem:[#allocation11 + $0x8] sm:$0xff] %v4666
    // Predicated region
    $region46: #{tpu_custom_call.1} parent=1 // pred_check
      _
    $region47: #{tpu_custom_call.1} parent=1 // pred_check_branch
      %4672 = sbr.rel (0) target = $region49
    $region48: #{tpu_custom_call.1} parent=1 // pred_region
      %s4674 = ssub.s32 256, 256
      %4675 = vsyncadd [#allocation4], %s4674
      %s4676 = sshll.u32 [#allocation11], 4
      %s4677 = int_to_ptr.vmem [resolvable:$true] %s4676
      %4682 = dma.vmem_to_hbm [thread:$0]  %s4677, 256, %s6, [#allocation4], 128, 128, 8
    $region49: #{tpu_custom_call.1} parent=1 // pred_fallthru
      _
    // Predicated region
    $region50: #{tpu_custom_call.1} parent=1 // pred_check
      _
    $region51: #{tpu_custom_call.1} parent=1 // pred_check_branch
      %4684 = sbr.rel (0) target = $region53
    $region52: #{tpu_custom_call.1} parent=1 // pred_region
      %4685 = dma.done [#allocation4], 256
    $region53: #{tpu_custom_call.1} parent=1 // pred_fallthru
      _
    %4686 = vsyncpa [#allocation3], 1
    %4687 = vsyncpa [#allocation6], 1
    %4688 = vsyncpa [#allocation9], 1
    %4689 = vsyncpa [#allocation4], 1

</llo_original>
